<compile_context>
chip_gen: v7x
topology: tpu7x:2x2x1
jax: 0.10.0
libtpu: 0.0.40
codegen_flags: <defaults>
</compile_context>

<pallas_src>
import jax
import jax.numpy as jnp
from jax.experimental import pallas as pl
from jax.experimental.pallas import tpu as pltpu


# ----------------------------- small helpers --------------------------------

def _round_up(v, m):
    return (v + m - 1) // m * m


def _conv3x3_weight_matrix(w_oihw, cin_p, cout_p, dtype):
    """PyTorch (Cout, Cin, 3, 3) -> (9*Cin_p, Cout_p), tap-major (t = 3*kh+kw)."""
    cout, cin, _, _ = w_oihw.shape
    w = jnp.transpose(w_oihw, (2, 3, 1, 0)).reshape(9, cin, cout)
    w = jnp.pad(w, ((0, 0), (0, cin_p - cin), (0, cout_p - cout)))
    return w.reshape(9 * cin_p, cout_p).astype(dtype)


# ----------------------------- fused Pallas kernel ---------------------------

def _make_block_kernel(*, nb, s, Ho, Wo, Hpr, Wpc, Rh, h_int0, Cin_p, Cout_p,
                       has_shortcut, has_masks, compute_dtype):
    """conv1 -> relu -> conv2 -> dropout1 -> +shortcut -> relu -> dropout2."""
    M = Ho * Wpc                       # matmul rows per image (incl. pad cols)
    K1, K2 = 9 * Cin_p, 9 * Cout_p
    plane_rows = Hpr * Wpc

    # Static per-tap row offsets into the flattened activation slabs.
    def x_off(dh, dw):
        pidx = (dh % s) * s + (dw % s)              # stride-phase plane
        return pidx * plane_rows + (dh // s) * Wpc + (dw // s)

    def h_off(dh, dw):
        return (h_int0 - (Wpc + 1)) + dh * Wpc + dw

    sc_off = x_off(1, 1)               # 1x1 shortcut == center tap of conv1

    def kernel(*refs):
        x_ref, w1_ref, w2_ref = refs[0], refs[1], refs[2]
        i = 3
        wsc_ref = m_ref = None
        if has_shortcut:
            wsc_ref = refs[i]; i += 1
        if has_masks:
            m_ref = refs[i]; i += 1
        out_ref, h_ref, col_ref = refs[i], refs[i + 1], refs[i + 2]

        # Keep h's halo (top/bottom pad rows + alignment filler) at zero.  The
        # interior is fully overwritten per image and its pad columns are
        # written as zeros (col_valid mask), so only head/tail need clearing —
        # a few dozen rows, not the whole scratch.
        h_ref[0:h_int0, :] = jnp.zeros((h_int0, Cout_p), compute_dtype)
        h_ref[h_int0 + M:Rh, :] = jnp.zeros((Rh - h_int0 - M, Cout_p),
                                            compute_dtype)

        # Valid-column mask: flat row m corresponds to output column m % Wpc.
        col_valid = (jax.lax.broadcasted_iota(jnp.int32, (M, 1), 0) % Wpc) < Wo

        for img in range(nb):          # small static batch block per grid step
            # ---- conv1: in-VMEM im2col (K = 9*Cin_p) + one MXU matmul.
            for dh in range(3):
                for dw in range(3):
                    t = dh * 3 + dw
                    o = x_off(dh, dw)
                    col_ref[:, t * Cin_p:(t + 1) * Cin_p] = (
                        x_ref[img, o:o + M, :])
            acc = jnp.dot(col_ref[:, :K1], w1_ref[...],
                          preferred_element_type=jnp.float32)
            h_val = jnp.where(col_valid, jnp.maximum(acc, 0.0), 0.0)
            # Sublane-aligned (h_int0 % 16 == 0) full-width interior store.
            h_ref[h_int0:h_int0 + M, :] = h_val.astype(compute_dtype)

            # ---- conv2 (stride 1) on the resident padded h: K = 9*Cout_p.
            for dh in range(3):
                for dw in range(3):
                    t = dh * 3 + dw
                    o = h_off(dh, dw)
                    col_ref[:, t * Cout_p:(t + 1) * Cout_p] = h_ref[o:o + M, :]
            acc = jnp.dot(col_ref[:, :K2], w2_ref[...],
                          preferred_element_type=jnp.float32)
            if has_masks:              # dropout1: per spec, on conv2's OUTPUT
                acc = acc * m_ref[0:1, :]

            # ---- shortcut from the already-resident input slab (no extra HBM).
            x_sc = x_ref[img, sc_off:sc_off + M, :]
            if has_shortcut:           # 1x1 conv (dropout_shortcut folded in)
                sc = jnp.dot(x_sc, wsc_ref[...],
                             preferred_element_type=jnp.float32)
            else:                      # identity: stride == 1, Cin == Cout
                sc = x_sc.astype(jnp.float32)

            out = jnp.maximum(acc + sc, 0.0)
            if has_masks:              # dropout2 on the post-relu output
                out = out * m_ref[1:2, :]
            out_ref[img, :, :] = out.astype(out_ref.dtype)

    return kernel


# ----------------------------- wrappers --------------------------------------

def make_dropout_masks(key, dropout_prob, planes, has_shortcut):
    """Per-channel ConsistentMCDropout masks (inverted-dropout scaling)."""
    if dropout_prob <= 0.0:
        return None
    keep = 1.0 - dropout_prob
    k1, k2, k3 = jax.random.split(key, 3)

    def draw(k):
        return jax.random.bernoulli(k, keep, (planes,)).astype(jnp.float32) / keep

    return {"dropout1": draw(k1), "dropout2": draw(k2),
            "dropout_shortcut": draw(k3) if has_shortcut else None}


def basic_block_apply(params, x_nhwc, stride, dropout_masks=None,
                      compute_dtype=jnp.bfloat16, out_dtype=jnp.float32,
                      batch_block=None):
    """NHWC -> NHWC BasicBlock forward via one fused Pallas kernel.

    When stacking blocks, pass out_dtype=jnp.bfloat16 and keep activations
    NHWC end-to-end to minimize HBM writeback.
    """
    N, H, W, Cin = x_nhwc.shape
    Cout = params["conv1"].shape[0]
    s = int(stride)
    has_shortcut = "shortcut" in params
    if not has_shortcut:
        assert s == 1 and Cin == Cout, \
            "identity shortcut requires stride == 1 and in_planes == planes"

    Ho = (H - 1) // s + 1
    Wo = (W - 1) // s + 1
    Hpr = Ho + 2 // s                 # rows per stride-phase plane
    Wpc = Wo + 2                      # plane width == padded-h width
    Cin_p = _round_up(Cin, 128)       # lane-dense channel padding
    Cout_p = _round_up(Cout, 128)
    Cmax_p = max(Cin_p, Cout_p)
    plane_rows = Hpr * Wpc
    M = Ho * Wpc                      # matmul rows per image
    Rx = _round_up(s * s * plane_rows + Wpc, 16)
    h_int0 = _round_up(Wpc + 1, 16)   # aligned start of h's interior
    Rh = _round_up(h_int0 + (Ho + 1) * Wpc + 1, 16)

    # --- batch blocking: >=~512 matmul rows per step, >=2 steps when N > 1.
    if batch_block is None:
        batch_block = max(1, 512 // M)
        if N > 1:
            batch_block = min(batch_block, max(1, N // 2))
        batch_block = min(batch_block, N)
    nb = int(batch_block)
    Np = _round_up(N, nb)
    grid = (Np // nb,)

    # --- activation prep directly in compute dtype (bf16): pad, stride-phase
    #     split (skipped for s == 1), flatten to a (rows, channels) slab.
    x = x_nhwc.astype(compute_dtype)
    xpad = jnp.pad(x, ((0, 0), (1, s * Hpr - H - 1), (1, s * Wpc - W - 1),
                       (0, Cin_p - Cin)))
    if s == 1:
        x2 = xpad.reshape(N, plane_rows, Cin_p)
    else:
        planes_list = [xpad[:, pr::s, pc::s, :].reshape(N, plane_rows, Cin_p)
                       for pr in range(s) for pc in range(s)]
        x2 = jnp.concatenate(planes_list, axis=1)
    x2 = jnp.pad(x2, ((0, Np - N), (0, Rx - x2.shape[1]), (0, 0)))

    # --- weights as tap-major matmul operands (bf16, lane-dense Cout).
    w1m = _conv3x3_weight_matrix(params["conv1"], Cin_p, Cout_p, compute_dtype)
    w2m = _conv3x3_weight_matrix(params["conv2"], Cout_p, Cout_p, compute_dtype)

    has_masks = dropout_masks is not None
    inputs = [x2, w1m, w2m]
    in_specs = [
        pl.BlockSpec((nb, Rx, Cin_p), lambda n: (n, 0, 0)),
        pl.BlockSpec((9 * Cin_p, Cout_p), lambda n: (0, 0)),
        pl.BlockSpec((9 * Cout_p, Cout_p), lambda n: (0, 0)),
    ]
    if has_shortcut:
        wsc = params["shortcut"][:, :, 0, 0].T.astype(jnp.float32)  # (Cin, Cout)
        if has_masks and dropout_masks.get("dropout_shortcut") is not None:
            wsc = wsc * dropout_masks["dropout_shortcut"][None, :]
        wsc = jnp.pad(wsc, ((0, Cin_p - Cin), (0, Cout_p - Cout)))
        inputs.append(wsc.astype(compute_dtype))
        in_specs.append(pl.BlockSpec((Cin_p, Cout_p), lambda n: (0, 0)))
    if has_masks:
        m12 = jnp.stack([dropout_masks["dropout1"], dropout_masks["dropout2"]])
        m12 = jnp.pad(m12, ((0, 0), (0, Cout_p - Cout))).astype(jnp.float32)
        inputs.append(m12)
        in_specs.append(pl.BlockSpec((2, Cout_p), lambda n: (0, 0)))

    kernel = _make_block_kernel(
        nb=nb, s=s, Ho=Ho, Wo=Wo, Hpr=Hpr, Wpc=Wpc, Rh=Rh, h_int0=h_int0,
        Cin_p=Cin_p, Cout_p=Cout_p, has_shortcut=has_shortcut,
        has_masks=has_masks, compute_dtype=compute_dtype)

    scratch_shapes = [
        pltpu.VMEM((Rh, Cout_p), compute_dtype),        # resident padded h
        pltpu.VMEM((M, 9 * Cmax_p), compute_dtype),     # shared im2col buffer
    ]

    # Per-step VMEM estimate (double-buffered in/out blocks + scratch); raise
    # the scoped limit only if the conservative 16 MiB v5e default won't fit.
    it = jnp.dtype(compute_dtype).itemsize
    blk_bytes = nb * Rx * Cin_p * it
    blk_bytes += (9 * Cin_p + 9 * Cout_p) * Cout_p * it
    if has_shortcut:
        blk_bytes += Cin_p * Cout_p * it
    out_bytes = nb * M * Cout_p * jnp.dtype(out_dtype).itemsize
    scratch_bytes = (Rh * Cout_p + M * 9 * Cmax_p) * it
    est = 2 * (blk_bytes + out_bytes) + scratch_bytes
    vmem_limit = int(min(est * 5 // 4, 100 * 2 ** 20)) if est > 14 * 2 ** 20 \
        else None

    flops = 2 * Np * M * (9 * Cin_p + 9 * Cout_p
                          + (Cin_p if has_shortcut else 0)) * Cout_p
    bytes_accessed = sum(int(a.size) * a.dtype.itemsize for a in inputs)
    bytes_accessed += Np * M * Cout_p * jnp.dtype(out_dtype).itemsize
    cost = pl.CostEstimate(flops=int(flops), transcendentals=0,
                           bytes_accessed=int(bytes_accessed))

    out = pl.pallas_call(
        kernel,
        out_shape=jax.ShapeDtypeStruct((Np, M, Cout_p), out_dtype),
        grid=grid,
        in_specs=in_specs,
        out_specs=pl.BlockSpec((nb, M, Cout_p), lambda n: (n, 0, 0)),
        scratch_shapes=scratch_shapes,
        compiler_params=pltpu.CompilerParams(
            dimension_semantics=("parallel",),
            vmem_limit_bytes=vmem_limit),
        cost_estimate=cost,
    )(*inputs)

    # Drop batch / column / channel padding once, at the very end.
    return out[:N].reshape(N, Ho, Wpc, Cout_p)[:, :, :Wo, :Cout]


def basic_block_forward(params, x_nchw, stride, dropout_masks=None):
    """PyTorch-layout (NCHW) entry point; transposes exist only for parity
    with the nn.Module interface — keep NHWC end-to-end when stacking."""
    x = jnp.transpose(x_nchw, (0, 2, 3, 1))
    out = basic_block_apply(params, x, stride, dropout_masks)
    return jnp.transpose(out, (0, 3, 1, 2))


def init_basic_block_params(key, in_planes, planes, stride):
    k1, k2, k3 = jax.random.split(key, 3)
    w1 = jax.random.normal(k1, (planes, in_planes, 3, 3), jnp.float32) * \
        (2.0 / (in_planes * 9)) ** 0.5
    w2 = jax.random.normal(k2, (planes, planes, 3, 3), jnp.float32) * \
        (2.0 / (planes * 9)) ** 0.5
    params = {"conv1": w1, "conv2": w2}
    if stride != 1 or in_planes != planes:        # expansion == 1
        wsc = jax.random.normal(k3, (planes, in_planes, 1, 1), jnp.float32) * \
            (2.0 / in_planes) ** 0.5
        params["shortcut"] = wsc
    return params


# ----------------------------- pure-JAX reference ----------------------------

def basic_block_ref(params, x_nchw, stride, dropout_masks=None,
                    compute_dtype=jnp.bfloat16):
    """Reference mirroring the kernel's dtype policy (bf16 conv inputs, f32
    accumulation) and the module's op order."""
    cast = lambda a: a.astype(compute_dtype)

    def conv(x, w, s, pad):
        return jax.lax.conv_general_dilated(
            cast(x), cast(w), (s, s), pad,
            dimension_numbers=("NCHW", "OIHW", "NCHW"),
            preferred_element_type=jnp.float32)

    h = jax.nn.relu(conv(x_nchw, params["conv1"], stride, ((1, 1), (1, 1))))
    out = conv(h, params["conv2"], 1, ((1, 1), (1, 1)))
    if dropout_masks is not None:
        out = out * dropout_masks["dropout1"][None, :, None, None]
    if "shortcut" in params:
        sc = conv(x_nchw, params["shortcut"], stride, ((0, 0), (0, 0)))
        if dropout_masks is not None and \
                dropout_masks.get("dropout_shortcut") is not None:
            sc = sc * dropout_masks["dropout_shortcut"][None, :, None, None]
    else:
        sc = cast(x_nchw).astype(jnp.float32)
    out = jax.nn.relu(out + sc)
    if dropout_masks is not None:
        out = out * dropout_masks["dropout2"][None, :, None, None]
    return out


# ----------------------------- main -------------------------------------------

if __name__ == "__main__":
    key = jax.random.PRNGKey(0)
    kx1, kp1, kx2, kp2, km = jax.random.split(key, 5)

    # Config 1: downsampling block (stride=2, 1x1-conv shortcut active).
    N, in_planes, planes, H, W, stride = 2, 4, 8, 16, 16, 2
    x1 = jax.random.normal(kx1, (N, in_planes, H, W), jnp.float32)
    p1 = init_basic_block_params(kp1, in_planes, planes, stride)
    out1 = jax.block_until_ready(basic_block_forward(p1, x1, stride))
    ref1 = jax.block_until_ready(basic_block_ref(p1, x1, stride))
    assert out1.shape == (N, planes, H // stride, W // stride), out1.shape
    assert jnp.allclose(out1, ref1, atol=2e-2, rtol=2e-2), \
        float(jnp.max(jnp.abs(out1 - ref1)))

    # Config 2: identity-shortcut block (stride=1, in_planes == planes).
    x2 = jax.random.normal(kx2, (N, planes, H, W), jnp.float32)
    p2 = init_basic_block_params(kp2, planes, planes, 1)
    out2 = jax.block_until_ready(basic_block_forward(p2, x2, 1))
    ref2 = jax.block_until_ready(basic_block_ref(p2, x2, 1))
    assert out2.shape == (N, planes, H, W), out2.shape
    assert jnp.allclose(out2, ref2, atol=2e-2, rtol=2e-2), \
        float(jnp.max(jnp.abs(out2 - ref2)))

    # Config 3: ConsistentMCDropout channel masks active (p = 0.25).
    masks = make_dropout_masks(km, 0.25, planes, has_shortcut=True)
    out3 = jax.block_until_ready(basic_block_forward(p1, x1, stride, masks))
    ref3 = jax.block_until_ready(basic_block_ref(p1, x1, stride, masks))
    assert jnp.allclose(out3, ref3, atol=5e-2, rtol=5e-2), \
        float(jnp.max(jnp.abs(out3 - ref3)))

    print("KERNEL_OK")
</pallas_src>

<mosaic_0001>
module attributes {stable_mosaic.version = 11 : i64} {
  func.func @kernel(%arg0: i32, %arg1: memref<1x384x128xbf16, #tpu.memory_space<vmem>>, %arg2: memref<1152x128xbf16, #tpu.memory_space<vmem>>, %arg3: memref<1152x128xbf16, #tpu.memory_space<vmem>>, %arg4: memref<128x128xbf16, #tpu.memory_space<vmem>>, %arg5: memref<1x80x128xf32, #tpu.memory_space<vmem>>, %arg6: memref<112x128xbf16, #tpu.memory_space<vmem>>, %arg7: memref<80x1152xbf16, #tpu.memory_space<vmem>>) attributes {dimension_semantics = [#tpu.dimension_semantics<parallel>], iteration_bounds = array<i64: 2>, scalar_prefetch = 0 : i64, scratch_operands = 2 : i64, tpu.core_type = #tpu.core_type<tc>, window_params = [{transform_indices = @transform_0, window_bounds = array<i64: 1, 384, 128>}, {pipeline_mode = #tpu.pipeline_mode<synchronous>, transform_indices = @transform_1, window_bounds = array<i64: 1152, 128>}, {pipeline_mode = #tpu.pipeline_mode<synchronous>, transform_indices = @transform_2, window_bounds = array<i64: 1152, 128>}, {pipeline_mode = #tpu.pipeline_mode<synchronous>, transform_indices = @transform_3, window_bounds = array<i64: 128, 128>}, {transform_indices = @transform_4, window_bounds = array<i64: 1, 80, 128>}]} {
    %cst = arith.constant 0.000000e+00 : bf16
    %0 = vector.broadcast %cst : bf16 to vector<16x128xbf16>
    %c0 = arith.constant 0 : index
    %c0_0 = arith.constant 0 : index
    %1 = vector.load %arg6[%c0, %c0_0] : memref<112x128xbf16, #tpu.memory_space<vmem>>, vector<16x128xbf16>
    tpu.vector_store %arg6[%c0, %c0_0], %0 {strides = array<i32>} : memref<112x128xbf16, #tpu.memory_space<vmem>>, vector<16x128xbf16>,
    %cst_1 = arith.constant 0.000000e+00 : bf16
    %2 = vector.broadcast %cst_1 : bf16 to vector<16x128xbf16>
    %c96 = arith.constant 96 : index
    %c0_2 = arith.constant 0 : index
    %3 = vector.load %arg6[%c96, %c0_2] : memref<112x128xbf16, #tpu.memory_space<vmem>>, vector<16x128xbf16>
    tpu.vector_store %arg6[%c96, %c0_2], %2 {strides = array<i32>} : memref<112x128xbf16, #tpu.memory_space<vmem>>, vector<16x128xbf16>,
    %4 = tpu.iota {dimensions = array<i32: 0>} : vector<80x1xi32>
    %c10_i32 = arith.constant 10 : i32
    %c0_i32 = arith.constant 0 : i32
    %5 = arith.cmpi eq, %c10_i32, %c0_i32 : i32
    %c1_i32 = arith.constant 1 : i32
    %6 = arith.select %5, %c1_i32, %c10_i32 : i32
    %7 = vector.broadcast %6 : i32 to vector<80x1xi32>
    %8 = arith.remsi %4, %7 : vector<80x1xi32>
    %c0_i32_3 = arith.constant 0 : i32
    %9 = vector.broadcast %c0_i32_3 : i32 to vector<80x1xi32>
    %10 = arith.cmpi ne, %8, %9 : vector<80x1xi32>
    %c0_i32_4 = arith.constant 0 : i32
    %11 = vector.broadcast %c0_i32_4 : i32 to vector<80x1xi32>
    %12 = arith.cmpi slt, %8, %11 : vector<80x1xi32>
    %c0_i32_5 = arith.constant 0 : i32
    %13 = arith.cmpi slt, %6, %c0_i32_5 : i32
    %14 = vector.broadcast %13 : i1 to vector<80x1xi1>
    %15 = vector.broadcast %14 : vector<80x1xi1> to vector<80x1xi1>
    %16 = arith.xori %12, %15 : vector<80x1xi1>
    %17 = arith.andi %16, %10 : vector<80x1xi1>
    %18 = vector.broadcast %6 : i32 to vector<80x1xi32>
    %19 = arith.addi %8, %18 : vector<80x1xi32>
    %20 = arith.select %17, %19, %8 : vector<80x1xi1>, vector<80x1xi32>
    %c8_i32 = arith.constant 8 : i32
    %21 = vector.broadcast %c8_i32 : i32 to vector<80x1xi32>
    %22 = arith.cmpi slt, %20, %21 : vector<80x1xi32>
    %c0_6 = arith.constant 0 : index
    %c0_7 = arith.constant 0 : index
    %c0_8 = arith.constant 0 : index
    %23 = vector.load %arg1[%c0_6, %c0_7, %c0_8] : memref<1x384x128xbf16, #tpu.memory_space<vmem>>, vector<1x80x128xbf16>
    %24 = vector.shape_cast %23 : vector<1x80x128xbf16> to vector<80x128xbf16>
    %c0_9 = arith.constant 0 : index
    %c0_10 = arith.constant 0 : index
    %25 = vector.load %arg7[%c0_9, %c0_10] : memref<80x1152xbf16, #tpu.memory_space<vmem>>, vector<80x128xbf16>
    tpu.vector_store %arg7[%c0_9, %c0_10], %24 {strides = array<i32>} : memref<80x1152xbf16, #tpu.memory_space<vmem>>, vector<80x128xbf16>,
    %c0_11 = arith.constant 0 : index
    %c90 = arith.constant 90 : index
    %c0_12 = arith.constant 0 : index
    %26 = vector.load %arg1[%c0_11, %c90, %c0_12] : memref<1x384x128xbf16, #tpu.memory_space<vmem>>, vector<1x80x128xbf16>
    %27 = vector.shape_cast %26 : vector<1x80x128xbf16> to vector<80x128xbf16>
    %c0_13 = arith.constant 0 : index
    %c128 = arith.constant 128 : index
    %28 = vector.load %arg7[%c0_13, %c128] : memref<80x1152xbf16, #tpu.memory_space<vmem>>, vector<80x128xbf16>
    tpu.vector_store %arg7[%c0_13, %c128], %27 {strides = array<i32>} : memref<80x1152xbf16, #tpu.memory_space<vmem>>, vector<80x128xbf16>,
    %c0_14 = arith.constant 0 : index
    %c1 = arith.constant 1 : index
    %c0_15 = arith.constant 0 : index
    %29 = vector.load %arg1[%c0_14, %c1, %c0_15] : memref<1x384x128xbf16, #tpu.memory_space<vmem>>, vector<1x80x128xbf16>
    %30 = vector.shape_cast %29 : vector<1x80x128xbf16> to vector<80x128xbf16>
    %c0_16 = arith.constant 0 : index
    %c256 = arith.constant 256 : index
    %31 = vector.load %arg7[%c0_16, %c256] : memref<80x1152xbf16, #tpu.memory_space<vmem>>, vector<80x128xbf16>
    tpu.vector_store %arg7[%c0_16, %c256], %30 {strides = array<i32>} : memref<80x1152xbf16, #tpu.memory_space<vmem>>, vector<80x128xbf16>,
    %c0_17 = arith.constant 0 : index
    %c180 = arith.constant 180 : index
    %c0_18 = arith.constant 0 : index
    %32 = vector.load %arg1[%c0_17, %c180, %c0_18] : memref<1x384x128xbf16, #tpu.memory_space<vmem>>, vector<1x80x128xbf16>
    %33 = vector.shape_cast %32 : vector<1x80x128xbf16> to vector<80x128xbf16>
    %c0_19 = arith.constant 0 : index
    %c384 = arith.constant 384 : index
    %34 = vector.load %arg7[%c0_19, %c384] : memref<80x1152xbf16, #tpu.memory_space<vmem>>, vector<80x128xbf16>
    tpu.vector_store %arg7[%c0_19, %c384], %33 {strides = array<i32>} : memref<80x1152xbf16, #tpu.memory_space<vmem>>, vector<80x128xbf16>,
    %c0_20 = arith.constant 0 : index
    %c270 = arith.constant 270 : index
    %c0_21 = arith.constant 0 : index
    %35 = vector.load %arg1[%c0_20, %c270, %c0_21] : memref<1x384x128xbf16, #tpu.memory_space<vmem>>, vector<1x80x128xbf16>
    %36 = vector.shape_cast %35 : vector<1x80x128xbf16> to vector<80x128xbf16>
    %c0_22 = arith.constant 0 : index
    %c512 = arith.constant 512 : index
    %37 = vector.load %arg7[%c0_22, %c512] : memref<80x1152xbf16, #tpu.memory_space<vmem>>, vector<80x128xbf16>
    tpu.vector_store %arg7[%c0_22, %c512], %36 {strides = array<i32>} : memref<80x1152xbf16, #tpu.memory_space<vmem>>, vector<80x128xbf16>,
    %c0_23 = arith.constant 0 : index
    %c181 = arith.constant 181 : index
    %c0_24 = arith.constant 0 : index
    %38 = vector.load %arg1[%c0_23, %c181, %c0_24] : memref<1x384x128xbf16, #tpu.memory_space<vmem>>, vector<1x80x128xbf16>
    %39 = vector.shape_cast %38 : vector<1x80x128xbf16> to vector<80x128xbf16>
    %c0_25 = arith.constant 0 : index
    %c640 = arith.constant 640 : index
    %40 = vector.load %arg7[%c0_25, %c640] : memref<80x1152xbf16, #tpu.memory_space<vmem>>, vector<80x128xbf16>
    tpu.vector_store %arg7[%c0_25, %c640], %39 {strides = array<i32>} : memref<80x1152xbf16, #tpu.memory_space<vmem>>, vector<80x128xbf16>,
    %c0_26 = arith.constant 0 : index
    %c10 = arith.constant 10 : index
    %c0_27 = arith.constant 0 : index
    %41 = vector.load %arg1[%c0_26, %c10, %c0_27] : memref<1x384x128xbf16, #tpu.memory_space<vmem>>, vector<1x80x128xbf16>
    %42 = vector.shape_cast %41 : vector<1x80x128xbf16> to vector<80x128xbf16>
    %c0_28 = arith.constant 0 : index
    %c768 = arith.constant 768 : index
    %43 = vector.load %arg7[%c0_28, %c768] : memref<80x1152xbf16, #tpu.memory_space<vmem>>, vector<80x128xbf16>
    tpu.vector_store %arg7[%c0_28, %c768], %42 {strides = array<i32>} : memref<80x1152xbf16, #tpu.memory_space<vmem>>, vector<80x128xbf16>,
    %c0_29 = arith.constant 0 : index
    %c100 = arith.constant 100 : index
    %c0_30 = arith.constant 0 : index
    %44 = vector.load %arg1[%c0_29, %c100, %c0_30] : memref<1x384x128xbf16, #tpu.memory_space<vmem>>, vector<1x80x128xbf16>
    %45 = vector.shape_cast %44 : vector<1x80x128xbf16> to vector<80x128xbf16>
    %c0_31 = arith.constant 0 : index
    %c896 = arith.constant 896 : index
    %46 = vector.load %arg7[%c0_31, %c896] : memref<80x1152xbf16, #tpu.memory_space<vmem>>, vector<80x128xbf16>
    tpu.vector_store %arg7[%c0_31, %c896], %45 {strides = array<i32>} : memref<80x1152xbf16, #tpu.memory_space<vmem>>, vector<80x128xbf16>,
    %c0_32 = arith.constant 0 : index
    %c11 = arith.constant 11 : index
    %c0_33 = arith.constant 0 : index
    %47 = vector.load %arg1[%c0_32, %c11, %c0_33] : memref<1x384x128xbf16, #tpu.memory_space<vmem>>, vector<1x80x128xbf16>
    %48 = vector.shape_cast %47 : vector<1x80x128xbf16> to vector<80x128xbf16>
    %c0_34 = arith.constant 0 : index
    %c1024 = arith.constant 1024 : index
    %49 = vector.load %arg7[%c0_34, %c1024] : memref<80x1152xbf16, #tpu.memory_space<vmem>>, vector<80x128xbf16>
    tpu.vector_store %arg7[%c0_34, %c1024], %48 {strides = array<i32>} : memref<80x1152xbf16, #tpu.memory_space<vmem>>, vector<80x128xbf16>,
    %c0_35 = arith.constant 0 : index
    %c0_36 = arith.constant 0 : index
    %50 = vector.load %arg7[%c0_35, %c0_36] : memref<80x1152xbf16, #tpu.memory_space<vmem>>, vector<80x1152xbf16>
    %c0_37 = arith.constant 0 : index
    %c0_38 = arith.constant 0 : index
    %51 = vector.load %arg2[%c0_37, %c0_38] : memref<1152x128xbf16, #tpu.memory_space<vmem>>, vector<1152x128xbf16>
    %cst_39 = arith.constant dense<0.000000e+00> : vector<80x128xf32>
    %52 = tpu.matmul %50, %51, %cst_39 {dimension_numbers = #tpu.dot_dimension_numbers<[1], [0], [0], [1], [0, 0, 1, 1], [], []>} : vector<80x1152xbf16>, vector<1152x128xbf16>, vector<80x128xf32> -> vector<80x128xf32>
    %cst_40 = arith.constant 0.000000e+00 : f32
    %53 = vector.broadcast %cst_40 : f32 to vector<80x128xf32>
    %54 = arith.maximumf %52, %53 : vector<80x128xf32>
    %cst_41 = arith.constant 0.000000e+00 : f32
    %55 = vector.shape_cast %22 : vector<80x1xi1> to vector<80x1xi1>
    %56 = vector.broadcast %55 : vector<80x1xi1> to vector<80x128xi1>
    %57 = vector.broadcast %cst_41 : f32 to vector<80x128xf32>
    %58 = arith.select %56, %54, %57 : vector<80x128xi1>, vector<80x128xf32>
    %59 = arith.truncf %58 : vector<80x128xf32> to vector<80x128xbf16>
    %c16 = arith.constant 16 : index
    %c0_42 = arith.constant 0 : index
    %60 = vector.load %arg6[%c16, %c0_42] : memref<112x128xbf16, #tpu.memory_space<vmem>>, vector<80x128xbf16>
    tpu.vector_store %arg6[%c16, %c0_42], %59 {strides = array<i32>} : memref<112x128xbf16, #tpu.memory_space<vmem>>, vector<80x128xbf16>,
    %c5 = arith.constant 5 : index
    %c0_43 = arith.constant 0 : index
    %61 = vector.load %arg6[%c5, %c0_43] : memref<112x128xbf16, #tpu.memory_space<vmem>>, vector<80x128xbf16>
    %c0_44 = arith.constant 0 : index
    %c0_45 = arith.constant 0 : index
    %62 = vector.load %arg7[%c0_44, %c0_45] : memref<80x1152xbf16, #tpu.memory_space<vmem>>, vector<80x128xbf16>
    tpu.vector_store %arg7[%c0_44, %c0_45], %61 {strides = array<i32>} : memref<80x1152xbf16, #tpu.memory_space<vmem>>, vector<80x128xbf16>,
    %c6 = arith.constant 6 : index
    %c0_46 = arith.constant 0 : index
    %63 = vector.load %arg6[%c6, %c0_46] : memref<112x128xbf16, #tpu.memory_space<vmem>>, vector<80x128xbf16>
    %c0_47 = arith.constant 0 : index
    %c128_48 = arith.constant 128 : index
    %64 = vector.load %arg7[%c0_47, %c128_48] : memref<80x1152xbf16, #tpu.memory_space<vmem>>, vector<80x128xbf16>
    tpu.vector_store %arg7[%c0_47, %c128_48], %63 {strides = array<i32>} : memref<80x1152xbf16, #tpu.memory_space<vmem>>, vector<80x128xbf16>,
    %c7 = arith.constant 7 : index
    %c0_49 = arith.constant 0 : index
    %65 = vector.load %arg6[%c7, %c0_49] : memref<112x128xbf16, #tpu.memory_space<vmem>>, vector<80x128xbf16>
    %c0_50 = arith.constant 0 : index
    %c256_51 = arith.constant 256 : index
    %66 = vector.load %arg7[%c0_50, %c256_51] : memref<80x1152xbf16, #tpu.memory_space<vmem>>, vector<80x128xbf16>
    tpu.vector_store %arg7[%c0_50, %c256_51], %65 {strides = array<i32>} : memref<80x1152xbf16, #tpu.memory_space<vmem>>, vector<80x128xbf16>,
    %c15 = arith.constant 15 : index
    %c0_52 = arith.constant 0 : index
    %67 = vector.load %arg6[%c15, %c0_52] : memref<112x128xbf16, #tpu.memory_space<vmem>>, vector<80x128xbf16>
    %c0_53 = arith.constant 0 : index
    %c384_54 = arith.constant 384 : index
    %68 = vector.load %arg7[%c0_53, %c384_54] : memref<80x1152xbf16, #tpu.memory_space<vmem>>, vector<80x128xbf16>
    tpu.vector_store %arg7[%c0_53, %c384_54], %67 {strides = array<i32>} : memref<80x1152xbf16, #tpu.memory_space<vmem>>, vector<80x128xbf16>,
    %c16_55 = arith.constant 16 : index
    %c0_56 = arith.constant 0 : index
    %69 = vector.load %arg6[%c16_55, %c0_56] : memref<112x128xbf16, #tpu.memory_space<vmem>>, vector<80x128xbf16>
    %c0_57 = arith.constant 0 : index
    %c512_58 = arith.constant 512 : index
    %70 = vector.load %arg7[%c0_57, %c512_58] : memref<80x1152xbf16, #tpu.memory_space<vmem>>, vector<80x128xbf16>
    tpu.vector_store %arg7[%c0_57, %c512_58], %69 {strides = array<i32>} : memref<80x1152xbf16, #tpu.memory_space<vmem>>, vector<80x128xbf16>,
    %c17 = arith.constant 17 : index
    %c0_59 = arith.constant 0 : index
    %71 = vector.load %arg6[%c17, %c0_59] : memref<112x128xbf16, #tpu.memory_space<vmem>>, vector<80x128xbf16>
    %c0_60 = arith.constant 0 : index
    %c640_61 = arith.constant 640 : index
    %72 = vector.load %arg7[%c0_60, %c640_61] : memref<80x1152xbf16, #tpu.memory_space<vmem>>, vector<80x128xbf16>
    tpu.vector_store %arg7[%c0_60, %c640_61], %71 {strides = array<i32>} : memref<80x1152xbf16, #tpu.memory_space<vmem>>, vector<80x128xbf16>,
    %c25 = arith.constant 25 : index
    %c0_62 = arith.constant 0 : index
    %73 = vector.load %arg6[%c25, %c0_62] : memref<112x128xbf16, #tpu.memory_space<vmem>>, vector<80x128xbf16>
    %c0_63 = arith.constant 0 : index
    %c768_64 = arith.constant 768 : index
    %74 = vector.load %arg7[%c0_63, %c768_64] : memref<80x1152xbf16, #tpu.memory_space<vmem>>, vector<80x128xbf16>
    tpu.vector_store %arg7[%c0_63, %c768_64], %73 {strides = array<i32>} : memref<80x1152xbf16, #tpu.memory_space<vmem>>, vector<80x128xbf16>,
    %c26 = arith.constant 26 : index
    %c0_65 = arith.constant 0 : index
    %75 = vector.load %arg6[%c26, %c0_65] : memref<112x128xbf16, #tpu.memory_space<vmem>>, vector<80x128xbf16>
    %c0_66 = arith.constant 0 : index
    %c896_67 = arith.constant 896 : index
    %76 = vector.load %arg7[%c0_66, %c896_67] : memref<80x1152xbf16, #tpu.memory_space<vmem>>, vector<80x128xbf16>
    tpu.vector_store %arg7[%c0_66, %c896_67], %75 {strides = array<i32>} : memref<80x1152xbf16, #tpu.memory_space<vmem>>, vector<80x128xbf16>,
    %c27 = arith.constant 27 : index
    %c0_68 = arith.constant 0 : index
    %77 = vector.load %arg6[%c27, %c0_68] : memref<112x128xbf16, #tpu.memory_space<vmem>>, vector<80x128xbf16>
    %c0_69 = arith.constant 0 : index
    %c1024_70 = arith.constant 1024 : index
    %78 = vector.load %arg7[%c0_69, %c1024_70] : memref<80x1152xbf16, #tpu.memory_space<vmem>>, vector<80x128xbf16>
    tpu.vector_store %arg7[%c0_69, %c1024_70], %77 {strides = array<i32>} : memref<80x1152xbf16, #tpu.memory_space<vmem>>, vector<80x128xbf16>,
    %c0_71 = arith.constant 0 : index
    %c0_72 = arith.constant 0 : index
    %79 = vector.load %arg7[%c0_71, %c0_72] : memref<80x1152xbf16, #tpu.memory_space<vmem>>, vector<80x1152xbf16>
    %c0_73 = arith.constant 0 : index
    %c0_74 = arith.constant 0 : index
    %80 = vector.load %arg3[%c0_73, %c0_74] : memref<1152x128xbf16, #tpu.memory_space<vmem>>, vector<1152x128xbf16>
    %cst_75 = arith.constant dense<0.000000e+00> : vector<80x128xf32>
    %81 = tpu.matmul %79, %80, %cst_75 {dimension_numbers = #tpu.dot_dimension_numbers<[1], [0], [0], [1], [0, 0, 1, 1], [], []>} : vector<80x1152xbf16>, vector<1152x128xbf16>, vector<80x128xf32> -> vector<80x128xf32>
    %c0_76 = arith.constant 0 : index
    %c270_77 = arith.constant 270 : index
    %c0_78 = arith.constant 0 : index
    %82 = vector.load %arg1[%c0_76, %c270_77, %c0_78] : memref<1x384x128xbf16, #tpu.memory_space<vmem>>, vector<1x80x128xbf16>
    %83 = vector.shape_cast %82 : vector<1x80x128xbf16> to vector<80x128xbf16>
    %c0_79 = arith.constant 0 : index
    %c0_80 = arith.constant 0 : index
    %84 = vector.load %arg4[%c0_79, %c0_80] : memref<128x128xbf16, #tpu.memory_space<vmem>>, vector<128x128xbf16>
    %cst_81 = arith.constant dense<0.000000e+00> : vector<80x128xf32>
    %85 = tpu.matmul %83, %84, %cst_81 {dimension_numbers = #tpu.dot_dimension_numbers<[1], [0], [0], [1], [0, 0, 1, 1], [], []>} : vector<80x128xbf16>, vector<128x128xbf16>, vector<80x128xf32> -> vector<80x128xf32>
    %86 = arith.addf %81, %85 : vector<80x128xf32>
    %cst_82 = arith.constant 0.000000e+00 : f32
    %87 = vector.broadcast %cst_82 : f32 to vector<80x128xf32>
    %88 = arith.maximumf %86, %87 : vector<80x128xf32>
    %c0_83 = arith.constant 0 : index
    %c0_84 = arith.constant 0 : index
    %c0_85 = arith.constant 0 : index
    %89 = vector.load %arg5[%c0_83, %c0_84, %c0_85] : memref<1x80x128xf32, #tpu.memory_space<vmem>>, vector<1x80x128xf32>
    %90 = vector.shape_cast %89 : vector<1x80x128xf32> to vector<80x128xf32>
    %91 = vector.shape_cast %88 : vector<80x128xf32> to vector<1x80x128xf32>
    tpu.vector_store %arg5[%c0_83, %c0_84, %c0_85], %91 {strides = array<i32>} : memref<1x80x128xf32, #tpu.memory_space<vmem>>, vector<1x80x128xf32>,
    return
  }
  func.func @transform_0(%arg0: i32) -> (i32, i32, i32) {
    %c0_i32 = arith.constant 0 : i32
    %c0_i32_0 = arith.constant 0 : i32
    %c0_i32_1 = arith.constant 0 : i32
    return %arg0, %c0_i32, %c0_i32_0 : i32, i32, i32
  }
  func.func @transform_1(%arg0: i32) -> (i32, i32) {
    %c0_i32 = arith.constant 0 : i32
    %c0_i32_0 = arith.constant 0 : i32
    %c0_i32_1 = arith.constant 0 : i32
    return %c0_i32, %c0_i32_0 : i32, i32
  }
  func.func @transform_2(%arg0: i32) -> (i32, i32) {
    %c0_i32 = arith.constant 0 : i32
    %c0_i32_0 = arith.constant 0 : i32
    %c0_i32_1 = arith.constant 0 : i32
    return %c0_i32, %c0_i32_0 : i32, i32
  }
  func.func @transform_3(%arg0: i32) -> (i32, i32) {
    %c0_i32 = arith.constant 0 : i32
    %c0_i32_0 = arith.constant 0 : i32
    %c0_i32_1 = arith.constant 0 : i32
    return %c0_i32, %c0_i32_0 : i32, i32
  }
  func.func @transform_4(%arg0: i32) -> (i32, i32, i32) {
    %c0_i32 = arith.constant 0 : i32
    %c0_i32_0 = arith.constant 0 : i32
    %c0_i32_1 = arith.constant 0 : i32
    return %arg0, %c0_i32, %c0_i32_0 : i32, i32, i32
  }
}

</mosaic_0001>

<llo_original>
// kernel: tpu_custom_call.1
$region0: #{tpu_custom_call.1}
  #allocation0 [shape = 'u32[]', space=smem, size = 0x4, offset = 0x4, fixed_abs, tag = 'smem constant byte address 0x4 - core index']
  #allocation1 [shape = 'u32[144,128]{1,0:T(1,128)}', space=vmem, size = 0x12000, scoped, tag = 'internal scratch']
  #allocation2 [shape = 'bf16[112,128]{1,0:T(16,128)(2,1)}', space=vmem, size = 0x7000, scoped, tag = 'scratch operand']
  #allocation3 [shape = 'bf16[80,1152]{1,0:T(16,128)(2,1)}', space=vmem, size = 0x2d000, scoped, tag = 'scratch operand']
  %s0 = inlined_call_operand.hbm [shape: bf16[2,384,128], index: 0, kind: input, shape index: {}]
  %s1 = inlined_call_operand.hbm [shape: bf16[1152,128], index: 1, kind: input, shape index: {}]
  %s2 = inlined_call_operand.hbm [shape: bf16[1152,128], index: 2, kind: input, shape index: {}]
  %s3 = inlined_call_operand.hbm [shape: bf16[128,128], index: 3, kind: input, shape index: {}]
  %s4 = inlined_call_operand.hbm [shape: f32[2,80,128], index: 4, kind: output, shape index: {}]
  %s5 = sld [smem:[#allocation0]]
  $region65: #{tpu_custom_call.1} parent=0
    _
  %s7 = ssub.s32 1, %s5
  %s8 = scalar_select 0, %s7, %s5
  $region1: #{tpu_custom_call.1} parent=0
    #allocation4 [shape = 'u8[196608]{0}', space=vmem, size = 0x30000, scoped, tag = 'input window, operand 0']
    #allocation5 [shape = 's32[2]{0}', space=sflag, size = 0x8, scoped, tag = 'scoped memory for tpu_custom_call.1']
    #allocation6 [shape = 's32[2]{0}', space=sflag, size = 0x8, scoped, tag = 'scoped memory for tpu_custom_call.1']
    #allocation7 [shape = 'u8[294912]{0}', space=vmem, size = 0x48000, scoped, tag = 'input window, operand 1, single buffered']
    #allocation8 [shape = 's32[1]{0}', space=sflag, size = 0x4, scoped, tag = 'scoped memory for tpu_custom_call.1']
    #allocation9 [shape = 'u8[294912]{0}', space=vmem, size = 0x48000, scoped, tag = 'input window, operand 2, single buffered']
    #allocation10 [shape = 'u8[32768]{0}', space=vmem, size = 0x8000, scoped, tag = 'input window, operand 3, single buffered']
    #allocation11 [shape = 's32[1]{0}', space=sflag, size = 0x4, scoped, tag = 'scoped memory for tpu_custom_call.1']
    #allocation12 [shape = 'u8[81920]{0}', space=vmem, size = 0x14000, scoped, tag = 'output window, operand 0']
    %9 = vsyncpa [#allocation5], 0
    %s10 = scalar_lea.sflag [#allocation5], 1
    %11 = vsyncpa %s10, 0
    %12 = vsyncpa [#allocation8], 0
    %13 = vsyncpa [#allocation11], 0
    %14 = vsyncpa [#allocation6], 0
    %s15 = scalar_lea.sflag [#allocation6], 1
    %16 = vsyncpa %s15, 0
    loop: start=0, step=1, limit=4
    $region2: #{tpu_custom_call.1} parent=1 // loop_pre_header
      _
    $region3: #{tpu_custom_call.1} parent=1 // loop_header
      %s18 = sphi 0, %s22
      %p19 = scmp.ge.s32.totalorder %s18, 4
      %s28 = sphi 0, %s30
      %s31 = sphi 0, %s28
      %s32 = sphi 0, %s31
      %s48 = sphi 0, %s32
      %s52 = sphi 0, %s52
      %s54 = sphi 0, %s52
      %s55 = sphi 0, %s54
      %s69 = sphi 0, %s55
      %s73 = sphi 0, %s73
      %s75 = sphi 0, %s73
      %s76 = sphi 0, %s75
      %s90 = sphi 0, %s76
      %s94 = sphi 0, %s94
      %s96 = sphi 0, %s94
      %s97 = sphi 0, %s96
      %s111 = sphi 0, %s97
      %s117 = sphi 0, %s119
      %s120 = sphi 0, %s117
      %s121 = sphi 0, %s120
      %s137 = sphi 0, %s121
    $region4: #{tpu_custom_call.1} parent=1 // loop_header_branch
      %21 = sbr.rel (%p19) target = $region8
    $region5: #{tpu_custom_call.1} parent=1 // loop_body
      %s23 = ssub.s32 %s18, 1
      %s24 = ssub.s32 %s18, 2
      %s25 = sadd.s32 %s18, 1
      %s26 = ssub.s32 %s18, %s25
      %p27 = scmp.eq.s32.totalorder %s26, 0
      %s29 = sadd.s32 %s28, 1
      %s30 = scalar_select %p27, %s28, %s29
      %p33 = pneg %p27
      %p34 = scmp.eq.s32.totalorder %s18, 1
      %p35 = por %p33, %p34
      %p36 = scmp.ne.s32.totalorder %s28, %s31
      %p37 = scmp.eq.s32.totalorder %s18, 0
      %p38 = por %p36, %p37
      %p39 = scmp.ne.s32.totalorder %s28, %s31
      %p40 = scmp.eq.s32.totalorder %s23, 1
      %p41 = por %p39, %p40
      %p42 = scmp.ne.s32.totalorder %s31, %s32
      %p43 = scmp.eq.s32.totalorder %s23, 0
      %p44 = por %p42, %p43
      %p45 = scmp.ne.s32.totalorder %s31, %s32
      %p46 = scmp.eq.s32.totalorder %s24, 1
      %p47 = por %p45, %p46
      %p49 = scmp.ne.s32.totalorder %s32, %s48
      %p50 = scmp.eq.s32.totalorder %s24, 0
      %p51 = por %p49, %p50
      %s53 = sadd.s32 %s52, 1
      %p56 = scmp.eq.s32.totalorder %s18, 1
      %p57 = scmp.ne.s32.totalorder %s52, %s54
      %p58 = scmp.eq.s32.totalorder %s18, 0
      %p59 = por %p57, %p58
      %p60 = scmp.ne.s32.totalorder %s52, %s54
      %p61 = scmp.eq.s32.totalorder %s23, 1
      %p62 = por %p60, %p61
      %p63 = scmp.ne.s32.totalorder %s54, %s55
      %p64 = scmp.eq.s32.totalorder %s23, 0
      %p65 = por %p63, %p64
      %p66 = scmp.ne.s32.totalorder %s54, %s55
      %p67 = scmp.eq.s32.totalorder %s24, 1
      %p68 = por %p66, %p67
      %p70 = scmp.ne.s32.totalorder %s55, %s69
      %p71 = scmp.eq.s32.totalorder %s24, 0
      %p72 = por %p70, %p71
      %s74 = sadd.s32 %s73, 1
      %p77 = scmp.eq.s32.totalorder %s18, 1
      %p78 = scmp.ne.s32.totalorder %s73, %s75
      %p79 = scmp.eq.s32.totalorder %s18, 0
      %p80 = por %p78, %p79
      %p81 = scmp.ne.s32.totalorder %s73, %s75
      %p82 = scmp.eq.s32.totalorder %s23, 1
      %p83 = por %p81, %p82
      %p84 = scmp.ne.s32.totalorder %s75, %s76
      %p85 = scmp.eq.s32.totalorder %s23, 0
      %p86 = por %p84, %p85
      %p87 = scmp.ne.s32.totalorder %s75, %s76
      %p88 = scmp.eq.s32.totalorder %s24, 1
      %p89 = por %p87, %p88
      %p91 = scmp.ne.s32.totalorder %s76, %s90
      %p92 = scmp.eq.s32.totalorder %s24, 0
      %p93 = por %p91, %p92
      %s95 = sadd.s32 %s94, 1
      %p98 = scmp.eq.s32.totalorder %s18, 1
      %p99 = scmp.ne.s32.totalorder %s94, %s96
      %p100 = scmp.eq.s32.totalorder %s18, 0
      %p101 = por %p99, %p100
      %p102 = scmp.ne.s32.totalorder %s94, %s96
      %p103 = scmp.eq.s32.totalorder %s23, 1
      %p104 = por %p102, %p103
      %p105 = scmp.ne.s32.totalorder %s96, %s97
      %p106 = scmp.eq.s32.totalorder %s23, 0
      %p107 = por %p105, %p106
      %p108 = scmp.ne.s32.totalorder %s96, %s97
      %p109 = scmp.eq.s32.totalorder %s24, 1
      %p110 = por %p108, %p109
      %p112 = scmp.ne.s32.totalorder %s97, %s111
      %p113 = scmp.eq.s32.totalorder %s24, 0
      %p114 = por %p112, %p113
      %s115 = ssub.s32 %s18, %s25
      %p116 = scmp.eq.s32.totalorder %s115, 0
      %s118 = sadd.s32 %s117, 1
      %s119 = scalar_select %p116, %s117, %s118
      %p122 = pneg %p116
      %p123 = scmp.eq.s32.totalorder %s18, 1
      %p124 = por %p122, %p123
      %p125 = scmp.ne.s32.totalorder %s117, %s120
      %p126 = scmp.eq.s32.totalorder %s18, 0
      %p127 = por %p125, %p126
      %p128 = scmp.ne.s32.totalorder %s117, %s120
      %p129 = scmp.eq.s32.totalorder %s23, 1
      %p130 = por %p128, %p129
      %p131 = scmp.ne.s32.totalorder %s120, %s121
      %p132 = scmp.eq.s32.totalorder %s23, 0
      %p133 = por %p131, %p132
      %p134 = scmp.ne.s32.totalorder %s120, %s121
      %p135 = scmp.eq.s32.totalorder %s24, 1
      %p136 = por %p134, %p135
      %p138 = scmp.ne.s32.totalorder %s121, %s137
      %p139 = scmp.eq.s32.totalorder %s24, 0
      %p140 = por %p138, %p139
      %p141 = scmp.le.s32.totalorder 1, %s18
      %p142 = scmp.lt.s32.totalorder %s18, 3
      %p143 = pnand %p141, %p142
      %p144 = pneg %p143
      // Predicated region
      $region9: #{tpu_custom_call.1} parent=5 // pred_check
        _
      $region10: #{tpu_custom_call.1} parent=5 // pred_check_branch
        %146 = sbr.rel (%p143) target = $region12
      $region11: #{tpu_custom_call.1} parent=5 // pred_region
        %s147 = ssub.s32 %s18, 1
        // Predicated region
        $region13: #{tpu_custom_call.1} parent=11 // pred_check
          %p148 = pneg %p65
        $region14: #{tpu_custom_call.1} parent=11 // pred_check_branch
          %150 = sbr.rel (%p148) target = $region16
        $region15: #{tpu_custom_call.1} parent=11 // pred_region
          %s152 = ssub.s32 9216, 9216
          %153 = vsyncadd [#allocation8], %s152
          %s154 = sshll.u32 [#allocation7], 4
          %s155 = int_to_ptr.vmem [resolvable:$true] %s154
          %160 = dma.hbm_to_vmem [thread:$0]  %s1, 9216, %s155, [#allocation8], 64, 64, 4
        $region16: #{tpu_custom_call.1} parent=11 // pred_fallthru
          _
        // Predicated region
        $region17: #{tpu_custom_call.1} parent=11 // pred_check
          %p161 = pneg %p86
        $region18: #{tpu_custom_call.1} parent=11 // pred_check_branch
          %163 = sbr.rel (%p161) target = $region20
        $region19: #{tpu_custom_call.1} parent=11 // pred_region
          %s165 = ssub.s32 9216, 9216
          %166 = vsyncadd [#allocation8], %s165
          %s167 = sshll.u32 [#allocation9], 4
          %s168 = int_to_ptr.vmem [resolvable:$true] %s167
          %173 = dma.hbm_to_vmem [thread:$0]  %s2, 9216, %s168, [#allocation8], 64, 64, 4
        $region20: #{tpu_custom_call.1} parent=11 // pred_fallthru
          _
        // Predicated region
        $region21: #{tpu_custom_call.1} parent=11 // pred_check
          %p174 = pneg %p107
        $region22: #{tpu_custom_call.1} parent=11 // pred_check_branch
          %176 = sbr.rel (%p174) target = $region24
        $region23: #{tpu_custom_call.1} parent=11 // pred_region
          %s178 = ssub.s32 1024, 1024
          %179 = vsyncadd [#allocation11], %s178
          %s180 = sshll.u32 [#allocation10], 4
          %s181 = int_to_ptr.vmem [resolvable:$true] %s180
          %186 = dma.hbm_to_vmem [thread:$0]  %s3, 1024, %s181, [#allocation11], 64, 64, 4
        $region24: #{tpu_custom_call.1} parent=11 // pred_fallthru
          _
      $region12: #{tpu_custom_call.1} parent=5 // pred_fallthru
        _
      %p187 = scmp.lt.s32.totalorder %s18, 2
      // Predicated region
      $region25: #{tpu_custom_call.1} parent=5 // pred_check
        %p188 = pneg %p187
      $region26: #{tpu_custom_call.1} parent=5 // pred_check_branch
        %190 = sbr.rel (%p188) target = $region28
      $region27: #{tpu_custom_call.1} parent=5 // pred_region
        // Predicated region
        $region29: #{tpu_custom_call.1} parent=27 // pred_check
          %p191 = pneg %p38
        $region30: #{tpu_custom_call.1} parent=27 // pred_check_branch
          %193 = sbr.rel (%p191) target = $region32
        $region31: #{tpu_custom_call.1} parent=27 // pred_region
          %s194 = sand.u32 %s28, 1
          %s195 = scalar_lea.sflag [#allocation5], %s194
          %s196 = sand.u32 %s28, 1
          %s197 = smul.addr %s196, 192
          %s198 = scalar_lea.vmem [#allocation4], %s197
          %s200 = ssub.s32 3072, 3072
          %201 = vsyncadd %s195, %s200
          %s202 = smul.addr %s18, 48
          %s203 = smul.addr %s202, 64
          %s204 = scalar_lea.hbm %s0, %s203
          %s205 = sshll.u32 %s198, 4
          %s206 = int_to_ptr.vmem [resolvable:$true] %s205
          %211 = dma.hbm_to_vmem [thread:$0]  %s204, 3072, %s206, %s195, 64, 64, 4
        $region32: #{tpu_custom_call.1} parent=27 // pred_fallthru
          _
      $region28: #{tpu_custom_call.1} parent=5 // pred_fallthru
        _
      %p212 = scmp.le.s32.totalorder 1, %s18
      %p213 = scmp.lt.s32.totalorder %s18, 3
      %p214 = pnand %p212, %p213
      %p215 = pneg %p214
      // Predicated region
      $region33: #{tpu_custom_call.1} parent=5 // pred_check
        _
      $region34: #{tpu_custom_call.1} parent=5 // pred_check_branch
        %217 = sbr.rel (%p214) target = $region36
      $region35: #{tpu_custom_call.1} parent=5 // pred_region
        %s218 = ssub.s32 %s18, 1
        %s219 = sand.u32 %s31, 1
        %s220 = scalar_lea.sflag [#allocation5], %s219
        %s221 = sand.u32 %s31, 1
        %s222 = smul.addr %s221, 192
        %s223 = scalar_lea.vmem [#allocation4], %s222
        // Predicated region
        $region37: #{tpu_custom_call.1} parent=35 // pred_check
          %p224 = pneg %p44
        $region38: #{tpu_custom_call.1} parent=35 // pred_check_branch
          %226 = sbr.rel (%p224) target = $region40
        $region39: #{tpu_custom_call.1} parent=35 // pred_region
          %227 = dma.done %s220, 3072
        $region40: #{tpu_custom_call.1} parent=35 // pred_fallthru
          _
        // Predicated region
        $region41: #{tpu_custom_call.1} parent=35 // pred_check
          %p228 = pneg %p65
        $region42: #{tpu_custom_call.1} parent=35 // pred_check_branch
          %230 = sbr.rel (%p228) target = $region44
        $region43: #{tpu_custom_call.1} parent=35 // pred_region
          %231 = dma.done [#allocation8], 9216
        $region44: #{tpu_custom_call.1} parent=35 // pred_fallthru
          _
        // Predicated region
        $region45: #{tpu_custom_call.1} parent=35 // pred_check
          %p232 = pneg %p86
        $region46: #{tpu_custom_call.1} parent=35 // pred_check_branch
          %234 = sbr.rel (%p232) target = $region48
        $region47: #{tpu_custom_call.1} parent=35 // pred_region
          %235 = dma.done [#allocation8], 9216
        $region48: #{tpu_custom_call.1} parent=35 // pred_fallthru
          _
        // Predicated region
        $region49: #{tpu_custom_call.1} parent=35 // pred_check
          %p236 = pneg %p107
        $region50: #{tpu_custom_call.1} parent=35 // pred_check_branch
          %238 = sbr.rel (%p236) target = $region52
        $region51: #{tpu_custom_call.1} parent=35 // pred_region
          %239 = dma.done [#allocation11], 1024
        $region52: #{tpu_custom_call.1} parent=35 // pred_fallthru
          _
        %s240 = sand.u32 %s31, 1
        %s241 = scalar_lea.sflag [#allocation5], %s240
        %s242 = sand.u32 %s31, 1
        %s243 = smul.addr %s242, 192
        %s244 = scalar_lea.vmem [#allocation4], %s243
        %p245 = pneg %p44
        %p246 = pneg %p41
        %p247 = pneg %p65
        %p248 = pneg %p62
        %p249 = pneg %p86
        %p250 = pneg %p83
        %p251 = pneg %p107
        %p252 = pneg %p104
        %p253 = pneg %p133
        %p254 = pneg %p130
        %s255 = sand.u32 %s120, 1
        %s256 = scalar_lea.sflag [#allocation6], %s255
        %s257 = sand.u32 %s120, 1
        %s258 = smul.addr %s257, 80
        %s259 = scalar_lea.vmem [#allocation12], %s258
        %261 = vst [vmem:[#allocation2] sm:$0xff] 0
        %262 = vst [vmem:[#allocation2 + $0x30] sm:$0xff] 0
        %v263 = vlaneseq
        %v264 = vshrl.u32 %v263, 7
        %v265 = vadd.s32 %v264, 8
        %v266 = vadd.s32 %v264, 16
        %v267 = vadd.s32 %v264, 24
        %v268 = vadd.s32 %v264, 32
        %v269 = vadd.s32 %v264, 40
        %v270 = vadd.s32 %v264, 48
        %v271 = vadd.s32 %v264, 56
        %v272 = vadd.s32 %v264, 64
        %v273 = vadd.s32 %v264, 72
        %vm274 = vcmp.lt.s32.totalorder %v264, 0
        %v275 = vsub.s32 0, %v264
        %v276 = vsel %vm274, %v275, %v264
        %v277 = vmul.u32.u64.compose %v276, 3435973837
        %v278 = vextract.low.u32 %v277
        %v279 = vextract.high.u32 %v277
        %v280 = vshrl.u32 %v279, 3
        %v281 = vmul.u32 %v280, 10
        %v282 = vsub.s32 %v276, %v281
        %v283 = vsub.s32 0, %v282
        %v284 = vsel %vm274, %v283, %v282
        %vm285 = vcmp.lt.s32.totalorder %v265, 0
        %v286 = vsub.s32 0, %v265
        %v287 = vsel %vm285, %v286, %v265
        %v288 = vmul.u32.u64.compose %v287, 3435973837
        %v289 = vextract.low.u32 %v288
        %v290 = vextract.high.u32 %v288
        %v291 = vshrl.u32 %v290, 3
        %v292 = vmul.u32 %v291, 10
        %v293 = vsub.s32 %v287, %v292
        %v294 = vsub.s32 0, %v293
        %v295 = vsel %vm285, %v294, %v293
        %vm296 = vcmp.lt.s32.totalorder %v266, 0
        %v297 = vsub.s32 0, %v266
        %v298 = vsel %vm296, %v297, %v266
        %v299 = vmul.u32.u64.compose %v298, 3435973837
        %v300 = vextract.low.u32 %v299
        %v301 = vextract.high.u32 %v299
        %v302 = vshrl.u32 %v301, 3
        %v303 = vmul.u32 %v302, 10
        %v304 = vsub.s32 %v298, %v303
        %v305 = vsub.s32 0, %v304
        %v306 = vsel %vm296, %v305, %v304
        %vm307 = vcmp.lt.s32.totalorder %v267, 0
        %v308 = vsub.s32 0, %v267
        %v309 = vsel %vm307, %v308, %v267
        %v310 = vmul.u32.u64.compose %v309, 3435973837
        %v311 = vextract.low.u32 %v310
        %v312 = vextract.high.u32 %v310
        %v313 = vshrl.u32 %v312, 3
        %v314 = vmul.u32 %v313, 10
        %v315 = vsub.s32 %v309, %v314
        %v316 = vsub.s32 0, %v315
        %v317 = vsel %vm307, %v316, %v315
        %vm318 = vcmp.lt.s32.totalorder %v268, 0
        %v319 = vsub.s32 0, %v268
        %v320 = vsel %vm318, %v319, %v268
        %v321 = vmul.u32.u64.compose %v320, 3435973837
        %v322 = vextract.low.u32 %v321
        %v323 = vextract.high.u32 %v321
        %v324 = vshrl.u32 %v323, 3
        %v325 = vmul.u32 %v324, 10
        %v326 = vsub.s32 %v320, %v325
        %v327 = vsub.s32 0, %v326
        %v328 = vsel %vm318, %v327, %v326
        %vm329 = vcmp.lt.s32.totalorder %v269, 0
        %v330 = vsub.s32 0, %v269
        %v331 = vsel %vm329, %v330, %v269
        %v332 = vmul.u32.u64.compose %v331, 3435973837
        %v333 = vextract.low.u32 %v332
        %v334 = vextract.high.u32 %v332
        %v335 = vshrl.u32 %v334, 3
        %v336 = vmul.u32 %v335, 10
        %v337 = vsub.s32 %v331, %v336
        %v338 = vsub.s32 0, %v337
        %v339 = vsel %vm329, %v338, %v337
        %vm340 = vcmp.lt.s32.totalorder %v270, 0
        %v341 = vsub.s32 0, %v270
        %v342 = vsel %vm340, %v341, %v270
        %v343 = vmul.u32.u64.compose %v342, 3435973837
        %v344 = vextract.low.u32 %v343
        %v345 = vextract.high.u32 %v343
        %v346 = vshrl.u32 %v345, 3
        %v347 = vmul.u32 %v346, 10
        %v348 = vsub.s32 %v342, %v347
        %v349 = vsub.s32 0, %v348
        %v350 = vsel %vm340, %v349, %v348
        %vm351 = vcmp.lt.s32.totalorder %v271, 0
        %v352 = vsub.s32 0, %v271
        %v353 = vsel %vm351, %v352, %v271
        %v354 = vmul.u32.u64.compose %v353, 3435973837
        %v355 = vextract.low.u32 %v354
        %v356 = vextract.high.u32 %v354
        %v357 = vshrl.u32 %v356, 3
        %v358 = vmul.u32 %v357, 10
        %v359 = vsub.s32 %v353, %v358
        %v360 = vsub.s32 0, %v359
        %v361 = vsel %vm351, %v360, %v359
        %vm362 = vcmp.lt.s32.totalorder %v272, 0
        %v363 = vsub.s32 0, %v272
        %v364 = vsel %vm362, %v363, %v272
        %v365 = vmul.u32.u64.compose %v364, 3435973837
        %v366 = vextract.low.u32 %v365
        %v367 = vextract.high.u32 %v365
        %v368 = vshrl.u32 %v367, 3
        %v369 = vmul.u32 %v368, 10
        %v370 = vsub.s32 %v364, %v369
        %v371 = vsub.s32 0, %v370
        %v372 = vsel %vm362, %v371, %v370
        %vm373 = vcmp.lt.s32.totalorder %v273, 0
        %v374 = vsub.s32 0, %v273
        %v375 = vsel %vm373, %v374, %v273
        %v376 = vmul.u32.u64.compose %v375, 3435973837
        %v377 = vextract.low.u32 %v376
        %v378 = vextract.high.u32 %v376
        %v379 = vshrl.u32 %v378, 3
        %v380 = vmul.u32 %v379, 10
        %v381 = vsub.s32 %v375, %v380
        %v382 = vsub.s32 0, %v381
        %v383 = vsel %vm373, %v382, %v381
        %vm384 = vcmp.ne.s32.totalorder %v284, 0
        %vm385 = vcmp.ne.s32.totalorder %v295, 0
        %vm386 = vcmp.ne.s32.totalorder %v306, 0
        %vm387 = vcmp.ne.s32.totalorder %v317, 0
        %vm388 = vcmp.ne.s32.totalorder %v328, 0
        %vm389 = vcmp.ne.s32.totalorder %v339, 0
        %vm390 = vcmp.ne.s32.totalorder %v350, 0
        %vm391 = vcmp.ne.s32.totalorder %v361, 0
        %vm392 = vcmp.ne.s32.totalorder %v372, 0
        %vm393 = vcmp.ne.s32.totalorder %v383, 0
        %vm394 = vcmp.lt.s32.totalorder %v284, 0
        %vm395 = vcmp.lt.s32.totalorder %v295, 0
        %vm396 = vcmp.lt.s32.totalorder %v306, 0
        %vm397 = vcmp.lt.s32.totalorder %v317, 0
        %vm398 = vcmp.lt.s32.totalorder %v328, 0
        %vm399 = vcmp.lt.s32.totalorder %v339, 0
        %vm400 = vcmp.lt.s32.totalorder %v350, 0
        %vm401 = vcmp.lt.s32.totalorder %v361, 0
        %vm402 = vcmp.lt.s32.totalorder %v372, 0
        %vm403 = vcmp.lt.s32.totalorder %v383, 0
        %vm404 = vmand %vm394, %vm384
        %vm405 = vmand %vm395, %vm385
        %vm406 = vmand %vm396, %vm386
        %vm407 = vmand %vm397, %vm387
        %vm408 = vmand %vm398, %vm388
        %vm409 = vmand %vm399, %vm389
        %vm410 = vmand %vm400, %vm390
        %vm411 = vmand %vm401, %vm391
        %vm412 = vmand %vm402, %vm392
        %vm413 = vmand %vm403, %vm393
        %v414 = vadd.s32 %v284, 10
        %v415 = vadd.s32 %v295, 10
        %v416 = vadd.s32 %v306, 10
        %v417 = vadd.s32 %v317, 10
        %v418 = vadd.s32 %v328, 10
        %v419 = vadd.s32 %v339, 10
        %v420 = vadd.s32 %v350, 10
        %v421 = vadd.s32 %v361, 10
        %v422 = vadd.s32 %v372, 10
        %v423 = vadd.s32 %v383, 10
        %v424 = vsel %vm404, %v414, %v284
        %v425 = vsel %vm405, %v415, %v295
        %v426 = vsel %vm406, %v416, %v306
        %v427 = vsel %vm407, %v417, %v317
        %v428 = vsel %vm408, %v418, %v328
        %v429 = vsel %vm409, %v419, %v339
        %v430 = vsel %vm410, %v420, %v350
        %v431 = vsel %vm411, %v421, %v361
        %v432 = vsel %vm412, %v422, %v372
        %v433 = vsel %vm413, %v423, %v383
        %vm434 = vcmp.lt.s32.totalorder %v424, 8
        %vm435 = vcmp.lt.s32.totalorder %v425, 8
        %vm436 = vcmp.lt.s32.totalorder %v426, 8
        %vm437 = vcmp.lt.s32.totalorder %v427, 8
        %vm438 = vcmp.lt.s32.totalorder %v428, 8
        %vm439 = vcmp.lt.s32.totalorder %v429, 8
        %vm440 = vcmp.lt.s32.totalorder %v430, 8
        %vm441 = vcmp.lt.s32.totalorder %v431, 8
        %vm442 = vcmp.lt.s32.totalorder %v432, 8
        %vm443 = vcmp.lt.s32.totalorder %v433, 8
        %v444 = vld [vmem:[%s223] sm:$0xf]
        %v445 = vld [vmem:[%s223 + $0x4] sm:$0xf]
        %v446 = vld [vmem:[%s223 + $0x8] sm:$0xf]
        %v447 = vld [vmem:[%s223 + $0xc] sm:$0xf]
        %v448 = vld [vmem:[%s223 + $0x10] sm:$0xf]
        %v449 = vld [vmem:[%s223 + $0x14] sm:$0xf]
        %v450 = vld [vmem:[%s223 + $0x18] sm:$0xf]
        %v451 = vld [vmem:[%s223 + $0x1c] sm:$0xf]
        %v452 = vld [vmem:[%s223 + $0x20] sm:$0xf]
        %v453 = vld [vmem:[%s223 + $0x24] sm:$0xf]
        %v464 = vunpack.c.l.b16 %v444
        %v465 = vunpack.c.l.b16 %v445
        %v466 = vunpack.c.l.b16 %v446
        %v467 = vunpack.c.l.b16 %v447
        %v468 = vunpack.c.l.b16 %v448
        %v469 = vunpack.c.l.b16 %v449
        %v470 = vunpack.c.l.b16 %v450
        %v471 = vunpack.c.l.b16 %v451
        %v472 = vunpack.c.l.b16 %v452
        %v473 = vunpack.c.l.b16 %v453
        %v474 = vpack.c.b16 %v465, %v464
        %v475 = vpack.c.b16 %v467, %v466
        %v476 = vpack.c.b16 %v469, %v468
        %v477 = vpack.c.b16 %v471, %v470
        %v478 = vpack.c.b16 %v473, %v472
        %484 = vst [vmem:[#allocation3] sm:$0xff] %v474
        %485 = vst [vmem:[#allocation3 + $0x48] sm:$0xff] %v475
        %486 = vst [vmem:[#allocation3 + $0x90] sm:$0xff] %v476
        %487 = vst [vmem:[#allocation3 + $0xd8] sm:$0xff] %v477
        %488 = vst [vmem:[#allocation3 + $0x120] sm:$0xff] %v478
        %v489 = vld [vmem:[%s223 + $0x2c] sm:$0xe]
        %v490 = vld [vmem:[%s223 + $0x30] sm:$0xf]
        %v491 = vld [vmem:[%s223 + $0x34] sm:$0xf]
        %v492 = vld [vmem:[%s223 + $0x38] sm:$0xf]
        %v493 = vld [vmem:[%s223 + $0x3c] sm:$0xf]
        %v494 = vld [vmem:[%s223 + $0x40] sm:$0xf]
        %v495 = vld [vmem:[%s223 + $0x44] sm:$0xf]
        %v496 = vld [vmem:[%s223 + $0x48] sm:$0xf]
        %v497 = vld [vmem:[%s223 + $0x4c] sm:$0xf]
        %v498 = vld [vmem:[%s223 + $0x50] sm:$0xf]
        %v499 = vld [vmem:[%s223 + $0x54] sm:$0x1]
        %v511 = vunpack.c.l.b16 %v489
        %v512 = vunpack.c.l.b16 %v490
        %v513 = vunpack.c.l.b16 %v491
        %v514 = vunpack.c.l.b16 %v492
        %v515 = vunpack.c.l.b16 %v493
        %v516 = vunpack.c.l.b16 %v494
        %v517 = vunpack.c.l.b16 %v495
        %v518 = vunpack.c.l.b16 %v496
        %v519 = vunpack.c.l.b16 %v497
        %v520 = vunpack.c.l.b16 %v498
        %v521 = vunpack.c.l.b16 %v499
        %v522 = vpack.c.b16 %v512, %v511
        %v523 = vpack.c.b16 %v514, %v513
        %v524 = vpack.c.b16 %v516, %v515
        %v525 = vpack.c.b16 %v518, %v517
        %v526 = vpack.c.b16 %v520, %v519
        %v527 = vpack.c.b16 %v521, %v521
        %vm528 = vcmask 1046528
        %v529 = vrot.slane %v522, 1
        %v530 = vrot.slane %v523, 1
        %v531 = vsel %vm528, %v529, %v530
        %v532 = vrot.slane %v524, 1
        %v533 = vsel %vm528, %v530, %v532
        %v534 = vrot.slane %v525, 1
        %v535 = vsel %vm528, %v532, %v534
        %v536 = vrot.slane %v526, 1
        %v537 = vsel %vm528, %v534, %v536
        %v538 = vrot.slane %v527, 1
        %v539 = vsel %vm528, %v536, %v538
        %545 = vst [vmem:[#allocation3 + $0x8] sm:$0xff] %v531
        %546 = vst [vmem:[#allocation3 + $0x50] sm:$0xff] %v533
        %547 = vst [vmem:[#allocation3 + $0x98] sm:$0xff] %v535
        %548 = vst [vmem:[#allocation3 + $0xe0] sm:$0xff] %v537
        %549 = vst [vmem:[#allocation3 + $0x128] sm:$0xff] %v539
        %v550 = vld [vmem:[%s223] sm:$0xf]
        %v551 = vld [vmem:[%s223 + $0x4] sm:$0xf]
        %v552 = vld [vmem:[%s223 + $0x8] sm:$0xf]
        %v553 = vld [vmem:[%s223 + $0xc] sm:$0xf]
        %v554 = vld [vmem:[%s223 + $0x10] sm:$0xf]
        %v555 = vld [vmem:[%s223 + $0x14] sm:$0xf]
        %v556 = vld [vmem:[%s223 + $0x18] sm:$0xf]
        %v557 = vld [vmem:[%s223 + $0x1c] sm:$0xf]
        %v558 = vld [vmem:[%s223 + $0x20] sm:$0xf]
        %v559 = vld [vmem:[%s223 + $0x24] sm:$0xf]
        %v560 = vld [vmem:[%s223 + $0x28] sm:$0x1]
        %v572 = vunpack.c.l.b16 %v550
        %v573 = vunpack.c.l.b16 %v551
        %v574 = vunpack.c.l.b16 %v552
        %v575 = vunpack.c.l.b16 %v553
        %v576 = vunpack.c.l.b16 %v554
        %v577 = vunpack.c.l.b16 %v555
        %v578 = vunpack.c.l.b16 %v556
        %v579 = vunpack.c.l.b16 %v557
        %v580 = vunpack.c.l.b16 %v558
        %v581 = vunpack.c.l.b16 %v559
        %v582 = vunpack.c.l.b16 %v560
        %v583 = vpack.c.b16 %v573, %v572
        %v584 = vpack.c.b16 %v575, %v574
        %v585 = vpack.c.b16 %v577, %v576
        %v586 = vpack.c.b16 %v579, %v578
        %v587 = vpack.c.b16 %v581, %v580
        %v588 = vpack.c.b16 %v582, %v582
        %vm589 = vsmask.f32 7424
        %v591 = vshrl.u32 %v583, 16
        %v593 = vshll.u32 %v583, 16
        %v595 = vrot.slane %v593, 1
        %v596 = vor.u32 %v591, %v595
        %v598 = vshll.u32 %v584, 16
        %v600 = vrot.slane %v598, 1
        %v601 = vsel %vm589, %v596, %v600
        %v602 = vshrl.u32 %v584, 16
        %v604 = vor.u32 %v602, %v600
        %v606 = vshll.u32 %v585, 16
        %v608 = vrot.slane %v606, 1
        %v609 = vsel %vm589, %v604, %v608
        %v610 = vshrl.u32 %v585, 16
        %v612 = vor.u32 %v610, %v608
        %v614 = vshll.u32 %v586, 16
        %v616 = vrot.slane %v614, 1
        %v617 = vsel %vm589, %v612, %v616
        %v618 = vshrl.u32 %v586, 16
        %v620 = vor.u32 %v618, %v616
        %v622 = vshll.u32 %v587, 16
        %v624 = vrot.slane %v622, 1
        %v625 = vsel %vm589, %v620, %v624
        %v626 = vshrl.u32 %v587, 16
        %v628 = vor.u32 %v626, %v624
        %v630 = vshll.u32 %v588, 16
        %v632 = vrot.slane %v630, 1
        %v633 = vsel %vm589, %v628, %v632
        %639 = vst [vmem:[#allocation3 + $0x10] sm:$0xff] %v601
        %640 = vst [vmem:[#allocation3 + $0x58] sm:$0xff] %v609
        %641 = vst [vmem:[#allocation3 + $0xa0] sm:$0xff] %v617
        %642 = vst [vmem:[#allocation3 + $0xe8] sm:$0xff] %v625
        %643 = vst [vmem:[#allocation3 + $0x130] sm:$0xff] %v633
        %v644 = vld [vmem:[%s223 + $0x58] sm:$0xc]
        %v645 = vld [vmem:[%s223 + $0x5c] sm:$0xf]
        %v646 = vld [vmem:[%s223 + $0x60] sm:$0xf]
        %v647 = vld [vmem:[%s223 + $0x64] sm:$0xf]
        %v648 = vld [vmem:[%s223 + $0x68] sm:$0xf]
        %v649 = vld [vmem:[%s223 + $0x6c] sm:$0xf]
        %v650 = vld [vmem:[%s223 + $0x70] sm:$0xf]
        %v651 = vld [vmem:[%s223 + $0x74] sm:$0xf]
        %v652 = vld [vmem:[%s223 + $0x78] sm:$0xf]
        %v653 = vld [vmem:[%s223 + $0x7c] sm:$0xf]
        %v654 = vld [vmem:[%s223 + $0x80] sm:$0x3]
        %v666 = vunpack.c.l.b16 %v644
        %v667 = vunpack.c.l.b16 %v645
        %v668 = vunpack.c.l.b16 %v646
        %v669 = vunpack.c.l.b16 %v647
        %v670 = vunpack.c.l.b16 %v648
        %v671 = vunpack.c.l.b16 %v649
        %v672 = vunpack.c.l.b16 %v650
        %v673 = vunpack.c.l.b16 %v651
        %v674 = vunpack.c.l.b16 %v652
        %v675 = vunpack.c.l.b16 %v653
        %v676 = vunpack.c.l.b16 %v654
        %v677 = vpack.c.b16 %v667, %v666
        %v678 = vpack.c.b16 %v669, %v668
        %v679 = vpack.c.b16 %v671, %v670
        %v680 = vpack.c.b16 %v673, %v672
        %v681 = vpack.c.b16 %v675, %v674
        %v682 = vpack.c.b16 %v676, %v676
        %vm683 = vcmask 1045504
        %v684 = vrot.slane %v677, 2
        %v685 = vrot.slane %v678, 2
        %v686 = vsel %vm683, %v684, %v685
        %v687 = vrot.slane %v679, 2
        %v688 = vsel %vm683, %v685, %v687
        %v689 = vrot.slane %v680, 2
        %v690 = vsel %vm683, %v687, %v689
        %v691 = vrot.slane %v681, 2
        %v692 = vsel %vm683, %v689, %v691
        %v693 = vrot.slane %v682, 2
        %v694 = vsel %vm683, %v691, %v693
        %700 = vst [vmem:[#allocation3 + $0x18] sm:$0xff] %v686
        %701 = vst [vmem:[#allocation3 + $0x60] sm:$0xff] %v688
        %702 = vst [vmem:[#allocation3 + $0xa8] sm:$0xff] %v690
        %703 = vst [vmem:[#allocation3 + $0xf0] sm:$0xff] %v692
        %704 = vst [vmem:[#allocation3 + $0x138] sm:$0xff] %v694
        %v705 = vld [vmem:[%s223 + $0x84] sm:$0x8]
        %v706 = vld [vmem:[%s223 + $0x88] sm:$0xf]
        %v707 = vld [vmem:[%s223 + $0x8c] sm:$0xf]
        %v708 = vld [vmem:[%s223 + $0x90] sm:$0xf]
        %v709 = vld [vmem:[%s223 + $0x94] sm:$0xf]
        %v710 = vld [vmem:[%s223 + $0x98] sm:$0xf]
        %v711 = vld [vmem:[%s223 + $0x9c] sm:$0xf]
        %v712 = vld [vmem:[%s223 + $0xa0] sm:$0xf]
        %v713 = vld [vmem:[%s223 + $0xa4] sm:$0xf]
        %v714 = vld [vmem:[%s223 + $0xa8] sm:$0xf]
        %v715 = vld [vmem:[%s223 + $0xac] sm:$0x7]
        %v727 = vunpack.c.l.b16 %v705
        %v728 = vunpack.c.l.b16 %v706
        %v729 = vunpack.c.l.b16 %v707
        %v730 = vunpack.c.l.b16 %v708
        %v731 = vunpack.c.l.b16 %v709
        %v732 = vunpack.c.l.b16 %v710
        %v733 = vunpack.c.l.b16 %v711
        %v734 = vunpack.c.l.b16 %v712
        %v735 = vunpack.c.l.b16 %v713
        %v736 = vunpack.c.l.b16 %v714
        %v737 = vunpack.c.l.b16 %v715
        %v738 = vpack.c.b16 %v728, %v727
        %v739 = vpack.c.b16 %v730, %v729
        %v740 = vpack.c.b16 %v732, %v731
        %v741 = vpack.c.b16 %v734, %v733
        %v742 = vpack.c.b16 %v736, %v735
        %v743 = vpack.c.b16 %v737, %v737
        %vm744 = vcmask 1044480
        %v745 = vrot.slane %v738, 3
        %v746 = vrot.slane %v739, 3
        %v747 = vsel %vm744, %v745, %v746
        %v748 = vrot.slane %v740, 3
        %v749 = vsel %vm744, %v746, %v748
        %v750 = vrot.slane %v741, 3
        %v751 = vsel %vm744, %v748, %v750
        %v752 = vrot.slane %v742, 3
        %v753 = vsel %vm744, %v750, %v752
        %v754 = vrot.slane %v743, 3
        %v755 = vsel %vm744, %v752, %v754
        %761 = vst [vmem:[#allocation3 + $0x20] sm:$0xff] %v747
        %762 = vst [vmem:[#allocation3 + $0x68] sm:$0xff] %v749
        %763 = vst [vmem:[#allocation3 + $0xb0] sm:$0xff] %v751
        %764 = vst [vmem:[#allocation3 + $0xf8] sm:$0xff] %v753
        %765 = vst [vmem:[#allocation3 + $0x140] sm:$0xff] %v755
        %v766 = vld [vmem:[%s223 + $0x58] sm:$0xc]
        %v767 = vld [vmem:[%s223 + $0x5c] sm:$0xf]
        %v768 = vld [vmem:[%s223 + $0x60] sm:$0xf]
        %v769 = vld [vmem:[%s223 + $0x64] sm:$0xf]
        %v770 = vld [vmem:[%s223 + $0x68] sm:$0xf]
        %v771 = vld [vmem:[%s223 + $0x6c] sm:$0xf]
        %v772 = vld [vmem:[%s223 + $0x70] sm:$0xf]
        %v773 = vld [vmem:[%s223 + $0x74] sm:$0xf]
        %v774 = vld [vmem:[%s223 + $0x78] sm:$0xf]
        %v775 = vld [vmem:[%s223 + $0x7c] sm:$0xf]
        %v776 = vld [vmem:[%s223 + $0x80] sm:$0x7]
        %v788 = vunpack.c.l.b16 %v766
        %v789 = vunpack.c.l.b16 %v767
        %v790 = vunpack.c.l.b16 %v768
        %v791 = vunpack.c.l.b16 %v769
        %v792 = vunpack.c.l.b16 %v770
        %v793 = vunpack.c.l.b16 %v771
        %v794 = vunpack.c.l.b16 %v772
        %v795 = vunpack.c.l.b16 %v773
        %v796 = vunpack.c.l.b16 %v774
        %v797 = vunpack.c.l.b16 %v775
        %v798 = vunpack.c.l.b16 %v776
        %v799 = vpack.c.b16 %v789, %v788
        %v800 = vpack.c.b16 %v791, %v790
        %v801 = vpack.c.b16 %v793, %v792
        %v802 = vpack.c.b16 %v795, %v794
        %v803 = vpack.c.b16 %v797, %v796
        %v804 = vpack.c.b16 %v798, %v798
        %vm805 = vsmask.f32 5376
        %v807 = vshrl.u32 %v799, 16
        %v809 = vrot.slane %v807, 2
        %v810 = vshll.u32 %v799, 16
        %v812 = vrot.slane %v810, 3
        %v813 = vor.u32 %v809, %v812
        %v815 = vshrl.u32 %v800, 16
        %v817 = vrot.slane %v815, 2
        %v818 = vshll.u32 %v800, 16
        %v820 = vrot.slane %v818, 3
        %v821 = vor.u32 %v817, %v820
        %v822 = vsel %vm805, %v813, %v821
        %v824 = vshrl.u32 %v801, 16
        %v826 = vrot.slane %v824, 2
        %v827 = vshll.u32 %v801, 16
        %v829 = vrot.slane %v827, 3
        %v830 = vor.u32 %v826, %v829
        %v831 = vsel %vm805, %v821, %v830
        %v833 = vshrl.u32 %v802, 16
        %v835 = vrot.slane %v833, 2
        %v836 = vshll.u32 %v802, 16
        %v838 = vrot.slane %v836, 3
        %v839 = vor.u32 %v835, %v838
        %v840 = vsel %vm805, %v830, %v839
        %v842 = vshrl.u32 %v803, 16
        %v844 = vrot.slane %v842, 2
        %v845 = vshll.u32 %v803, 16
        %v847 = vrot.slane %v845, 3
        %v848 = vor.u32 %v844, %v847
        %v849 = vsel %vm805, %v839, %v848
        %v851 = vshrl.u32 %v804, 16
        %v853 = vrot.slane %v851, 2
        %v854 = vshll.u32 %v804, 16
        %v856 = vrot.slane %v854, 3
        %v857 = vor.u32 %v853, %v856
        %v858 = vsel %vm805, %v848, %v857
        %864 = vst [vmem:[#allocation3 + $0x28] sm:$0xff] %v822
        %865 = vst [vmem:[#allocation3 + $0x70] sm:$0xff] %v831
        %866 = vst [vmem:[#allocation3 + $0xb8] sm:$0xff] %v840
        %867 = vst [vmem:[#allocation3 + $0x100] sm:$0xff] %v849
        %868 = vst [vmem:[#allocation3 + $0x148] sm:$0xff] %v858
        %v869 = vld [vmem:[%s223 + $0x4] sm:$0xe]
        %v870 = vld [vmem:[%s223 + $0x8] sm:$0xf]
        %v871 = vld [vmem:[%s223 + $0xc] sm:$0xf]
        %v872 = vld [vmem:[%s223 + $0x10] sm:$0xf]
        %v873 = vld [vmem:[%s223 + $0x14] sm:$0xf]
        %v874 = vld [vmem:[%s223 + $0x18] sm:$0xf]
        %v875 = vld [vmem:[%s223 + $0x1c] sm:$0xf]
        %v876 = vld [vmem:[%s223 + $0x20] sm:$0xf]
        %v877 = vld [vmem:[%s223 + $0x24] sm:$0xf]
        %v878 = vld [vmem:[%s223 + $0x28] sm:$0xf]
        %v879 = vld [vmem:[%s223 + $0x2c] sm:$0x1]
        %v891 = vunpack.c.l.b16 %v869
        %v892 = vunpack.c.l.b16 %v870
        %v893 = vunpack.c.l.b16 %v871
        %v894 = vunpack.c.l.b16 %v872
        %v895 = vunpack.c.l.b16 %v873
        %v896 = vunpack.c.l.b16 %v874
        %v897 = vunpack.c.l.b16 %v875
        %v898 = vunpack.c.l.b16 %v876
        %v899 = vunpack.c.l.b16 %v877
        %v900 = vunpack.c.l.b16 %v878
        %v901 = vunpack.c.l.b16 %v879
        %v902 = vpack.c.b16 %v892, %v891
        %v903 = vpack.c.b16 %v894, %v893
        %v904 = vpack.c.b16 %v896, %v895
        %v905 = vpack.c.b16 %v898, %v897
        %v906 = vpack.c.b16 %v900, %v899
        %v907 = vpack.c.b16 %v901, %v901
        %v908 = vrot.slane %v902, 1
        %v909 = vrot.slane %v903, 1
        %v910 = vsel %vm528, %v908, %v909
        %v911 = vrot.slane %v904, 1
        %v912 = vsel %vm528, %v909, %v911
        %v913 = vrot.slane %v905, 1
        %v914 = vsel %vm528, %v911, %v913
        %v915 = vrot.slane %v906, 1
        %v916 = vsel %vm528, %v913, %v915
        %v917 = vrot.slane %v907, 1
        %v918 = vsel %vm528, %v915, %v917
        %924 = vst [vmem:[#allocation3 + $0x30] sm:$0xff] %v910
        %925 = vst [vmem:[#allocation3 + $0x78] sm:$0xff] %v912
        %926 = vst [vmem:[#allocation3 + $0xc0] sm:$0xff] %v914
        %927 = vst [vmem:[#allocation3 + $0x108] sm:$0xff] %v916
        %928 = vst [vmem:[#allocation3 + $0x150] sm:$0xff] %v918
        %v929 = vld [vmem:[%s223 + $0x30] sm:$0xc]
        %v930 = vld [vmem:[%s223 + $0x34] sm:$0xf]
        %v931 = vld [vmem:[%s223 + $0x38] sm:$0xf]
        %v932 = vld [vmem:[%s223 + $0x3c] sm:$0xf]
        %v933 = vld [vmem:[%s223 + $0x40] sm:$0xf]
        %v934 = vld [vmem:[%s223 + $0x44] sm:$0xf]
        %v935 = vld [vmem:[%s223 + $0x48] sm:$0xf]
        %v936 = vld [vmem:[%s223 + $0x4c] sm:$0xf]
        %v937 = vld [vmem:[%s223 + $0x50] sm:$0xf]
        %v938 = vld [vmem:[%s223 + $0x54] sm:$0xf]
        %v939 = vld [vmem:[%s223 + $0x58] sm:$0x3]
        %v951 = vunpack.c.l.b16 %v929
        %v952 = vunpack.c.l.b16 %v930
        %v953 = vunpack.c.l.b16 %v931
        %v954 = vunpack.c.l.b16 %v932
        %v955 = vunpack.c.l.b16 %v933
        %v956 = vunpack.c.l.b16 %v934
        %v957 = vunpack.c.l.b16 %v935
        %v958 = vunpack.c.l.b16 %v936
        %v959 = vunpack.c.l.b16 %v937
        %v960 = vunpack.c.l.b16 %v938
        %v961 = vunpack.c.l.b16 %v939
        %v962 = vpack.c.b16 %v952, %v951
        %v963 = vpack.c.b16 %v954, %v953
        %v964 = vpack.c.b16 %v956, %v955
        %v965 = vpack.c.b16 %v958, %v957
        %v966 = vpack.c.b16 %v960, %v959
        %v967 = vpack.c.b16 %v961, %v961
        %v968 = vrot.slane %v962, 2
        %v969 = vrot.slane %v963, 2
        %v970 = vsel %vm683, %v968, %v969
        %v971 = vrot.slane %v964, 2
        %v972 = vsel %vm683, %v969, %v971
        %v973 = vrot.slane %v965, 2
        %v974 = vsel %vm683, %v971, %v973
        %v975 = vrot.slane %v966, 2
        %v976 = vsel %vm683, %v973, %v975
        %v977 = vrot.slane %v967, 2
        %v978 = vsel %vm683, %v975, %v977
        %984 = vst [vmem:[#allocation3 + $0x38] sm:$0xff] %v970
        %985 = vst [vmem:[#allocation3 + $0x80] sm:$0xff] %v972
        %986 = vst [vmem:[#allocation3 + $0xc8] sm:$0xff] %v974
        %987 = vst [vmem:[#allocation3 + $0x110] sm:$0xff] %v976
        %988 = vst [vmem:[#allocation3 + $0x158] sm:$0xff] %v978
        %v989 = vld [vmem:[%s223 + $0x4] sm:$0xe]
        %v990 = vld [vmem:[%s223 + $0x8] sm:$0xf]
        %v991 = vld [vmem:[%s223 + $0xc] sm:$0xf]
        %v992 = vld [vmem:[%s223 + $0x10] sm:$0xf]
        %v993 = vld [vmem:[%s223 + $0x14] sm:$0xf]
        %v994 = vld [vmem:[%s223 + $0x18] sm:$0xf]
        %v995 = vld [vmem:[%s223 + $0x1c] sm:$0xf]
        %v996 = vld [vmem:[%s223 + $0x20] sm:$0xf]
        %v997 = vld [vmem:[%s223 + $0x24] sm:$0xf]
        %v998 = vld [vmem:[%s223 + $0x28] sm:$0xf]
        %v999 = vld [vmem:[%s223 + $0x2c] sm:$0x3]
        %v1011 = vunpack.c.l.b16 %v989
        %v1012 = vunpack.c.l.b16 %v990
        %v1013 = vunpack.c.l.b16 %v991
        %v1014 = vunpack.c.l.b16 %v992
        %v1015 = vunpack.c.l.b16 %v993
        %v1016 = vunpack.c.l.b16 %v994
        %v1017 = vunpack.c.l.b16 %v995
        %v1018 = vunpack.c.l.b16 %v996
        %v1019 = vunpack.c.l.b16 %v997
        %v1020 = vunpack.c.l.b16 %v998
        %v1021 = vunpack.c.l.b16 %v999
        %v1022 = vpack.c.b16 %v1012, %v1011
        %v1023 = vpack.c.b16 %v1014, %v1013
        %v1024 = vpack.c.b16 %v1016, %v1015
        %v1025 = vpack.c.b16 %v1018, %v1017
        %v1026 = vpack.c.b16 %v1020, %v1019
        %v1027 = vpack.c.b16 %v1021, %v1021
        %vm1028 = vsmask.f32 6400
        %v1030 = vshrl.u32 %v1022, 16
        %v1032 = vrot.slane %v1030, 1
        %v1033 = vshll.u32 %v1022, 16
        %v1035 = vrot.slane %v1033, 2
        %v1036 = vor.u32 %v1032, %v1035
        %v1038 = vshrl.u32 %v1023, 16
        %v1040 = vrot.slane %v1038, 1
        %v1041 = vshll.u32 %v1023, 16
        %v1043 = vrot.slane %v1041, 2
        %v1044 = vor.u32 %v1040, %v1043
        %v1045 = vsel %vm1028, %v1036, %v1044
        %v1047 = vshrl.u32 %v1024, 16
        %v1049 = vrot.slane %v1047, 1
        %v1050 = vshll.u32 %v1024, 16
        %v1052 = vrot.slane %v1050, 2
        %v1053 = vor.u32 %v1049, %v1052
        %v1054 = vsel %vm1028, %v1044, %v1053
        %v1056 = vshrl.u32 %v1025, 16
        %v1058 = vrot.slane %v1056, 1
        %v1059 = vshll.u32 %v1025, 16
        %v1061 = vrot.slane %v1059, 2
        %v1062 = vor.u32 %v1058, %v1061
        %v1063 = vsel %vm1028, %v1053, %v1062
        %v1065 = vshrl.u32 %v1026, 16
        %v1067 = vrot.slane %v1065, 1
        %v1068 = vshll.u32 %v1026, 16
        %v1070 = vrot.slane %v1068, 2
        %v1071 = vor.u32 %v1067, %v1070
        %v1072 = vsel %vm1028, %v1062, %v1071
        %v1074 = vshrl.u32 %v1027, 16
        %v1076 = vrot.slane %v1074, 1
        %v1077 = vshll.u32 %v1027, 16
        %v1079 = vrot.slane %v1077, 2
        %v1080 = vor.u32 %v1076, %v1079
        %v1081 = vsel %vm1028, %v1071, %v1080
        %1087 = vst [vmem:[#allocation3 + $0x40] sm:$0xff] %v1045
        %1088 = vst [vmem:[#allocation3 + $0x88] sm:$0xff] %v1054
        %1089 = vst [vmem:[#allocation3 + $0xd0] sm:$0xff] %v1063
        %1090 = vst [vmem:[#allocation3 + $0x118] sm:$0xff] %v1072
        %1091 = vst [vmem:[#allocation3 + $0x160] sm:$0xff] %v1081
        %v1092 = vld [vmem:[#allocation3] sm:$0xff]
        %v1093 = vld [vmem:[#allocation3 + $0x8] sm:$0xff]
        %v1094 = vld [vmem:[#allocation3 + $0x10] sm:$0xff]
        %v1095 = vld [vmem:[#allocation3 + $0x18] sm:$0xff]
        %v1096 = vld [vmem:[#allocation3 + $0x20] sm:$0xff]
        %v1097 = vld [vmem:[#allocation3 + $0x28] sm:$0xff]
        %v1098 = vld [vmem:[#allocation3 + $0x30] sm:$0xff]
        %v1099 = vld [vmem:[#allocation3 + $0x38] sm:$0xff]
        %v1100 = vld [vmem:[#allocation3 + $0x40] sm:$0xff]
        %v1101 = vld [vmem:[#allocation3 + $0x48] sm:$0xff]
        %v1102 = vld [vmem:[#allocation3 + $0x50] sm:$0xff]
        %v1103 = vld [vmem:[#allocation3 + $0x58] sm:$0xff]
        %v1104 = vld [vmem:[#allocation3 + $0x60] sm:$0xff]
        %v1105 = vld [vmem:[#allocation3 + $0x68] sm:$0xff]
        %v1106 = vld [vmem:[#allocation3 + $0x70] sm:$0xff]
        %v1107 = vld [vmem:[#allocation3 + $0x78] sm:$0xff]
        %v1108 = vld [vmem:[#allocation3 + $0x80] sm:$0xff]
        %v1109 = vld [vmem:[#allocation3 + $0x88] sm:$0xff]
        %v1110 = vld [vmem:[#allocation3 + $0x90] sm:$0xff]
        %v1111 = vld [vmem:[#allocation3 + $0x98] sm:$0xff]
        %v1112 = vld [vmem:[#allocation3 + $0xa0] sm:$0xff]
        %v1113 = vld [vmem:[#allocation3 + $0xa8] sm:$0xff]
        %v1114 = vld [vmem:[#allocation3 + $0xb0] sm:$0xff]
        %v1115 = vld [vmem:[#allocation3 + $0xb8] sm:$0xff]
        %v1116 = vld [vmem:[#allocation3 + $0xc0] sm:$0xff]
        %v1117 = vld [vmem:[#allocation3 + $0xc8] sm:$0xff]
        %v1118 = vld [vmem:[#allocation3 + $0xd0] sm:$0xff]
        %v1119 = vld [vmem:[#allocation3 + $0xd8] sm:$0xff]
        %v1120 = vld [vmem:[#allocation3 + $0xe0] sm:$0xff]
        %v1121 = vld [vmem:[#allocation3 + $0xe8] sm:$0xff]
        %v1122 = vld [vmem:[#allocation3 + $0xf0] sm:$0xff]
        %v1123 = vld [vmem:[#allocation3 + $0xf8] sm:$0xff]
        %v1124 = vld [vmem:[#allocation3 + $0x100] sm:$0xff]
        %v1125 = vld [vmem:[#allocation3 + $0x108] sm:$0xff]
        %v1126 = vld [vmem:[#allocation3 + $0x110] sm:$0xff]
        %v1127 = vld [vmem:[#allocation3 + $0x118] sm:$0xff]
        %v1128 = vld [vmem:[#allocation3 + $0x120] sm:$0xff]
        %v1129 = vld [vmem:[#allocation3 + $0x128] sm:$0xff]
        %v1130 = vld [vmem:[#allocation3 + $0x130] sm:$0xff]
        %v1131 = vld [vmem:[#allocation3 + $0x138] sm:$0xff]
        %v1132 = vld [vmem:[#allocation3 + $0x140] sm:$0xff]
        %v1133 = vld [vmem:[#allocation3 + $0x148] sm:$0xff]
        %v1134 = vld [vmem:[#allocation3 + $0x150] sm:$0xff]
        %v1135 = vld [vmem:[#allocation3 + $0x158] sm:$0xff]
        %v1136 = vld [vmem:[#allocation3 + $0x160] sm:$0xff]
        %v1137 = vld [vmem:[#allocation7] sm:$0xf]
        %v1138 = vld [vmem:[#allocation7 + $0x4] sm:$0xf]
        %v1139 = vld [vmem:[#allocation7 + $0x8] sm:$0xf]
        %v1140 = vld [vmem:[#allocation7 + $0xc] sm:$0xf]
        %v1141 = vld [vmem:[#allocation7 + $0x10] sm:$0xf]
        %v1142 = vld [vmem:[#allocation7 + $0x14] sm:$0xf]
        %v1143 = vld [vmem:[#allocation7 + $0x18] sm:$0xf]
        %v1144 = vld [vmem:[#allocation7 + $0x1c] sm:$0xf]
        %v1145 = vld [vmem:[#allocation7 + $0x20] sm:$0xf]
        %v1146 = vld [vmem:[#allocation7 + $0x24] sm:$0xf]
        %v1147 = vld [vmem:[#allocation7 + $0x28] sm:$0xf]
        %v1148 = vld [vmem:[#allocation7 + $0x2c] sm:$0xf]
        %v1149 = vld [vmem:[#allocation7 + $0x30] sm:$0xf]
        %v1150 = vld [vmem:[#allocation7 + $0x34] sm:$0xf]
        %v1151 = vld [vmem:[#allocation7 + $0x38] sm:$0xf]
        %v1152 = vld [vmem:[#allocation7 + $0x3c] sm:$0xf]
        %v1153 = vld [vmem:[#allocation7 + $0x40] sm:$0xf]
        %v1154 = vld [vmem:[#allocation7 + $0x44] sm:$0xf]
        %v1155 = vld [vmem:[#allocation7 + $0x48] sm:$0xf]
        %v1156 = vld [vmem:[#allocation7 + $0x4c] sm:$0xf]
        %v1157 = vld [vmem:[#allocation7 + $0x50] sm:$0xf]
        %v1158 = vld [vmem:[#allocation7 + $0x54] sm:$0xf]
        %v1159 = vld [vmem:[#allocation7 + $0x58] sm:$0xf]
        %v1160 = vld [vmem:[#allocation7 + $0x5c] sm:$0xf]
        %v1161 = vld [vmem:[#allocation7 + $0x60] sm:$0xf]
        %v1162 = vld [vmem:[#allocation7 + $0x64] sm:$0xf]
        %v1163 = vld [vmem:[#allocation7 + $0x68] sm:$0xf]
        %v1164 = vld [vmem:[#allocation7 + $0x6c] sm:$0xf]
        %v1165 = vld [vmem:[#allocation7 + $0x70] sm:$0xf]
        %v1166 = vld [vmem:[#allocation7 + $0x74] sm:$0xf]
        %v1167 = vld [vmem:[#allocation7 + $0x78] sm:$0xf]
        %v1168 = vld [vmem:[#allocation7 + $0x7c] sm:$0xf]
        %v1169 = vld [vmem:[#allocation7 + $0x80] sm:$0xf]
        %v1170 = vld [vmem:[#allocation7 + $0x84] sm:$0xf]
        %v1171 = vld [vmem:[#allocation7 + $0x88] sm:$0xf]
        %v1172 = vld [vmem:[#allocation7 + $0x8c] sm:$0xf]
        %v1173 = vld [vmem:[#allocation7 + $0x90] sm:$0xf]
        %v1174 = vld [vmem:[#allocation7 + $0x94] sm:$0xf]
        %v1175 = vld [vmem:[#allocation7 + $0x98] sm:$0xf]
        %v1176 = vld [vmem:[#allocation7 + $0x9c] sm:$0xf]
        %v1177 = vld [vmem:[#allocation7 + $0xa0] sm:$0xf]
        %v1178 = vld [vmem:[#allocation7 + $0xa4] sm:$0xf]
        %v1179 = vld [vmem:[#allocation7 + $0xa8] sm:$0xf]
        %v1180 = vld [vmem:[#allocation7 + $0xac] sm:$0xf]
        %v1181 = vld [vmem:[#allocation7 + $0xb0] sm:$0xf]
        %v1182 = vld [vmem:[#allocation7 + $0xb4] sm:$0xf]
        %v1183 = vld [vmem:[#allocation7 + $0xb8] sm:$0xf]
        %v1184 = vld [vmem:[#allocation7 + $0xbc] sm:$0xf]
        %v1185 = vld [vmem:[#allocation7 + $0xc0] sm:$0xf]
        %v1186 = vld [vmem:[#allocation7 + $0xc4] sm:$0xf]
        %v1187 = vld [vmem:[#allocation7 + $0xc8] sm:$0xf]
        %v1188 = vld [vmem:[#allocation7 + $0xcc] sm:$0xf]
        %v1189 = vld [vmem:[#allocation7 + $0xd0] sm:$0xf]
        %v1190 = vld [vmem:[#allocation7 + $0xd4] sm:$0xf]
        %v1191 = vld [vmem:[#allocation7 + $0xd8] sm:$0xf]
        %v1192 = vld [vmem:[#allocation7 + $0xdc] sm:$0xf]
        %v1193 = vld [vmem:[#allocation7 + $0xe0] sm:$0xf]
        %v1194 = vld [vmem:[#allocation7 + $0xe4] sm:$0xf]
        %v1195 = vld [vmem:[#allocation7 + $0xe8] sm:$0xf]
        %v1196 = vld [vmem:[#allocation7 + $0xec] sm:$0xf]
        %v1197 = vld [vmem:[#allocation7 + $0xf0] sm:$0xf]
        %v1198 = vld [vmem:[#allocation7 + $0xf4] sm:$0xf]
        %v1199 = vld [vmem:[#allocation7 + $0xf8] sm:$0xf]
        %v1200 = vld [vmem:[#allocation7 + $0xfc] sm:$0xf]
        %v1201 = vld [vmem:[#allocation7 + $0x100] sm:$0xf]
        %v1202 = vld [vmem:[#allocation7 + $0x104] sm:$0xf]
        %v1203 = vld [vmem:[#allocation7 + $0x108] sm:$0xf]
        %v1204 = vld [vmem:[#allocation7 + $0x10c] sm:$0xf]
        %v1205 = vld [vmem:[#allocation7 + $0x110] sm:$0xf]
        %v1206 = vld [vmem:[#allocation7 + $0x114] sm:$0xf]
        %v1207 = vld [vmem:[#allocation7 + $0x118] sm:$0xf]
        %v1208 = vld [vmem:[#allocation7 + $0x11c] sm:$0xf]
        %v1209 = vld [vmem:[#allocation7 + $0x120] sm:$0xf]
        %v1210 = vld [vmem:[#allocation7 + $0x124] sm:$0xf]
        %v1211 = vld [vmem:[#allocation7 + $0x128] sm:$0xf]
        %v1212 = vld [vmem:[#allocation7 + $0x12c] sm:$0xf]
        %v1213 = vld [vmem:[#allocation7 + $0x130] sm:$0xf]
        %v1214 = vld [vmem:[#allocation7 + $0x134] sm:$0xf]
        %v1215 = vld [vmem:[#allocation7 + $0x138] sm:$0xf]
        %v1216 = vld [vmem:[#allocation7 + $0x13c] sm:$0xf]
        %v1217 = vld [vmem:[#allocation7 + $0x140] sm:$0xf]
        %v1218 = vld [vmem:[#allocation7 + $0x144] sm:$0xf]
        %v1219 = vld [vmem:[#allocation7 + $0x148] sm:$0xf]
        %v1220 = vld [vmem:[#allocation7 + $0x14c] sm:$0xf]
        %v1221 = vld [vmem:[#allocation7 + $0x150] sm:$0xf]
        %v1222 = vld [vmem:[#allocation7 + $0x154] sm:$0xf]
        %v1223 = vld [vmem:[#allocation7 + $0x158] sm:$0xf]
        %v1224 = vld [vmem:[#allocation7 + $0x15c] sm:$0xf]
        %v1225 = vld [vmem:[#allocation7 + $0x160] sm:$0xf]
        %v1226 = vld [vmem:[#allocation7 + $0x164] sm:$0xf]
        %v1227 = vld [vmem:[#allocation7 + $0x168] sm:$0xf]
        %v1228 = vld [vmem:[#allocation7 + $0x16c] sm:$0xf]
        %v1229 = vld [vmem:[#allocation7 + $0x170] sm:$0xf]
        %v1230 = vld [vmem:[#allocation7 + $0x174] sm:$0xf]
        %v1231 = vld [vmem:[#allocation7 + $0x178] sm:$0xf]
        %v1232 = vld [vmem:[#allocation7 + $0x17c] sm:$0xf]
        %v1233 = vld [vmem:[#allocation7 + $0x180] sm:$0xf]
        %v1234 = vld [vmem:[#allocation7 + $0x184] sm:$0xf]
        %v1235 = vld [vmem:[#allocation7 + $0x188] sm:$0xf]
        %v1236 = vld [vmem:[#allocation7 + $0x18c] sm:$0xf]
        %v1237 = vld [vmem:[#allocation7 + $0x190] sm:$0xf]
        %v1238 = vld [vmem:[#allocation7 + $0x194] sm:$0xf]
        %v1239 = vld [vmem:[#allocation7 + $0x198] sm:$0xf]
        %v1240 = vld [vmem:[#allocation7 + $0x19c] sm:$0xf]
        %v1241 = vld [vmem:[#allocation7 + $0x1a0] sm:$0xf]
        %v1242 = vld [vmem:[#allocation7 + $0x1a4] sm:$0xf]
        %v1243 = vld [vmem:[#allocation7 + $0x1a8] sm:$0xf]
        %v1244 = vld [vmem:[#allocation7 + $0x1ac] sm:$0xf]
        %v1245 = vld [vmem:[#allocation7 + $0x1b0] sm:$0xf]
        %v1246 = vld [vmem:[#allocation7 + $0x1b4] sm:$0xf]
        %v1247 = vld [vmem:[#allocation7 + $0x1b8] sm:$0xf]
        %v1248 = vld [vmem:[#allocation7 + $0x1bc] sm:$0xf]
        %v1249 = vld [vmem:[#allocation7 + $0x1c0] sm:$0xf]
        %v1250 = vld [vmem:[#allocation7 + $0x1c4] sm:$0xf]
        %v1251 = vld [vmem:[#allocation7 + $0x1c8] sm:$0xf]
        %v1252 = vld [vmem:[#allocation7 + $0x1cc] sm:$0xf]
        %v1253 = vld [vmem:[#allocation7 + $0x1d0] sm:$0xf]
        %v1254 = vld [vmem:[#allocation7 + $0x1d4] sm:$0xf]
        %v1255 = vld [vmem:[#allocation7 + $0x1d8] sm:$0xf]
        %v1256 = vld [vmem:[#allocation7 + $0x1dc] sm:$0xf]
        %v1257 = vld [vmem:[#allocation7 + $0x1e0] sm:$0xf]
        %v1258 = vld [vmem:[#allocation7 + $0x1e4] sm:$0xf]
        %v1259 = vld [vmem:[#allocation7 + $0x1e8] sm:$0xf]
        %v1260 = vld [vmem:[#allocation7 + $0x1ec] sm:$0xf]
        %v1261 = vld [vmem:[#allocation7 + $0x1f0] sm:$0xf]
        %v1262 = vld [vmem:[#allocation7 + $0x1f4] sm:$0xf]
        %v1263 = vld [vmem:[#allocation7 + $0x1f8] sm:$0xf]
        %v1264 = vld [vmem:[#allocation7 + $0x1fc] sm:$0xf]
        %v1265 = vld [vmem:[#allocation7 + $0x200] sm:$0xf]
        %v1266 = vld [vmem:[#allocation7 + $0x204] sm:$0xf]
        %v1267 = vld [vmem:[#allocation7 + $0x208] sm:$0xf]
        %v1268 = vld [vmem:[#allocation7 + $0x20c] sm:$0xf]
        %v1269 = vld [vmem:[#allocation7 + $0x210] sm:$0xf]
        %v1270 = vld [vmem:[#allocation7 + $0x214] sm:$0xf]
        %v1271 = vld [vmem:[#allocation7 + $0x218] sm:$0xf]
        %v1272 = vld [vmem:[#allocation7 + $0x21c] sm:$0xf]
        %v1273 = vld [vmem:[#allocation7 + $0x220] sm:$0xf]
        %v1274 = vld [vmem:[#allocation7 + $0x224] sm:$0xf]
        %v1275 = vld [vmem:[#allocation7 + $0x228] sm:$0xf]
        %v1276 = vld [vmem:[#allocation7 + $0x22c] sm:$0xf]
        %v1277 = vld [vmem:[#allocation7 + $0x230] sm:$0xf]
        %v1278 = vld [vmem:[#allocation7 + $0x234] sm:$0xf]
        %v1279 = vld [vmem:[#allocation7 + $0x238] sm:$0xf]
        %v1280 = vld [vmem:[#allocation7 + $0x23c] sm:$0xf]
        %v1425 = vunpack.c.l.b16 %v1137
        %v1426 = vunpack.c.l.b16 %v1138
        %v1427 = vunpack.c.l.b16 %v1139
        %v1428 = vunpack.c.l.b16 %v1140
        %v1429 = vunpack.c.l.b16 %v1141
        %v1430 = vunpack.c.l.b16 %v1142
        %v1431 = vunpack.c.l.b16 %v1143
        %v1432 = vunpack.c.l.b16 %v1144
        %v1433 = vunpack.c.l.b16 %v1145
        %v1434 = vunpack.c.l.b16 %v1146
        %v1435 = vunpack.c.l.b16 %v1147
        %v1436 = vunpack.c.l.b16 %v1148
        %v1437 = vunpack.c.l.b16 %v1149
        %v1438 = vunpack.c.l.b16 %v1150
        %v1439 = vunpack.c.l.b16 %v1151
        %v1440 = vunpack.c.l.b16 %v1152
        %v1441 = vunpack.c.l.b16 %v1153
        %v1442 = vunpack.c.l.b16 %v1154
        %v1443 = vunpack.c.l.b16 %v1155
        %v1444 = vunpack.c.l.b16 %v1156
        %v1445 = vunpack.c.l.b16 %v1157
        %v1446 = vunpack.c.l.b16 %v1158
        %v1447 = vunpack.c.l.b16 %v1159
        %v1448 = vunpack.c.l.b16 %v1160
        %v1449 = vunpack.c.l.b16 %v1161
        %v1450 = vunpack.c.l.b16 %v1162
        %v1451 = vunpack.c.l.b16 %v1163
        %v1452 = vunpack.c.l.b16 %v1164
        %v1453 = vunpack.c.l.b16 %v1165
        %v1454 = vunpack.c.l.b16 %v1166
        %v1455 = vunpack.c.l.b16 %v1167
        %v1456 = vunpack.c.l.b16 %v1168
        %v1457 = vunpack.c.l.b16 %v1169
        %v1458 = vunpack.c.l.b16 %v1170
        %v1459 = vunpack.c.l.b16 %v1171
        %v1460 = vunpack.c.l.b16 %v1172
        %v1461 = vunpack.c.l.b16 %v1173
        %v1462 = vunpack.c.l.b16 %v1174
        %v1463 = vunpack.c.l.b16 %v1175
        %v1464 = vunpack.c.l.b16 %v1176
        %v1465 = vunpack.c.l.b16 %v1177
        %v1466 = vunpack.c.l.b16 %v1178
        %v1467 = vunpack.c.l.b16 %v1179
        %v1468 = vunpack.c.l.b16 %v1180
        %v1469 = vunpack.c.l.b16 %v1181
        %v1470 = vunpack.c.l.b16 %v1182
        %v1471 = vunpack.c.l.b16 %v1183
        %v1472 = vunpack.c.l.b16 %v1184
        %v1473 = vunpack.c.l.b16 %v1185
        %v1474 = vunpack.c.l.b16 %v1186
        %v1475 = vunpack.c.l.b16 %v1187
        %v1476 = vunpack.c.l.b16 %v1188
        %v1477 = vunpack.c.l.b16 %v1189
        %v1478 = vunpack.c.l.b16 %v1190
        %v1479 = vunpack.c.l.b16 %v1191
        %v1480 = vunpack.c.l.b16 %v1192
        %v1481 = vunpack.c.l.b16 %v1193
        %v1482 = vunpack.c.l.b16 %v1194
        %v1483 = vunpack.c.l.b16 %v1195
        %v1484 = vunpack.c.l.b16 %v1196
        %v1485 = vunpack.c.l.b16 %v1197
        %v1486 = vunpack.c.l.b16 %v1198
        %v1487 = vunpack.c.l.b16 %v1199
        %v1488 = vunpack.c.l.b16 %v1200
        %v1489 = vunpack.c.l.b16 %v1201
        %v1490 = vunpack.c.l.b16 %v1202
        %v1491 = vunpack.c.l.b16 %v1203
        %v1492 = vunpack.c.l.b16 %v1204
        %v1493 = vunpack.c.l.b16 %v1205
        %v1494 = vunpack.c.l.b16 %v1206
        %v1495 = vunpack.c.l.b16 %v1207
        %v1496 = vunpack.c.l.b16 %v1208
        %v1497 = vunpack.c.l.b16 %v1209
        %v1498 = vunpack.c.l.b16 %v1210
        %v1499 = vunpack.c.l.b16 %v1211
        %v1500 = vunpack.c.l.b16 %v1212
        %v1501 = vunpack.c.l.b16 %v1213
        %v1502 = vunpack.c.l.b16 %v1214
        %v1503 = vunpack.c.l.b16 %v1215
        %v1504 = vunpack.c.l.b16 %v1216
        %v1505 = vunpack.c.l.b16 %v1217
        %v1506 = vunpack.c.l.b16 %v1218
        %v1507 = vunpack.c.l.b16 %v1219
        %v1508 = vunpack.c.l.b16 %v1220
        %v1509 = vunpack.c.l.b16 %v1221
        %v1510 = vunpack.c.l.b16 %v1222
        %v1511 = vunpack.c.l.b16 %v1223
        %v1512 = vunpack.c.l.b16 %v1224
        %v1513 = vunpack.c.l.b16 %v1225
        %v1514 = vunpack.c.l.b16 %v1226
        %v1515 = vunpack.c.l.b16 %v1227
        %v1516 = vunpack.c.l.b16 %v1228
        %v1517 = vunpack.c.l.b16 %v1229
        %v1518 = vunpack.c.l.b16 %v1230
        %v1519 = vunpack.c.l.b16 %v1231
        %v1520 = vunpack.c.l.b16 %v1232
        %v1521 = vunpack.c.l.b16 %v1233
        %v1522 = vunpack.c.l.b16 %v1234
        %v1523 = vunpack.c.l.b16 %v1235
        %v1524 = vunpack.c.l.b16 %v1236
        %v1525 = vunpack.c.l.b16 %v1237
        %v1526 = vunpack.c.l.b16 %v1238
        %v1527 = vunpack.c.l.b16 %v1239
        %v1528 = vunpack.c.l.b16 %v1240
        %v1529 = vunpack.c.l.b16 %v1241
        %v1530 = vunpack.c.l.b16 %v1242
        %v1531 = vunpack.c.l.b16 %v1243
        %v1532 = vunpack.c.l.b16 %v1244
        %v1533 = vunpack.c.l.b16 %v1245
        %v1534 = vunpack.c.l.b16 %v1246
        %v1535 = vunpack.c.l.b16 %v1247
        %v1536 = vunpack.c.l.b16 %v1248
        %v1537 = vunpack.c.l.b16 %v1249
        %v1538 = vunpack.c.l.b16 %v1250
        %v1539 = vunpack.c.l.b16 %v1251
        %v1540 = vunpack.c.l.b16 %v1252
        %v1541 = vunpack.c.l.b16 %v1253
        %v1542 = vunpack.c.l.b16 %v1254
        %v1543 = vunpack.c.l.b16 %v1255
        %v1544 = vunpack.c.l.b16 %v1256
        %v1545 = vunpack.c.l.b16 %v1257
        %v1546 = vunpack.c.l.b16 %v1258
        %v1547 = vunpack.c.l.b16 %v1259
        %v1548 = vunpack.c.l.b16 %v1260
        %v1549 = vunpack.c.l.b16 %v1261
        %v1550 = vunpack.c.l.b16 %v1262
        %v1551 = vunpack.c.l.b16 %v1263
        %v1552 = vunpack.c.l.b16 %v1264
        %v1553 = vunpack.c.l.b16 %v1265
        %v1554 = vunpack.c.l.b16 %v1266
        %v1555 = vunpack.c.l.b16 %v1267
        %v1556 = vunpack.c.l.b16 %v1268
        %v1557 = vunpack.c.l.b16 %v1269
        %v1558 = vunpack.c.l.b16 %v1270
        %v1559 = vunpack.c.l.b16 %v1271
        %v1560 = vunpack.c.l.b16 %v1272
        %v1561 = vunpack.c.l.b16 %v1273
        %v1562 = vunpack.c.l.b16 %v1274
        %v1563 = vunpack.c.l.b16 %v1275
        %v1564 = vunpack.c.l.b16 %v1276
        %v1565 = vunpack.c.l.b16 %v1277
        %v1566 = vunpack.c.l.b16 %v1278
        %v1567 = vunpack.c.l.b16 %v1279
        %v1568 = vunpack.c.l.b16 %v1280
        %v1569 = vpack.c.b16 %v1426, %v1425
        %v1570 = vpack.c.b16 %v1428, %v1427
        %v1571 = vpack.c.b16 %v1430, %v1429
        %v1572 = vpack.c.b16 %v1432, %v1431
        %v1573 = vpack.c.b16 %v1434, %v1433
        %v1574 = vpack.c.b16 %v1436, %v1435
        %v1575 = vpack.c.b16 %v1438, %v1437
        %v1576 = vpack.c.b16 %v1440, %v1439
        %v1577 = vpack.c.b16 %v1442, %v1441
        %v1578 = vpack.c.b16 %v1444, %v1443
        %v1579 = vpack.c.b16 %v1446, %v1445
        %v1580 = vpack.c.b16 %v1448, %v1447
        %v1581 = vpack.c.b16 %v1450, %v1449
        %v1582 = vpack.c.b16 %v1452, %v1451
        %v1583 = vpack.c.b16 %v1454, %v1453
        %v1584 = vpack.c.b16 %v1456, %v1455
        %v1585 = vpack.c.b16 %v1458, %v1457
        %v1586 = vpack.c.b16 %v1460, %v1459
        %v1587 = vpack.c.b16 %v1462, %v1461
        %v1588 = vpack.c.b16 %v1464, %v1463
        %v1589 = vpack.c.b16 %v1466, %v1465
        %v1590 = vpack.c.b16 %v1468, %v1467
        %v1591 = vpack.c.b16 %v1470, %v1469
        %v1592 = vpack.c.b16 %v1472, %v1471
        %v1593 = vpack.c.b16 %v1474, %v1473
        %v1594 = vpack.c.b16 %v1476, %v1475
        %v1595 = vpack.c.b16 %v1478, %v1477
        %v1596 = vpack.c.b16 %v1480, %v1479
        %v1597 = vpack.c.b16 %v1482, %v1481
        %v1598 = vpack.c.b16 %v1484, %v1483
        %v1599 = vpack.c.b16 %v1486, %v1485
        %v1600 = vpack.c.b16 %v1488, %v1487
        %v1601 = vpack.c.b16 %v1490, %v1489
        %v1602 = vpack.c.b16 %v1492, %v1491
        %v1603 = vpack.c.b16 %v1494, %v1493
        %v1604 = vpack.c.b16 %v1496, %v1495
        %v1605 = vpack.c.b16 %v1498, %v1497
        %v1606 = vpack.c.b16 %v1500, %v1499
        %v1607 = vpack.c.b16 %v1502, %v1501
        %v1608 = vpack.c.b16 %v1504, %v1503
        %v1609 = vpack.c.b16 %v1506, %v1505
        %v1610 = vpack.c.b16 %v1508, %v1507
        %v1611 = vpack.c.b16 %v1510, %v1509
        %v1612 = vpack.c.b16 %v1512, %v1511
        %v1613 = vpack.c.b16 %v1514, %v1513
        %v1614 = vpack.c.b16 %v1516, %v1515
        %v1615 = vpack.c.b16 %v1518, %v1517
        %v1616 = vpack.c.b16 %v1520, %v1519
        %v1617 = vpack.c.b16 %v1522, %v1521
        %v1618 = vpack.c.b16 %v1524, %v1523
        %v1619 = vpack.c.b16 %v1526, %v1525
        %v1620 = vpack.c.b16 %v1528, %v1527
        %v1621 = vpack.c.b16 %v1530, %v1529
        %v1622 = vpack.c.b16 %v1532, %v1531
        %v1623 = vpack.c.b16 %v1534, %v1533
        %v1624 = vpack.c.b16 %v1536, %v1535
        %v1625 = vpack.c.b16 %v1538, %v1537
        %v1626 = vpack.c.b16 %v1540, %v1539
        %v1627 = vpack.c.b16 %v1542, %v1541
        %v1628 = vpack.c.b16 %v1544, %v1543
        %v1629 = vpack.c.b16 %v1546, %v1545
        %v1630 = vpack.c.b16 %v1548, %v1547
        %v1631 = vpack.c.b16 %v1550, %v1549
        %v1632 = vpack.c.b16 %v1552, %v1551
        %v1633 = vpack.c.b16 %v1554, %v1553
        %v1634 = vpack.c.b16 %v1556, %v1555
        %v1635 = vpack.c.b16 %v1558, %v1557
        %v1636 = vpack.c.b16 %v1560, %v1559
        %v1637 = vpack.c.b16 %v1562, %v1561
        %v1638 = vpack.c.b16 %v1564, %v1563
        %v1639 = vpack.c.b16 %v1566, %v1565
        %v1640 = vpack.c.b16 %v1568, %v1567
        %1713 = vmatprep.subr.bf16.mxu0 0
        %1714 = vmatpush1.bf16.msra.mxu0 %v1569
        %1715 = vmatprep.subr.bf16.mxu0 0
        %1716 = vmatpush1.bf16.msra.mxu0 %v1570
        %1717 = vmatprep.subr.bf16.mxu0 0
        %1718 = vmatpush1.bf16.msra.mxu0 %v1571
        %1719 = vmatprep.subr.bf16.mxu0 0
        %1720 = vmatpush1.bf16.msra.mxu0 %v1572
        %1721 = vmatprep.subr.bf16.mxu0 0
        %1722 = vmatpush1.bf16.msra.mxu0 %v1573
        %1723 = vmatprep.subr.bf16.mxu0 0
        %1724 = vmatpush1.bf16.msra.mxu0 %v1574
        %1725 = vmatprep.subr.bf16.mxu0 0
        %1726 = vmatpush1.bf16.msra.mxu0 %v1575
        %1727 = vmatprep.subr.bf16.mxu0 0
        %1728 = vmatpush1.bf16.msra.mxu0 %v1576
        %1729 = vmatprep.subr.bf16.mxu0 0
        %1730 = vmatpush1.bf16.msra.mxu0 %v1577
        %1731 = vmatprep.subr.bf16.mxu0 0
        %1732 = vmatpush1.bf16.msra.mxu0 %v1578
        %1733 = vmatprep.subr.bf16.mxu0 0
        %1734 = vmatpush1.bf16.msra.mxu0 %v1579
        %1735 = vmatprep.subr.bf16.mxu0 0
        %1736 = vmatpush1.bf16.msra.mxu0 %v1580
        %1737 = vmatprep.subr.bf16.mxu0 0
        %1738 = vmatpush1.bf16.msra.mxu0 %v1581
        %1739 = vmatprep.subr.bf16.mxu0 0
        %1740 = vmatpush1.bf16.msra.mxu0 %v1582
        %1741 = vmatprep.subr.bf16.mxu0 0
        %1742 = vmatpush1.bf16.msra.mxu0 %v1583
        %1743 = vmatprep.subr.bf16.mxu0 0
        %1744 = vmatpush1.bf16.msra.mxu0 %v1584
        %1745 = vmatprep.mubr.bf16.mxu0 %v1093
        %1746 = vmatmul.mubr.bf16.gmra.mrb[0].mxu0 %v1092
        %v1747 = vpop.f32.mrb[0].mxu0
        %v1748 = vadd.f32 0.0, %v1747
        %v1749 = vpop.f32.mrb[0].mxu0
        %v1750 = vpop.f32.mrb[0].mxu0
        %v1751 = vadd.f32 0.0, %v1750
        %v1752 = vpop.f32.mrb[0].mxu0
        %1753 = vmatprep.mubr.bf16.mxu0 %v1102
        %1754 = vmatmul.mubr.bf16.gmra.mrb[0].mxu0 %v1101
        %v1755 = vpop.f32.mrb[0].mxu0
        %v1756 = vadd.f32 0.0, %v1755
        %v1757 = vpop.f32.mrb[0].mxu0
        %v1758 = vpop.f32.mrb[0].mxu0
        %v1759 = vadd.f32 0.0, %v1758
        %v1760 = vpop.f32.mrb[0].mxu0
        %1761 = vmatprep.mubr.bf16.mxu0 %v1111
        %1762 = vmatmul.mubr.bf16.gmra.mrb[0].mxu0 %v1110
        %v1763 = vpop.f32.mrb[0].mxu0
        %v1764 = vadd.f32 0.0, %v1763
        %v1765 = vpop.f32.mrb[0].mxu0
        %v1766 = vpop.f32.mrb[0].mxu0
        %v1767 = vadd.f32 0.0, %v1766
        %v1768 = vpop.f32.mrb[0].mxu0
        %1769 = vmatprep.mubr.bf16.mxu0 %v1120
        %1770 = vmatmul.mubr.bf16.gmra.mrb[0].mxu0 %v1119
        %v1771 = vpop.f32.mrb[0].mxu0
        %v1772 = vadd.f32 0.0, %v1771
        %v1773 = vpop.f32.mrb[0].mxu0
        %v1774 = vpop.f32.mrb[0].mxu0
        %v1775 = vadd.f32 0.0, %v1774
        %v1776 = vpop.f32.mrb[0].mxu0
        %1777 = vmatprep.mubr.bf16.mxu0 %v1129
        %1778 = vmatmul.mubr.bf16.gmra.mrb[0].mxu0 %v1128
        %v1779 = vpop.f32.mrb[0].mxu0
        %v1780 = vadd.f32 0.0, %v1779
        %v1781 = vpop.f32.mrb[0].mxu0
        %v1782 = vpop.f32.mrb[0].mxu0
        %v1783 = vadd.f32 0.0, %v1782
        %v1784 = vpop.f32.mrb[0].mxu0
        %1785 = vdwg.mxu0
        %1786 = vmatprep.subr.bf16.mxu0 0
        %1787 = vmatpush1.bf16.msra.mxu0 %v1585
        %1788 = vmatprep.subr.bf16.mxu0 0
        %1789 = vmatpush1.bf16.msra.mxu0 %v1586
        %1790 = vmatprep.subr.bf16.mxu0 0
        %1791 = vmatpush1.bf16.msra.mxu0 %v1587
        %1792 = vmatprep.subr.bf16.mxu0 0
        %1793 = vmatpush1.bf16.msra.mxu0 %v1588
        %1794 = vmatprep.subr.bf16.mxu0 0
        %1795 = vmatpush1.bf16.msra.mxu0 %v1589
        %1796 = vmatprep.subr.bf16.mxu0 0
        %1797 = vmatpush1.bf16.msra.mxu0 %v1590
        %1798 = vmatprep.subr.bf16.mxu0 0
        %1799 = vmatpush1.bf16.msra.mxu0 %v1591
        %1800 = vmatprep.subr.bf16.mxu0 0
        %1801 = vmatpush1.bf16.msra.mxu0 %v1592
        %1802 = vmatprep.subr.bf16.mxu0 0
        %1803 = vmatpush1.bf16.msra.mxu0 %v1593
        %1804 = vmatprep.subr.bf16.mxu0 0
        %1805 = vmatpush1.bf16.msra.mxu0 %v1594
        %1806 = vmatprep.subr.bf16.mxu0 0
        %1807 = vmatpush1.bf16.msra.mxu0 %v1595
        %1808 = vmatprep.subr.bf16.mxu0 0
        %1809 = vmatpush1.bf16.msra.mxu0 %v1596
        %1810 = vmatprep.subr.bf16.mxu0 0
        %1811 = vmatpush1.bf16.msra.mxu0 %v1597
        %1812 = vmatprep.subr.bf16.mxu0 0
        %1813 = vmatpush1.bf16.msra.mxu0 %v1598
        %1814 = vmatprep.subr.bf16.mxu0 0
        %1815 = vmatpush1.bf16.msra.mxu0 %v1599
        %1816 = vmatprep.subr.bf16.mxu0 0
        %1817 = vmatpush1.bf16.msra.mxu0 %v1600
        %1818 = vmatprep.mubr.bf16.mxu0 %v1095
        %1819 = vmatmul.mubr.bf16.gmra.mrb[0].mxu0 %v1094
        %v1820 = vpop.f32.mrb[0].mxu0
        %v1821 = vadd.f32 %v1748, %v1820
        %v1822 = vpop.f32.mrb[0].mxu0
        %v1823 = vpop.f32.mrb[0].mxu0
        %v1824 = vadd.f32 %v1751, %v1823
        %v1825 = vpop.f32.mrb[0].mxu0
        %1826 = vmatprep.mubr.bf16.mxu0 %v1104
        %1827 = vmatmul.mubr.bf16.gmra.mrb[0].mxu0 %v1103
        %v1828 = vpop.f32.mrb[0].mxu0
        %v1829 = vadd.f32 %v1756, %v1828
        %v1830 = vpop.f32.mrb[0].mxu0
        %v1831 = vpop.f32.mrb[0].mxu0
        %v1832 = vadd.f32 %v1759, %v1831
        %v1833 = vpop.f32.mrb[0].mxu0
        %1834 = vmatprep.mubr.bf16.mxu0 %v1113
        %1835 = vmatmul.mubr.bf16.gmra.mrb[0].mxu0 %v1112
        %v1836 = vpop.f32.mrb[0].mxu0
        %v1837 = vadd.f32 %v1764, %v1836
        %v1838 = vpop.f32.mrb[0].mxu0
        %v1839 = vpop.f32.mrb[0].mxu0
        %v1840 = vadd.f32 %v1767, %v1839
        %v1841 = vpop.f32.mrb[0].mxu0
        %1842 = vmatprep.mubr.bf16.mxu0 %v1122
        %1843 = vmatmul.mubr.bf16.gmra.mrb[0].mxu0 %v1121
        %v1844 = vpop.f32.mrb[0].mxu0
        %v1845 = vadd.f32 %v1772, %v1844
        %v1846 = vpop.f32.mrb[0].mxu0
        %v1847 = vpop.f32.mrb[0].mxu0
        %v1848 = vadd.f32 %v1775, %v1847
        %v1849 = vpop.f32.mrb[0].mxu0
        %1850 = vmatprep.mubr.bf16.mxu0 %v1131
        %1851 = vmatmul.mubr.bf16.gmra.mrb[0].mxu0 %v1130
        %v1852 = vpop.f32.mrb[0].mxu0
        %v1853 = vadd.f32 %v1780, %v1852
        %v1854 = vpop.f32.mrb[0].mxu0
        %v1855 = vpop.f32.mrb[0].mxu0
        %v1856 = vadd.f32 %v1783, %v1855
        %v1857 = vpop.f32.mrb[0].mxu0
        %1858 = vdwg.mxu0
        %1859 = vmatprep.subr.bf16.mxu0 0
        %1860 = vmatpush1.bf16.msra.mxu0 %v1601
        %1861 = vmatprep.subr.bf16.mxu0 0
        %1862 = vmatpush1.bf16.msra.mxu0 %v1602
        %1863 = vmatprep.subr.bf16.mxu0 0
        %1864 = vmatpush1.bf16.msra.mxu0 %v1603
        %1865 = vmatprep.subr.bf16.mxu0 0
        %1866 = vmatpush1.bf16.msra.mxu0 %v1604
        %1867 = vmatprep.subr.bf16.mxu0 0
        %1868 = vmatpush1.bf16.msra.mxu0 %v1605
        %1869 = vmatprep.subr.bf16.mxu0 0
        %1870 = vmatpush1.bf16.msra.mxu0 %v1606
        %1871 = vmatprep.subr.bf16.mxu0 0
        %1872 = vmatpush1.bf16.msra.mxu0 %v1607
        %1873 = vmatprep.subr.bf16.mxu0 0
        %1874 = vmatpush1.bf16.msra.mxu0 %v1608
        %1875 = vmatprep.subr.bf16.mxu0 0
        %1876 = vmatpush1.bf16.msra.mxu0 %v1609
        %1877 = vmatprep.subr.bf16.mxu0 0
        %1878 = vmatpush1.bf16.msra.mxu0 %v1610
        %1879 = vmatprep.subr.bf16.mxu0 0
        %1880 = vmatpush1.bf16.msra.mxu0 %v1611
        %1881 = vmatprep.subr.bf16.mxu0 0
        %1882 = vmatpush1.bf16.msra.mxu0 %v1612
        %1883 = vmatprep.subr.bf16.mxu0 0
        %1884 = vmatpush1.bf16.msra.mxu0 %v1613
        %1885 = vmatprep.subr.bf16.mxu0 0
        %1886 = vmatpush1.bf16.msra.mxu0 %v1614
        %1887 = vmatprep.subr.bf16.mxu0 0
        %1888 = vmatpush1.bf16.msra.mxu0 %v1615
        %1889 = vmatprep.subr.bf16.mxu0 0
        %1890 = vmatpush1.bf16.msra.mxu0 %v1616
        %1891 = vmatprep.mubr.bf16.mxu0 %v1097
        %1892 = vmatmul.mubr.bf16.gmra.mrb[0].mxu0 %v1096
        %v1893 = vpop.f32.mrb[0].mxu0
        %v1894 = vadd.f32 %v1821, %v1893
        %v1895 = vpop.f32.mrb[0].mxu0
        %v1896 = vpop.f32.mrb[0].mxu0
        %v1897 = vadd.f32 %v1824, %v1896
        %v1898 = vpop.f32.mrb[0].mxu0
        %1899 = vmatprep.mubr.bf16.mxu0 %v1106
        %1900 = vmatmul.mubr.bf16.gmra.mrb[0].mxu0 %v1105
        %v1901 = vpop.f32.mrb[0].mxu0
        %v1902 = vadd.f32 %v1829, %v1901
        %v1903 = vpop.f32.mrb[0].mxu0
        %v1904 = vpop.f32.mrb[0].mxu0
        %v1905 = vadd.f32 %v1832, %v1904
        %v1906 = vpop.f32.mrb[0].mxu0
        %1907 = vmatprep.mubr.bf16.mxu0 %v1115
        %1908 = vmatmul.mubr.bf16.gmra.mrb[0].mxu0 %v1114
        %v1909 = vpop.f32.mrb[0].mxu0
        %v1910 = vadd.f32 %v1837, %v1909
        %v1911 = vpop.f32.mrb[0].mxu0
        %v1912 = vpop.f32.mrb[0].mxu0
        %v1913 = vadd.f32 %v1840, %v1912
        %v1914 = vpop.f32.mrb[0].mxu0
        %1915 = vmatprep.mubr.bf16.mxu0 %v1124
        %1916 = vmatmul.mubr.bf16.gmra.mrb[0].mxu0 %v1123
        %v1917 = vpop.f32.mrb[0].mxu0
        %v1918 = vadd.f32 %v1845, %v1917
        %v1919 = vpop.f32.mrb[0].mxu0
        %v1920 = vpop.f32.mrb[0].mxu0
        %v1921 = vadd.f32 %v1848, %v1920
        %v1922 = vpop.f32.mrb[0].mxu0
        %1923 = vmatprep.mubr.bf16.mxu0 %v1133
        %1924 = vmatmul.mubr.bf16.gmra.mrb[0].mxu0 %v1132
        %v1925 = vpop.f32.mrb[0].mxu0
        %v1926 = vadd.f32 %v1853, %v1925
        %v1927 = vpop.f32.mrb[0].mxu0
        %v1928 = vpop.f32.mrb[0].mxu0
        %v1929 = vadd.f32 %v1856, %v1928
        %v1930 = vpop.f32.mrb[0].mxu0
        %1931 = vdwg.mxu0
        %1932 = vmatprep.subr.bf16.mxu0 0
        %1933 = vmatpush1.bf16.msra.mxu0 %v1617
        %1934 = vmatprep.subr.bf16.mxu0 0
        %1935 = vmatpush1.bf16.msra.mxu0 %v1618
        %1936 = vmatprep.subr.bf16.mxu0 0
        %1937 = vmatpush1.bf16.msra.mxu0 %v1619
        %1938 = vmatprep.subr.bf16.mxu0 0
        %1939 = vmatpush1.bf16.msra.mxu0 %v1620
        %1940 = vmatprep.subr.bf16.mxu0 0
        %1941 = vmatpush1.bf16.msra.mxu0 %v1621
        %1942 = vmatprep.subr.bf16.mxu0 0
        %1943 = vmatpush1.bf16.msra.mxu0 %v1622
        %1944 = vmatprep.subr.bf16.mxu0 0
        %1945 = vmatpush1.bf16.msra.mxu0 %v1623
        %1946 = vmatprep.subr.bf16.mxu0 0
        %1947 = vmatpush1.bf16.msra.mxu0 %v1624
        %1948 = vmatprep.subr.bf16.mxu0 0
        %1949 = vmatpush1.bf16.msra.mxu0 %v1625
        %1950 = vmatprep.subr.bf16.mxu0 0
        %1951 = vmatpush1.bf16.msra.mxu0 %v1626
        %1952 = vmatprep.subr.bf16.mxu0 0
        %1953 = vmatpush1.bf16.msra.mxu0 %v1627
        %1954 = vmatprep.subr.bf16.mxu0 0
        %1955 = vmatpush1.bf16.msra.mxu0 %v1628
        %1956 = vmatprep.subr.bf16.mxu0 0
        %1957 = vmatpush1.bf16.msra.mxu0 %v1629
        %1958 = vmatprep.subr.bf16.mxu0 0
        %1959 = vmatpush1.bf16.msra.mxu0 %v1630
        %1960 = vmatprep.subr.bf16.mxu0 0
        %1961 = vmatpush1.bf16.msra.mxu0 %v1631
        %1962 = vmatprep.subr.bf16.mxu0 0
        %1963 = vmatpush1.bf16.msra.mxu0 %v1632
        %1964 = vmatprep.mubr.bf16.mxu0 %v1099
        %1965 = vmatmul.mubr.bf16.gmra.mrb[0].mxu0 %v1098
        %v1966 = vpop.f32.mrb[0].mxu0
        %v1967 = vadd.f32 %v1894, %v1966
        %v1968 = vpop.f32.mrb[0].mxu0
        %v1969 = vpop.f32.mrb[0].mxu0
        %v1970 = vadd.f32 %v1897, %v1969
        %v1971 = vpop.f32.mrb[0].mxu0
        %1972 = vmatprep.mubr.bf16.mxu0 %v1108
        %1973 = vmatmul.mubr.bf16.gmra.mrb[0].mxu0 %v1107
        %v1974 = vpop.f32.mrb[0].mxu0
        %v1975 = vadd.f32 %v1902, %v1974
        %v1976 = vpop.f32.mrb[0].mxu0
        %v1977 = vpop.f32.mrb[0].mxu0
        %v1978 = vadd.f32 %v1905, %v1977
        %v1979 = vpop.f32.mrb[0].mxu0
        %1980 = vmatprep.mubr.bf16.mxu0 %v1117
        %1981 = vmatmul.mubr.bf16.gmra.mrb[0].mxu0 %v1116
        %v1982 = vpop.f32.mrb[0].mxu0
        %v1983 = vadd.f32 %v1910, %v1982
        %v1984 = vpop.f32.mrb[0].mxu0
        %v1985 = vpop.f32.mrb[0].mxu0
        %v1986 = vadd.f32 %v1913, %v1985
        %v1987 = vpop.f32.mrb[0].mxu0
        %1988 = vmatprep.mubr.bf16.mxu0 %v1126
        %1989 = vmatmul.mubr.bf16.gmra.mrb[0].mxu0 %v1125
        %v1990 = vpop.f32.mrb[0].mxu0
        %v1991 = vadd.f32 %v1918, %v1990
        %v1992 = vpop.f32.mrb[0].mxu0
        %v1993 = vpop.f32.mrb[0].mxu0
        %v1994 = vadd.f32 %v1921, %v1993
        %v1995 = vpop.f32.mrb[0].mxu0
        %1996 = vmatprep.mubr.bf16.mxu0 %v1135
        %1997 = vmatmul.mubr.bf16.gmra.mrb[0].mxu0 %v1134
        %v1998 = vpop.f32.mrb[0].mxu0
        %v1999 = vadd.f32 %v1926, %v1998
        %v2000 = vpop.f32.mrb[0].mxu0
        %v2001 = vpop.f32.mrb[0].mxu0
        %v2002 = vadd.f32 %v1929, %v2001
        %v2003 = vpop.f32.mrb[0].mxu0
        %2004 = vdwg.mxu0
        %2005 = vmatprep.subr.bf16.mxu0 0
        %2006 = vmatpush1.bf16.msra.mxu0 %v1633
        %2007 = vmatprep.subr.bf16.mxu0 0
        %2008 = vmatpush1.bf16.msra.mxu0 %v1634
        %2009 = vmatprep.subr.bf16.mxu0 0
        %2010 = vmatpush1.bf16.msra.mxu0 %v1635
        %2011 = vmatprep.subr.bf16.mxu0 0
        %2012 = vmatpush1.bf16.msra.mxu0 %v1636
        %2013 = vmatprep.subr.bf16.mxu0 0
        %2014 = vmatpush1.bf16.msra.mxu0 %v1637
        %2015 = vmatprep.subr.bf16.mxu0 0
        %2016 = vmatpush1.bf16.msra.mxu0 %v1638
        %2017 = vmatprep.subr.bf16.mxu0 0
        %2018 = vmatpush1.bf16.msra.mxu0 %v1639
        %2019 = vmatprep.subr.bf16.mxu0 0
        %2020 = vmatpush1.bf16.msra.mxu0 %v1640
        %2021 = vmatprep.subr.bf16.mxu0 0
        %2022 = vmatpush1.bf16.msra.mxu0 0
        %2023 = vmatprep.subr.bf16.mxu0 0
        %2024 = vmatpush1.bf16.msra.mxu0 0
        %2025 = vmatprep.subr.bf16.mxu0 0
        %2026 = vmatpush1.bf16.msra.mxu0 0
        %2027 = vmatprep.subr.bf16.mxu0 0
        %2028 = vmatpush1.bf16.msra.mxu0 0
        %2029 = vmatprep.subr.bf16.mxu0 0
        %2030 = vmatpush1.bf16.msra.mxu0 0
        %2031 = vmatprep.subr.bf16.mxu0 0
        %2032 = vmatpush1.bf16.msra.mxu0 0
        %2033 = vmatprep.subr.bf16.mxu0 0
        %2034 = vmatpush1.bf16.msra.mxu0 0
        %2035 = vmatprep.subr.bf16.mxu0 0
        %2036 = vmatpush1.bf16.msra.mxu0 0
        %2037 = vmatprep.mubr.bf16.mxu0 0
        %2038 = vmatmul.mubr.bf16.gmra.mrb[0].mxu0 %v1100
        %v2039 = vpop.f32.mrb[0].mxu0
        %v2040 = vadd.f32 %v1967, %v2039
        %v2041 = vpop.f32.mrb[0].mxu0
        %v2042 = vpop.f32.mrb[0].mxu0
        %v2043 = vadd.f32 %v1970, %v2042
        %v2044 = vpop.f32.mrb[0].mxu0
        %2045 = vmatprep.mubr.bf16.mxu0 0
        %2046 = vmatmul.mubr.bf16.gmra.mrb[0].mxu0 %v1109
        %v2047 = vpop.f32.mrb[0].mxu0
        %v2048 = vadd.f32 %v1975, %v2047
        %v2049 = vpop.f32.mrb[0].mxu0
        %v2050 = vpop.f32.mrb[0].mxu0
        %v2051 = vadd.f32 %v1978, %v2050
        %v2052 = vpop.f32.mrb[0].mxu0
        %2053 = vmatprep.mubr.bf16.mxu0 0
        %2054 = vmatmul.mubr.bf16.gmra.mrb[0].mxu0 %v1118
        %v2055 = vpop.f32.mrb[0].mxu0
        %v2056 = vadd.f32 %v1983, %v2055
        %v2057 = vpop.f32.mrb[0].mxu0
        %v2058 = vpop.f32.mrb[0].mxu0
        %v2059 = vadd.f32 %v1986, %v2058
        %v2060 = vpop.f32.mrb[0].mxu0
        %2061 = vmatprep.mubr.bf16.mxu0 0
        %2062 = vmatmul.mubr.bf16.gmra.mrb[0].mxu0 %v1127
        %v2063 = vpop.f32.mrb[0].mxu0
        %v2064 = vadd.f32 %v1991, %v2063
        %v2065 = vpop.f32.mrb[0].mxu0
        %v2066 = vpop.f32.mrb[0].mxu0
        %v2067 = vadd.f32 %v1994, %v2066
        %v2068 = vpop.f32.mrb[0].mxu0
        %2069 = vmatprep.mubr.bf16.mxu0 0
        %2070 = vmatmul.mubr.bf16.gmra.mrb[0].mxu0 %v1136
        %v2071 = vpop.f32.mrb[0].mxu0
        %v2072 = vadd.f32 %v1999, %v2071
        %v2073 = vpop.f32.mrb[0].mxu0
        %v2074 = vpop.f32.mrb[0].mxu0
        %v2075 = vadd.f32 %v2002, %v2074
        %v2076 = vpop.f32.mrb[0].mxu0
        %2077 = vdwg.mxu0
        %v2078 = vmax.f32 %v2040, 0.0
        %v2079 = vmax.f32 %v2043, 0.0
        %v2080 = vmax.f32 %v2048, 0.0
        %v2081 = vmax.f32 %v2051, 0.0
        %v2082 = vmax.f32 %v2056, 0.0
        %v2083 = vmax.f32 %v2059, 0.0
        %v2084 = vmax.f32 %v2064, 0.0
        %v2085 = vmax.f32 %v2067, 0.0
        %v2086 = vmax.f32 %v2072, 0.0
        %v2087 = vmax.f32 %v2075, 0.0
        %v2088 = vsel %vm434, 1, 0
        %v2089 = vsel %vm435, 1, 0
        %v2090 = vsel %vm436, 1, 0
        %v2091 = vsel %vm437, 1, 0
        %v2092 = vsel %vm438, 1, 0
        %v2093 = vsel %vm439, 1, 0
        %v2094 = vsel %vm440, 1, 0
        %v2095 = vsel %vm441, 1, 0
        %v2096 = vsel %vm442, 1, 0
        %v2097 = vsel %vm443, 1, 0
        %vm2098 = vcmp.eq.s32.totalorder %v2088, 1
        %vm2099 = vcmp.eq.s32.totalorder %v2089, 1
        %vm2100 = vcmp.eq.s32.totalorder %v2090, 1
        %vm2101 = vcmp.eq.s32.totalorder %v2091, 1
        %vm2102 = vcmp.eq.s32.totalorder %v2092, 1
        %vm2103 = vcmp.eq.s32.totalorder %v2093, 1
        %vm2104 = vcmp.eq.s32.totalorder %v2094, 1
        %vm2105 = vcmp.eq.s32.totalorder %v2095, 1
        %vm2106 = vcmp.eq.s32.totalorder %v2096, 1
        %vm2107 = vcmp.eq.s32.totalorder %v2097, 1
        %v2108 = vsel %vm2098, %v2078, 0.0
        %v2109 = vsel %vm2099, %v2079, 0.0
        %v2110 = vsel %vm2100, %v2080, 0.0
        %v2111 = vsel %vm2101, %v2081, 0.0
        %v2112 = vsel %vm2102, %v2082, 0.0
        %v2113 = vsel %vm2103, %v2083, 0.0
        %v2114 = vsel %vm2104, %v2084, 0.0
        %v2115 = vsel %vm2105, %v2085, 0.0
        %v2116 = vsel %vm2106, %v2086, 0.0
        %v2117 = vsel %vm2107, %v2087, 0.0
        %v2118 = vpack.c.bf16 %v2109, %v2108
        %v2119 = vpack.c.bf16 %v2111, %v2110
        %v2120 = vpack.c.bf16 %v2113, %v2112
        %v2121 = vpack.c.bf16 %v2115, %v2114
        %v2122 = vpack.c.bf16 %v2117, %v2116
        %2123 = vst [vmem:[#allocation2 + $0x8] sm:$0xff] %v2118
        %2124 = vst [vmem:[#allocation2 + $0x10] sm:$0xff] %v2119
        %2125 = vst [vmem:[#allocation2 + $0x18] sm:$0xff] %v2120
        %2126 = vst [vmem:[#allocation2 + $0x20] sm:$0xff] %v2121
        %2127 = vst [vmem:[#allocation2 + $0x28] sm:$0xff] %v2122
        %v2128 = vld [vmem:[#allocation2] sm:$0xfc]
        %v2129 = vld [vmem:[#allocation2 + $0x8] sm:$0xff]
        %v2130 = vld [vmem:[#allocation2 + $0x10] sm:$0xff]
        %v2131 = vld [vmem:[#allocation2 + $0x18] sm:$0xff]
        %v2132 = vld [vmem:[#allocation2 + $0x20] sm:$0xff]
        %v2133 = vld [vmem:[#allocation2 + $0x28] sm:$0x7]
        %v2135 = vshrl.u32 %v2128, 16
        %v2137 = vrot.slane %v2135, 2
        %v2138 = vshll.u32 %v2128, 16
        %v2140 = vrot.slane %v2138, 3
        %v2141 = vor.u32 %v2137, %v2140
        %v2143 = vshrl.u32 %v2129, 16
        %v2145 = vrot.slane %v2143, 2
        %v2146 = vshll.u32 %v2129, 16
        %v2148 = vrot.slane %v2146, 3
        %v2149 = vor.u32 %v2145, %v2148
        %v2150 = vsel %vm805, %v2141, %v2149
        %v2152 = vshrl.u32 %v2130, 16
        %v2154 = vrot.slane %v2152, 2
        %v2155 = vshll.u32 %v2130, 16
        %v2157 = vrot.slane %v2155, 3
        %v2158 = vor.u32 %v2154, %v2157
        %v2159 = vsel %vm805, %v2149, %v2158
        %v2161 = vshrl.u32 %v2131, 16
        %v2163 = vrot.slane %v2161, 2
        %v2164 = vshll.u32 %v2131, 16
        %v2166 = vrot.slane %v2164, 3
        %v2167 = vor.u32 %v2163, %v2166
        %v2168 = vsel %vm805, %v2158, %v2167
        %v2170 = vshrl.u32 %v2132, 16
        %v2172 = vrot.slane %v2170, 2
        %v2173 = vshll.u32 %v2132, 16
        %v2175 = vrot.slane %v2173, 3
        %v2176 = vor.u32 %v2172, %v2175
        %v2177 = vsel %vm805, %v2167, %v2176
        %v2179 = vshrl.u32 %v2133, 16
        %v2181 = vrot.slane %v2179, 2
        %v2182 = vshll.u32 %v2133, 16
        %v2184 = vrot.slane %v2182, 3
        %v2185 = vor.u32 %v2181, %v2184
        %v2186 = vsel %vm805, %v2176, %v2185
        %2192 = vst [vmem:[#allocation3] sm:$0xff] %v2150
        %2193 = vst [vmem:[#allocation3 + $0x48] sm:$0xff] %v2159
        %2194 = vst [vmem:[#allocation3 + $0x90] sm:$0xff] %v2168
        %2195 = vst [vmem:[#allocation3 + $0xd8] sm:$0xff] %v2177
        %2196 = vst [vmem:[#allocation3 + $0x120] sm:$0xff] %v2186
        %v2197 = vld [vmem:[#allocation2] sm:$0xf8]
        %v2198 = vld [vmem:[#allocation2 + $0x8] sm:$0xff]
        %v2199 = vld [vmem:[#allocation2 + $0x10] sm:$0xff]
        %v2200 = vld [vmem:[#allocation2 + $0x18] sm:$0xff]
        %v2201 = vld [vmem:[#allocation2 + $0x20] sm:$0xff]
        %v2202 = vld [vmem:[#allocation2 + $0x28] sm:$0x7]
        %v2209 = vrot.slane %v2197, 3
        %v2210 = vrot.slane %v2198, 3
        %v2211 = vsel %vm744, %v2209, %v2210
        %v2212 = vrot.slane %v2199, 3
        %v2213 = vsel %vm744, %v2210, %v2212
        %v2214 = vrot.slane %v2200, 3
        %v2215 = vsel %vm744, %v2212, %v2214
        %v2216 = vrot.slane %v2201, 3
        %v2217 = vsel %vm744, %v2214, %v2216
        %v2218 = vrot.slane %v2202, 3
        %v2219 = vsel %vm744, %v2216, %v2218
        %2225 = vst [vmem:[#allocation3 + $0x8] sm:$0xff] %v2211
        %2226 = vst [vmem:[#allocation3 + $0x50] sm:$0xff] %v2213
        %2227 = vst [vmem:[#allocation3 + $0x98] sm:$0xff] %v2215
        %2228 = vst [vmem:[#allocation3 + $0xe0] sm:$0xff] %v2217
        %2229 = vst [vmem:[#allocation3 + $0x128] sm:$0xff] %v2219
        %v2230 = vld [vmem:[#allocation2] sm:$0xf8]
        %v2231 = vld [vmem:[#allocation2 + $0x8] sm:$0xff]
        %v2232 = vld [vmem:[#allocation2 + $0x10] sm:$0xff]
        %v2233 = vld [vmem:[#allocation2 + $0x18] sm:$0xff]
        %v2234 = vld [vmem:[#allocation2 + $0x20] sm:$0xff]
        %v2235 = vld [vmem:[#allocation2 + $0x28] sm:$0xf]
        %vm2236 = vsmask.f32 4352
        %v2238 = vshrl.u32 %v2230, 16
        %v2240 = vrot.slane %v2238, 3
        %v2241 = vshll.u32 %v2230, 16
        %v2243 = vrot.slane %v2241, 4
        %v2244 = vor.u32 %v2240, %v2243
        %v2246 = vshrl.u32 %v2231, 16
        %v2248 = vrot.slane %v2246, 3
        %v2249 = vshll.u32 %v2231, 16
        %v2251 = vrot.slane %v2249, 4
        %v2252 = vor.u32 %v2248, %v2251
        %v2253 = vsel %vm2236, %v2244, %v2252
        %v2255 = vshrl.u32 %v2232, 16
        %v2257 = vrot.slane %v2255, 3
        %v2258 = vshll.u32 %v2232, 16
        %v2260 = vrot.slane %v2258, 4
        %v2261 = vor.u32 %v2257, %v2260
        %v2262 = vsel %vm2236, %v2252, %v2261
        %v2264 = vshrl.u32 %v2233, 16
        %v2266 = vrot.slane %v2264, 3
        %v2267 = vshll.u32 %v2233, 16
        %v2269 = vrot.slane %v2267, 4
        %v2270 = vor.u32 %v2266, %v2269
        %v2271 = vsel %vm2236, %v2261, %v2270
        %v2273 = vshrl.u32 %v2234, 16
        %v2275 = vrot.slane %v2273, 3
        %v2276 = vshll.u32 %v2234, 16
        %v2278 = vrot.slane %v2276, 4
        %v2279 = vor.u32 %v2275, %v2278
        %v2280 = vsel %vm2236, %v2270, %v2279
        %v2282 = vshrl.u32 %v2235, 16
        %v2284 = vrot.slane %v2282, 3
        %v2285 = vshll.u32 %v2235, 16
        %v2287 = vrot.slane %v2285, 4
        %v2288 = vor.u32 %v2284, %v2287
        %v2289 = vsel %vm2236, %v2279, %v2288
        %2295 = vst [vmem:[#allocation3 + $0x10] sm:$0xff] %v2253
        %2296 = vst [vmem:[#allocation3 + $0x58] sm:$0xff] %v2262
        %2297 = vst [vmem:[#allocation3 + $0xa0] sm:$0xff] %v2271
        %2298 = vst [vmem:[#allocation3 + $0xe8] sm:$0xff] %v2280
        %2299 = vst [vmem:[#allocation3 + $0x130] sm:$0xff] %v2289
        %v2300 = vld [vmem:[#allocation2] sm:$0x80]
        %v2301 = vld [vmem:[#allocation2 + $0x8] sm:$0xff]
        %v2302 = vld [vmem:[#allocation2 + $0x10] sm:$0xff]
        %v2303 = vld [vmem:[#allocation2 + $0x18] sm:$0xff]
        %v2304 = vld [vmem:[#allocation2 + $0x20] sm:$0xff]
        %v2305 = vld [vmem:[#allocation2 + $0x28] sm:$0xff]
        %vm2306 = vsmask.f32 256
        %v2308 = vshrl.u32 %v2300, 16
        %v2310 = vrot.slane %v2308, 7
        %v2312 = vshrl.u32 %v2301, 16
        %v2314 = vrot.slane %v2312, 7
        %v2315 = vshll.u32 %v2301, 16
        %v2317 = vor.u32 %v2314, %v2315
        %v2318 = vsel %vm2306, %v2310, %v2317
        %v2320 = vshrl.u32 %v2302, 16
        %v2322 = vrot.slane %v2320, 7
        %v2323 = vshll.u32 %v2302, 16
        %v2325 = vor.u32 %v2322, %v2323
        %v2326 = vsel %vm2306, %v2314, %v2325
        %v2328 = vshrl.u32 %v2303, 16
        %v2330 = vrot.slane %v2328, 7
        %v2331 = vshll.u32 %v2303, 16
        %v2333 = vor.u32 %v2330, %v2331
        %v2334 = vsel %vm2306, %v2322, %v2333
        %v2336 = vshrl.u32 %v2304, 16
        %v2338 = vrot.slane %v2336, 7
        %v2339 = vshll.u32 %v2304, 16
        %v2341 = vor.u32 %v2338, %v2339
        %v2342 = vsel %vm2306, %v2330, %v2341
        %v2344 = vshrl.u32 %v2305, 16
        %v2346 = vrot.slane %v2344, 7
        %v2347 = vshll.u32 %v2305, 16
        %v2349 = vor.u32 %v2346, %v2347
        %v2350 = vsel %vm2306, %v2338, %v2349
        %2356 = vst [vmem:[#allocation3 + $0x18] sm:$0xff] %v2318
        %2357 = vst [vmem:[#allocation3 + $0x60] sm:$0xff] %v2326
        %2358 = vst [vmem:[#allocation3 + $0xa8] sm:$0xff] %v2334
        %2359 = vst [vmem:[#allocation3 + $0xf0] sm:$0xff] %v2342
        %2360 = vst [vmem:[#allocation3 + $0x138] sm:$0xff] %v2350
        %v2361 = vld [vmem:[#allocation2 + $0x8] sm:$0xff]
        %v2362 = vld [vmem:[#allocation2 + $0x10] sm:$0xff]
        %v2363 = vld [vmem:[#allocation2 + $0x18] sm:$0xff]
        %v2364 = vld [vmem:[#allocation2 + $0x20] sm:$0xff]
        %v2365 = vld [vmem:[#allocation2 + $0x28] sm:$0xff]
        %2366 = vst [vmem:[#allocation3 + $0x20] sm:$0xff] %v2361
        %2367 = vst [vmem:[#allocation3 + $0x68] sm:$0xff] %v2362
        %2368 = vst [vmem:[#allocation3 + $0xb0] sm:$0xff] %v2363
        %2369 = vst [vmem:[#allocation3 + $0xf8] sm:$0xff] %v2364
        %2370 = vst [vmem:[#allocation3 + $0x140] sm:$0xff] %v2365
        %v2371 = vld [vmem:[#allocation2 + $0x8] sm:$0xff]
        %v2372 = vld [vmem:[#allocation2 + $0x10] sm:$0xff]
        %v2373 = vld [vmem:[#allocation2 + $0x18] sm:$0xff]
        %v2374 = vld [vmem:[#allocation2 + $0x20] sm:$0xff]
        %v2375 = vld [vmem:[#allocation2 + $0x28] sm:$0xff]
        %v2376 = vld [vmem:[#allocation2 + $0x30] sm:$0x1]
        %v2378 = vshrl.u32 %v2371, 16
        %v2380 = vshll.u32 %v2371, 16
        %v2382 = vrot.slane %v2380, 1
        %v2383 = vor.u32 %v2378, %v2382
        %v2385 = vshll.u32 %v2372, 16
        %v2387 = vrot.slane %v2385, 1
        %v2388 = vsel %vm589, %v2383, %v2387
        %v2389 = vshrl.u32 %v2372, 16
        %v2391 = vor.u32 %v2389, %v2387
        %v2393 = vshll.u32 %v2373, 16
        %v2395 = vrot.slane %v2393, 1
        %v2396 = vsel %vm589, %v2391, %v2395
        %v2397 = vshrl.u32 %v2373, 16
        %v2399 = vor.u32 %v2397, %v2395
        %v2401 = vshll.u32 %v2374, 16
        %v2403 = vrot.slane %v2401, 1
        %v2404 = vsel %vm589, %v2399, %v2403
        %v2405 = vshrl.u32 %v2374, 16
        %v2407 = vor.u32 %v2405, %v2403
        %v2409 = vshll.u32 %v2375, 16
        %v2411 = vrot.slane %v2409, 1
        %v2412 = vsel %vm589, %v2407, %v2411
        %v2413 = vshrl.u32 %v2375, 16
        %v2415 = vor.u32 %v2413, %v2411
        %v2417 = vshll.u32 %v2376, 16
        %v2419 = vrot.slane %v2417, 1
        %v2420 = vsel %vm589, %v2415, %v2419
        %2426 = vst [vmem:[#allocation3 + $0x28] sm:$0xff] %v2388
        %2427 = vst [vmem:[#allocation3 + $0x70] sm:$0xff] %v2396
        %2428 = vst [vmem:[#allocation3 + $0xb8] sm:$0xff] %v2404
        %2429 = vst [vmem:[#allocation3 + $0x100] sm:$0xff] %v2412
        %2430 = vst [vmem:[#allocation3 + $0x148] sm:$0xff] %v2420
        %v2431 = vld [vmem:[#allocation2 + $0x8] sm:$0xf0]
        %v2432 = vld [vmem:[#allocation2 + $0x10] sm:$0xff]
        %v2433 = vld [vmem:[#allocation2 + $0x18] sm:$0xff]
        %v2434 = vld [vmem:[#allocation2 + $0x20] sm:$0xff]
        %v2435 = vld [vmem:[#allocation2 + $0x28] sm:$0xff]
        %v2436 = vld [vmem:[#allocation2 + $0x30] sm:$0x1f]
        %vm2437 = vsmask.f32 3328
        %v2439 = vshrl.u32 %v2431, 16
        %v2441 = vrot.slane %v2439, 4
        %v2442 = vshll.u32 %v2431, 16
        %v2444 = vrot.slane %v2442, 5
        %v2445 = vor.u32 %v2441, %v2444
        %v2447 = vshrl.u32 %v2432, 16
        %v2449 = vrot.slane %v2447, 4
        %v2450 = vshll.u32 %v2432, 16
        %v2452 = vrot.slane %v2450, 5
        %v2453 = vor.u32 %v2449, %v2452
        %v2454 = vsel %vm2437, %v2445, %v2453
        %v2456 = vshrl.u32 %v2433, 16
        %v2458 = vrot.slane %v2456, 4
        %v2459 = vshll.u32 %v2433, 16
        %v2461 = vrot.slane %v2459, 5
        %v2462 = vor.u32 %v2458, %v2461
        %v2463 = vsel %vm2437, %v2453, %v2462
        %v2465 = vshrl.u32 %v2434, 16
        %v2467 = vrot.slane %v2465, 4
        %v2468 = vshll.u32 %v2434, 16
        %v2470 = vrot.slane %v2468, 5
        %v2471 = vor.u32 %v2467, %v2470
        %v2472 = vsel %vm2437, %v2462, %v2471
        %v2474 = vshrl.u32 %v2435, 16
        %v2476 = vrot.slane %v2474, 4
        %v2477 = vshll.u32 %v2435, 16
        %v2479 = vrot.slane %v2477, 5
        %v2480 = vor.u32 %v2476, %v2479
        %v2481 = vsel %vm2437, %v2471, %v2480
        %v2483 = vshrl.u32 %v2436, 16
        %v2485 = vrot.slane %v2483, 4
        %v2486 = vshll.u32 %v2436, 16
        %v2488 = vrot.slane %v2486, 5
        %v2489 = vor.u32 %v2485, %v2488
        %v2490 = vsel %vm2437, %v2480, %v2489
        %2496 = vst [vmem:[#allocation3 + $0x30] sm:$0xff] %v2454
        %2497 = vst [vmem:[#allocation3 + $0x78] sm:$0xff] %v2463
        %2498 = vst [vmem:[#allocation3 + $0xc0] sm:$0xff] %v2472
        %2499 = vst [vmem:[#allocation3 + $0x108] sm:$0xff] %v2481
        %2500 = vst [vmem:[#allocation3 + $0x150] sm:$0xff] %v2490
        %v2501 = vld [vmem:[#allocation2 + $0x8] sm:$0xe0]
        %v2502 = vld [vmem:[#allocation2 + $0x10] sm:$0xff]
        %v2503 = vld [vmem:[#allocation2 + $0x18] sm:$0xff]
        %v2504 = vld [vmem:[#allocation2 + $0x20] sm:$0xff]
        %v2505 = vld [vmem:[#allocation2 + $0x28] sm:$0xff]
        %v2506 = vld [vmem:[#allocation2 + $0x30] sm:$0x1f]
        %vm2513 = vcmask 1042432
        %v2514 = vrot.slane %v2501, 5
        %v2515 = vrot.slane %v2502, 5
        %v2516 = vsel %vm2513, %v2514, %v2515
        %v2517 = vrot.slane %v2503, 5
        %v2518 = vsel %vm2513, %v2515, %v2517
        %v2519 = vrot.slane %v2504, 5
        %v2520 = vsel %vm2513, %v2517, %v2519
        %v2521 = vrot.slane %v2505, 5
        %v2522 = vsel %vm2513, %v2519, %v2521
        %v2523 = vrot.slane %v2506, 5
        %v2524 = vsel %vm2513, %v2521, %v2523
        %2530 = vst [vmem:[#allocation3 + $0x38] sm:$0xff] %v2516
        %2531 = vst [vmem:[#allocation3 + $0x80] sm:$0xff] %v2518
        %2532 = vst [vmem:[#allocation3 + $0xc8] sm:$0xff] %v2520
        %2533 = vst [vmem:[#allocation3 + $0x110] sm:$0xff] %v2522
        %2534 = vst [vmem:[#allocation3 + $0x158] sm:$0xff] %v2524
        %v2535 = vld [vmem:[#allocation2 + $0x8] sm:$0xe0]
        %v2536 = vld [vmem:[#allocation2 + $0x10] sm:$0xff]
        %v2537 = vld [vmem:[#allocation2 + $0x18] sm:$0xff]
        %v2538 = vld [vmem:[#allocation2 + $0x20] sm:$0xff]
        %v2539 = vld [vmem:[#allocation2 + $0x28] sm:$0xff]
        %v2540 = vld [vmem:[#allocation2 + $0x30] sm:$0x3f]
        %vm2541 = vsmask.f32 2304
        %v2543 = vshrl.u32 %v2535, 16
        %v2545 = vrot.slane %v2543, 5
        %v2546 = vshll.u32 %v2535, 16
        %v2548 = vrot.slane %v2546, 6
        %v2549 = vor.u32 %v2545, %v2548
        %v2551 = vshrl.u32 %v2536, 16
        %v2553 = vrot.slane %v2551, 5
        %v2554 = vshll.u32 %v2536, 16
        %v2556 = vrot.slane %v2554, 6
        %v2557 = vor.u32 %v2553, %v2556
        %v2558 = vsel %vm2541, %v2549, %v2557
        %v2560 = vshrl.u32 %v2537, 16
        %v2562 = vrot.slane %v2560, 5
        %v2563 = vshll.u32 %v2537, 16
        %v2565 = vrot.slane %v2563, 6
        %v2566 = vor.u32 %v2562, %v2565
        %v2567 = vsel %vm2541, %v2557, %v2566
        %v2569 = vshrl.u32 %v2538, 16
        %v2571 = vrot.slane %v2569, 5
        %v2572 = vshll.u32 %v2538, 16
        %v2574 = vrot.slane %v2572, 6
        %v2575 = vor.u32 %v2571, %v2574
        %v2576 = vsel %vm2541, %v2566, %v2575
        %v2578 = vshrl.u32 %v2539, 16
        %v2580 = vrot.slane %v2578, 5
        %v2581 = vshll.u32 %v2539, 16
        %v2583 = vrot.slane %v2581, 6
        %v2584 = vor.u32 %v2580, %v2583
        %v2585 = vsel %vm2541, %v2575, %v2584
        %v2587 = vshrl.u32 %v2540, 16
        %v2589 = vrot.slane %v2587, 5
        %v2590 = vshll.u32 %v2540, 16
        %v2592 = vrot.slane %v2590, 6
        %v2593 = vor.u32 %v2589, %v2592
        %v2594 = vsel %vm2541, %v2584, %v2593
        %2600 = vst [vmem:[#allocation3 + $0x40] sm:$0xff] %v2558
        %2601 = vst [vmem:[#allocation3 + $0x88] sm:$0xff] %v2567
        %2602 = vst [vmem:[#allocation3 + $0xd0] sm:$0xff] %v2576
        %2603 = vst [vmem:[#allocation3 + $0x118] sm:$0xff] %v2585
        %2604 = vst [vmem:[#allocation3 + $0x160] sm:$0xff] %v2594
        %v2605 = vld [vmem:[#allocation3] sm:$0xff]
        %v2606 = vld [vmem:[#allocation3 + $0x8] sm:$0xff]
        %v2607 = vld [vmem:[#allocation3 + $0x10] sm:$0xff]
        %v2608 = vld [vmem:[#allocation3 + $0x18] sm:$0xff]
        %v2609 = vld [vmem:[#allocation3 + $0x20] sm:$0xff]
        %v2610 = vld [vmem:[#allocation3 + $0x28] sm:$0xff]
        %v2611 = vld [vmem:[#allocation3 + $0x30] sm:$0xff]
        %v2612 = vld [vmem:[#allocation3 + $0x38] sm:$0xff]
        %v2613 = vld [vmem:[#allocation3 + $0x40] sm:$0xff]
        %v2614 = vld [vmem:[#allocation3 + $0x48] sm:$0xff]
        %v2615 = vld [vmem:[#allocation3 + $0x50] sm:$0xff]
        %v2616 = vld [vmem:[#allocation3 + $0x58] sm:$0xff]
        %v2617 = vld [vmem:[#allocation3 + $0x60] sm:$0xff]
        %v2618 = vld [vmem:[#allocation3 + $0x68] sm:$0xff]
        %v2619 = vld [vmem:[#allocation3 + $0x70] sm:$0xff]
        %v2620 = vld [vmem:[#allocation3 + $0x78] sm:$0xff]
        %v2621 = vld [vmem:[#allocation3 + $0x80] sm:$0xff]
        %v2622 = vld [vmem:[#allocation3 + $0x88] sm:$0xff]
        %v2623 = vld [vmem:[#allocation3 + $0x90] sm:$0xff]
        %v2624 = vld [vmem:[#allocation3 + $0x98] sm:$0xff]
        %v2625 = vld [vmem:[#allocation3 + $0xa0] sm:$0xff]
        %v2626 = vld [vmem:[#allocation3 + $0xa8] sm:$0xff]
        %v2627 = vld [vmem:[#allocation3 + $0xb0] sm:$0xff]
        %v2628 = vld [vmem:[#allocation3 + $0xb8] sm:$0xff]
        %v2629 = vld [vmem:[#allocation3 + $0xc0] sm:$0xff]
        %v2630 = vld [vmem:[#allocation3 + $0xc8] sm:$0xff]
        %v2631 = vld [vmem:[#allocation3 + $0xd0] sm:$0xff]
        %v2632 = vld [vmem:[#allocation3 + $0xd8] sm:$0xff]
        %v2633 = vld [vmem:[#allocation3 + $0xe0] sm:$0xff]
        %v2634 = vld [vmem:[#allocation3 + $0xe8] sm:$0xff]
        %v2635 = vld [vmem:[#allocation3 + $0xf0] sm:$0xff]
        %v2636 = vld [vmem:[#allocation3 + $0xf8] sm:$0xff]
        %v2637 = vld [vmem:[#allocation3 + $0x100] sm:$0xff]
        %v2638 = vld [vmem:[#allocation3 + $0x108] sm:$0xff]
        %v2639 = vld [vmem:[#allocation3 + $0x110] sm:$0xff]
        %v2640 = vld [vmem:[#allocation3 + $0x118] sm:$0xff]
        %v2641 = vld [vmem:[#allocation3 + $0x120] sm:$0xff]
        %v2642 = vld [vmem:[#allocation3 + $0x128] sm:$0xff]
        %v2643 = vld [vmem:[#allocation3 + $0x130] sm:$0xff]
        %v2644 = vld [vmem:[#allocation3 + $0x138] sm:$0xff]
        %v2645 = vld [vmem:[#allocation3 + $0x140] sm:$0xff]
        %v2646 = vld [vmem:[#allocation3 + $0x148] sm:$0xff]
        %v2647 = vld [vmem:[#allocation3 + $0x150] sm:$0xff]
        %v2648 = vld [vmem:[#allocation3 + $0x158] sm:$0xff]
        %v2649 = vld [vmem:[#allocation3 + $0x160] sm:$0xff]
        %v2650 = vld [vmem:[#allocation9] sm:$0xf]
        %v2651 = vld [vmem:[#allocation9 + $0x4] sm:$0xf]
        %v2652 = vld [vmem:[#allocation9 + $0x8] sm:$0xf]
        %v2653 = vld [vmem:[#allocation9 + $0xc] sm:$0xf]
        %v2654 = vld [vmem:[#allocation9 + $0x10] sm:$0xf]
        %v2655 = vld [vmem:[#allocation9 + $0x14] sm:$0xf]
        %v2656 = vld [vmem:[#allocation9 + $0x18] sm:$0xf]
        %v2657 = vld [vmem:[#allocation9 + $0x1c] sm:$0xf]
        %v2658 = vld [vmem:[#allocation9 + $0x20] sm:$0xf]
        %v2659 = vld [vmem:[#allocation9 + $0x24] sm:$0xf]
        %v2660 = vld [vmem:[#allocation9 + $0x28] sm:$0xf]
        %v2661 = vld [vmem:[#allocation9 + $0x2c] sm:$0xf]
        %v2662 = vld [vmem:[#allocation9 + $0x30] sm:$0xf]
        %v2663 = vld [vmem:[#allocation9 + $0x34] sm:$0xf]
        %v2664 = vld [vmem:[#allocation9 + $0x38] sm:$0xf]
        %v2665 = vld [vmem:[#allocation9 + $0x3c] sm:$0xf]
        %v2666 = vld [vmem:[#allocation9 + $0x40] sm:$0xf]
        %v2667 = vld [vmem:[#allocation9 + $0x44] sm:$0xf]
        %v2668 = vld [vmem:[#allocation9 + $0x48] sm:$0xf]
        %v2669 = vld [vmem:[#allocation9 + $0x4c] sm:$0xf]
        %v2670 = vld [vmem:[#allocation9 + $0x50] sm:$0xf]
        %v2671 = vld [vmem:[#allocation9 + $0x54] sm:$0xf]
        %v2672 = vld [vmem:[#allocation9 + $0x58] sm:$0xf]
        %v2673 = vld [vmem:[#allocation9 + $0x5c] sm:$0xf]
        %v2674 = vld [vmem:[#allocation9 + $0x60] sm:$0xf]
        %v2675 = vld [vmem:[#allocation9 + $0x64] sm:$0xf]
        %v2676 = vld [vmem:[#allocation9 + $0x68] sm:$0xf]
        %v2677 = vld [vmem:[#allocation9 + $0x6c] sm:$0xf]
        %v2678 = vld [vmem:[#allocation9 + $0x70] sm:$0xf]
        %v2679 = vld [vmem:[#allocation9 + $0x74] sm:$0xf]
        %v2680 = vld [vmem:[#allocation9 + $0x78] sm:$0xf]
        %v2681 = vld [vmem:[#allocation9 + $0x7c] sm:$0xf]
        %v2682 = vld [vmem:[#allocation9 + $0x80] sm:$0xf]
        %v2683 = vld [vmem:[#allocation9 + $0x84] sm:$0xf]
        %v2684 = vld [vmem:[#allocation9 + $0x88] sm:$0xf]
        %v2685 = vld [vmem:[#allocation9 + $0x8c] sm:$0xf]
        %v2686 = vld [vmem:[#allocation9 + $0x90] sm:$0xf]
        %v2687 = vld [vmem:[#allocation9 + $0x94] sm:$0xf]
        %v2688 = vld [vmem:[#allocation9 + $0x98] sm:$0xf]
        %v2689 = vld [vmem:[#allocation9 + $0x9c] sm:$0xf]
        %v2690 = vld [vmem:[#allocation9 + $0xa0] sm:$0xf]
        %v2691 = vld [vmem:[#allocation9 + $0xa4] sm:$0xf]
        %v2692 = vld [vmem:[#allocation9 + $0xa8] sm:$0xf]
        %v2693 = vld [vmem:[#allocation9 + $0xac] sm:$0xf]
        %v2694 = vld [vmem:[#allocation9 + $0xb0] sm:$0xf]
        %v2695 = vld [vmem:[#allocation9 + $0xb4] sm:$0xf]
        %v2696 = vld [vmem:[#allocation9 + $0xb8] sm:$0xf]
        %v2697 = vld [vmem:[#allocation9 + $0xbc] sm:$0xf]
        %v2698 = vld [vmem:[#allocation9 + $0xc0] sm:$0xf]
        %v2699 = vld [vmem:[#allocation9 + $0xc4] sm:$0xf]
        %v2700 = vld [vmem:[#allocation9 + $0xc8] sm:$0xf]
        %v2701 = vld [vmem:[#allocation9 + $0xcc] sm:$0xf]
        %v2702 = vld [vmem:[#allocation9 + $0xd0] sm:$0xf]
        %v2703 = vld [vmem:[#allocation9 + $0xd4] sm:$0xf]
        %v2704 = vld [vmem:[#allocation9 + $0xd8] sm:$0xf]
        %v2705 = vld [vmem:[#allocation9 + $0xdc] sm:$0xf]
        %v2706 = vld [vmem:[#allocation9 + $0xe0] sm:$0xf]
        %v2707 = vld [vmem:[#allocation9 + $0xe4] sm:$0xf]
        %v2708 = vld [vmem:[#allocation9 + $0xe8] sm:$0xf]
        %v2709 = vld [vmem:[#allocation9 + $0xec] sm:$0xf]
        %v2710 = vld [vmem:[#allocation9 + $0xf0] sm:$0xf]
        %v2711 = vld [vmem:[#allocation9 + $0xf4] sm:$0xf]
        %v2712 = vld [vmem:[#allocation9 + $0xf8] sm:$0xf]
        %v2713 = vld [vmem:[#allocation9 + $0xfc] sm:$0xf]
        %v2714 = vld [vmem:[#allocation9 + $0x100] sm:$0xf]
        %v2715 = vld [vmem:[#allocation9 + $0x104] sm:$0xf]
        %v2716 = vld [vmem:[#allocation9 + $0x108] sm:$0xf]
        %v2717 = vld [vmem:[#allocation9 + $0x10c] sm:$0xf]
        %v2718 = vld [vmem:[#allocation9 + $0x110] sm:$0xf]
        %v2719 = vld [vmem:[#allocation9 + $0x114] sm:$0xf]
        %v2720 = vld [vmem:[#allocation9 + $0x118] sm:$0xf]
        %v2721 = vld [vmem:[#allocation9 + $0x11c] sm:$0xf]
        %v2722 = vld [vmem:[#allocation9 + $0x120] sm:$0xf]
        %v2723 = vld [vmem:[#allocation9 + $0x124] sm:$0xf]
        %v2724 = vld [vmem:[#allocation9 + $0x128] sm:$0xf]
        %v2725 = vld [vmem:[#allocation9 + $0x12c] sm:$0xf]
        %v2726 = vld [vmem:[#allocation9 + $0x130] sm:$0xf]
        %v2727 = vld [vmem:[#allocation9 + $0x134] sm:$0xf]
        %v2728 = vld [vmem:[#allocation9 + $0x138] sm:$0xf]
        %v2729 = vld [vmem:[#allocation9 + $0x13c] sm:$0xf]
        %v2730 = vld [vmem:[#allocation9 + $0x140] sm:$0xf]
        %v2731 = vld [vmem:[#allocation9 + $0x144] sm:$0xf]
        %v2732 = vld [vmem:[#allocation9 + $0x148] sm:$0xf]
        %v2733 = vld [vmem:[#allocation9 + $0x14c] sm:$0xf]
        %v2734 = vld [vmem:[#allocation9 + $0x150] sm:$0xf]
        %v2735 = vld [vmem:[#allocation9 + $0x154] sm:$0xf]
        %v2736 = vld [vmem:[#allocation9 + $0x158] sm:$0xf]
        %v2737 = vld [vmem:[#allocation9 + $0x15c] sm:$0xf]
        %v2738 = vld [vmem:[#allocation9 + $0x160] sm:$0xf]
        %v2739 = vld [vmem:[#allocation9 + $0x164] sm:$0xf]
        %v2740 = vld [vmem:[#allocation9 + $0x168] sm:$0xf]
        %v2741 = vld [vmem:[#allocation9 + $0x16c] sm:$0xf]
        %v2742 = vld [vmem:[#allocation9 + $0x170] sm:$0xf]
        %v2743 = vld [vmem:[#allocation9 + $0x174] sm:$0xf]
        %v2744 = vld [vmem:[#allocation9 + $0x178] sm:$0xf]
        %v2745 = vld [vmem:[#allocation9 + $0x17c] sm:$0xf]
        %v2746 = vld [vmem:[#allocation9 + $0x180] sm:$0xf]
        %v2747 = vld [vmem:[#allocation9 + $0x184] sm:$0xf]
        %v2748 = vld [vmem:[#allocation9 + $0x188] sm:$0xf]
        %v2749 = vld [vmem:[#allocation9 + $0x18c] sm:$0xf]
        %v2750 = vld [vmem:[#allocation9 + $0x190] sm:$0xf]
        %v2751 = vld [vmem:[#allocation9 + $0x194] sm:$0xf]
        %v2752 = vld [vmem:[#allocation9 + $0x198] sm:$0xf]
        %v2753 = vld [vmem:[#allocation9 + $0x19c] sm:$0xf]
        %v2754 = vld [vmem:[#allocation9 + $0x1a0] sm:$0xf]
        %v2755 = vld [vmem:[#allocation9 + $0x1a4] sm:$0xf]
        %v2756 = vld [vmem:[#allocation9 + $0x1a8] sm:$0xf]
        %v2757 = vld [vmem:[#allocation9 + $0x1ac] sm:$0xf]
        %v2758 = vld [vmem:[#allocation9 + $0x1b0] sm:$0xf]
        %v2759 = vld [vmem:[#allocation9 + $0x1b4] sm:$0xf]
        %v2760 = vld [vmem:[#allocation9 + $0x1b8] sm:$0xf]
        %v2761 = vld [vmem:[#allocation9 + $0x1bc] sm:$0xf]
        %v2762 = vld [vmem:[#allocation9 + $0x1c0] sm:$0xf]
        %v2763 = vld [vmem:[#allocation9 + $0x1c4] sm:$0xf]
        %v2764 = vld [vmem:[#allocation9 + $0x1c8] sm:$0xf]
        %v2765 = vld [vmem:[#allocation9 + $0x1cc] sm:$0xf]
        %v2766 = vld [vmem:[#allocation9 + $0x1d0] sm:$0xf]
        %v2767 = vld [vmem:[#allocation9 + $0x1d4] sm:$0xf]
        %v2768 = vld [vmem:[#allocation9 + $0x1d8] sm:$0xf]
        %v2769 = vld [vmem:[#allocation9 + $0x1dc] sm:$0xf]
        %v2770 = vld [vmem:[#allocation9 + $0x1e0] sm:$0xf]
        %v2771 = vld [vmem:[#allocation9 + $0x1e4] sm:$0xf]
        %v2772 = vld [vmem:[#allocation9 + $0x1e8] sm:$0xf]
        %v2773 = vld [vmem:[#allocation9 + $0x1ec] sm:$0xf]
        %v2774 = vld [vmem:[#allocation9 + $0x1f0] sm:$0xf]
        %v2775 = vld [vmem:[#allocation9 + $0x1f4] sm:$0xf]
        %v2776 = vld [vmem:[#allocation9 + $0x1f8] sm:$0xf]
        %v2777 = vld [vmem:[#allocation9 + $0x1fc] sm:$0xf]
        %v2778 = vld [vmem:[#allocation9 + $0x200] sm:$0xf]
        %v2779 = vld [vmem:[#allocation9 + $0x204] sm:$0xf]
        %v2780 = vld [vmem:[#allocation9 + $0x208] sm:$0xf]
        %v2781 = vld [vmem:[#allocation9 + $0x20c] sm:$0xf]
        %v2782 = vld [vmem:[#allocation9 + $0x210] sm:$0xf]
        %v2783 = vld [vmem:[#allocation9 + $0x214] sm:$0xf]
        %v2784 = vld [vmem:[#allocation9 + $0x218] sm:$0xf]
        %v2785 = vld [vmem:[#allocation9 + $0x21c] sm:$0xf]
        %v2786 = vld [vmem:[#allocation9 + $0x220] sm:$0xf]
        %v2787 = vld [vmem:[#allocation9 + $0x224] sm:$0xf]
        %v2788 = vld [vmem:[#allocation9 + $0x228] sm:$0xf]
        %v2789 = vld [vmem:[#allocation9 + $0x22c] sm:$0xf]
        %v2790 = vld [vmem:[#allocation9 + $0x230] sm:$0xf]
        %v2791 = vld [vmem:[#allocation9 + $0x234] sm:$0xf]
        %v2792 = vld [vmem:[#allocation9 + $0x238] sm:$0xf]
        %v2793 = vld [vmem:[#allocation9 + $0x23c] sm:$0xf]
        %v2794 = vld [vmem:[%s223 + $0x84] sm:$0x8]
        %v2795 = vld [vmem:[%s223 + $0x88] sm:$0xf]
        %v2796 = vld [vmem:[%s223 + $0x8c] sm:$0xf]
        %v2797 = vld [vmem:[%s223 + $0x90] sm:$0xf]
        %v2798 = vld [vmem:[%s223 + $0x94] sm:$0xf]
        %v2799 = vld [vmem:[%s223 + $0x98] sm:$0xf]
        %v2800 = vld [vmem:[%s223 + $0x9c] sm:$0xf]
        %v2801 = vld [vmem:[%s223 + $0xa0] sm:$0xf]
        %v2802 = vld [vmem:[%s223 + $0xa4] sm:$0xf]
        %v2803 = vld [vmem:[%s223 + $0xa8] sm:$0xf]
        %v2804 = vld [vmem:[%s223 + $0xac] sm:$0x7]
        %v2805 = vld [vmem:[#allocation10] sm:$0xf]
        %v2806 = vld [vmem:[#allocation10 + $0x4] sm:$0xf]
        %v2807 = vld [vmem:[#allocation10 + $0x8] sm:$0xf]
        %v2808 = vld [vmem:[#allocation10 + $0xc] sm:$0xf]
        %v2809 = vld [vmem:[#allocation10 + $0x10] sm:$0xf]
        %v2810 = vld [vmem:[#allocation10 + $0x14] sm:$0xf]
        %v2811 = vld [vmem:[#allocation10 + $0x18] sm:$0xf]
        %v2812 = vld [vmem:[#allocation10 + $0x1c] sm:$0xf]
        %v2813 = vld [vmem:[#allocation10 + $0x20] sm:$0xf]
        %v2814 = vld [vmem:[#allocation10 + $0x24] sm:$0xf]
        %v2815 = vld [vmem:[#allocation10 + $0x28] sm:$0xf]
        %v2816 = vld [vmem:[#allocation10 + $0x2c] sm:$0xf]
        %v2817 = vld [vmem:[#allocation10 + $0x30] sm:$0xf]
        %v2818 = vld [vmem:[#allocation10 + $0x34] sm:$0xf]
        %v2819 = vld [vmem:[#allocation10 + $0x38] sm:$0xf]
        %v2820 = vld [vmem:[#allocation10 + $0x3c] sm:$0xf]
        %v2832 = vunpack.c.l.b16 %v2794
        %v2833 = vunpack.c.l.b16 %v2795
        %v2834 = vunpack.c.l.b16 %v2796
        %v2835 = vunpack.c.l.b16 %v2797
        %v2836 = vunpack.c.l.b16 %v2798
        %v2837 = vunpack.c.l.b16 %v2799
        %v2838 = vunpack.c.l.b16 %v2800
        %v2839 = vunpack.c.l.b16 %v2801
        %v2840 = vunpack.c.l.b16 %v2802
        %v2841 = vunpack.c.l.b16 %v2803
        %v2842 = vunpack.c.l.b16 %v2804
        %v2843 = vpack.c.b16 %v2833, %v2832
        %v2844 = vpack.c.b16 %v2835, %v2834
        %v2845 = vpack.c.b16 %v2837, %v2836
        %v2846 = vpack.c.b16 %v2839, %v2838
        %v2847 = vpack.c.b16 %v2841, %v2840
        %v2848 = vpack.c.b16 %v2842, %v2842
        %v2849 = vrot.slane %v2843, 3
        %v2850 = vrot.slane %v2844, 3
        %v2851 = vsel %vm744, %v2849, %v2850
        %v2852 = vrot.slane %v2845, 3
        %v2853 = vsel %vm744, %v2850, %v2852
        %v2854 = vrot.slane %v2846, 3
        %v2855 = vsel %vm744, %v2852, %v2854
        %v2856 = vrot.slane %v2847, 3
        %v2857 = vsel %vm744, %v2854, %v2856
        %v2858 = vrot.slane %v2848, 3
        %v2859 = vsel %vm744, %v2856, %v2858
        %v2881 = vunpack.c.l.b16 %v2805
        %v2882 = vunpack.c.l.b16 %v2806
        %v2883 = vunpack.c.l.b16 %v2807
        %v2884 = vunpack.c.l.b16 %v2808
        %v2885 = vunpack.c.l.b16 %v2809
        %v2886 = vunpack.c.l.b16 %v2810
        %v2887 = vunpack.c.l.b16 %v2811
        %v2888 = vunpack.c.l.b16 %v2812
        %v2889 = vunpack.c.l.b16 %v2813
        %v2890 = vunpack.c.l.b16 %v2814
        %v2891 = vunpack.c.l.b16 %v2815
        %v2892 = vunpack.c.l.b16 %v2816
        %v2893 = vunpack.c.l.b16 %v2817
        %v2894 = vunpack.c.l.b16 %v2818
        %v2895 = vunpack.c.l.b16 %v2819
        %v2896 = vunpack.c.l.b16 %v2820
        %v2897 = vpack.c.b16 %v2882, %v2881
        %v2898 = vpack.c.b16 %v2884, %v2883
        %v2899 = vpack.c.b16 %v2886, %v2885
        %v2900 = vpack.c.b16 %v2888, %v2887
        %v2901 = vpack.c.b16 %v2890, %v2889
        %v2902 = vpack.c.b16 %v2892, %v2891
        %v2903 = vpack.c.b16 %v2894, %v2893
        %v2904 = vpack.c.b16 %v2896, %v2895
        %2913 = vmatprep.subr.bf16.mxu0 0
        %2914 = vmatpush1.bf16.msra.mxu0 %v2897
        %2915 = vmatprep.subr.bf16.mxu0 0
        %2916 = vmatpush1.bf16.msra.mxu0 %v2898
        %2917 = vmatprep.subr.bf16.mxu0 0
        %2918 = vmatpush1.bf16.msra.mxu0 %v2899
        %2919 = vmatprep.subr.bf16.mxu0 0
        %2920 = vmatpush1.bf16.msra.mxu0 %v2900
        %2921 = vmatprep.subr.bf16.mxu0 0
        %2922 = vmatpush1.bf16.msra.mxu0 %v2901
        %2923 = vmatprep.subr.bf16.mxu0 0
        %2924 = vmatpush1.bf16.msra.mxu0 %v2902
        %2925 = vmatprep.subr.bf16.mxu0 0
        %2926 = vmatpush1.bf16.msra.mxu0 %v2903
        %2927 = vmatprep.subr.bf16.mxu0 0
        %2928 = vmatpush1.bf16.msra.mxu0 %v2904
        %2929 = vmatprep.subr.bf16.mxu0 0
        %2930 = vmatpush1.bf16.msra.mxu0 0
        %2931 = vmatprep.subr.bf16.mxu0 0
        %2932 = vmatpush1.bf16.msra.mxu0 0
        %2933 = vmatprep.subr.bf16.mxu0 0
        %2934 = vmatpush1.bf16.msra.mxu0 0
        %2935 = vmatprep.subr.bf16.mxu0 0
        %2936 = vmatpush1.bf16.msra.mxu0 0
        %2937 = vmatprep.subr.bf16.mxu0 0
        %2938 = vmatpush1.bf16.msra.mxu0 0
        %2939 = vmatprep.subr.bf16.mxu0 0
        %2940 = vmatpush1.bf16.msra.mxu0 0
        %2941 = vmatprep.subr.bf16.mxu0 0
        %2942 = vmatpush1.bf16.msra.mxu0 0
        %2943 = vmatprep.subr.bf16.mxu0 0
        %2944 = vmatpush1.bf16.msra.mxu0 0
        %2945 = vmatprep.mubr.bf16.mxu0 0
        %2946 = vmatmul.mubr.bf16.gmra.mrb[0].mxu0 %v2851
        %v2947 = vpop.f32.mrb[0].mxu0
        %v2948 = vadd.f32 0.0, %v2947
        %v2949 = vpop.f32.mrb[0].mxu0
        %v2950 = vpop.f32.mrb[0].mxu0
        %v2951 = vadd.f32 0.0, %v2950
        %v2952 = vpop.f32.mrb[0].mxu0
        %2953 = vmatprep.mubr.bf16.mxu0 0
        %2954 = vmatmul.mubr.bf16.gmra.mrb[0].mxu0 %v2853
        %v2955 = vpop.f32.mrb[0].mxu0
        %v2956 = vadd.f32 0.0, %v2955
        %v2957 = vpop.f32.mrb[0].mxu0
        %v2958 = vpop.f32.mrb[0].mxu0
        %v2959 = vadd.f32 0.0, %v2958
        %v2960 = vpop.f32.mrb[0].mxu0
        %2961 = vmatprep.mubr.bf16.mxu0 0
        %2962 = vmatmul.mubr.bf16.gmra.mrb[0].mxu0 %v2855
        %v2963 = vpop.f32.mrb[0].mxu0
        %v2964 = vadd.f32 0.0, %v2963
        %v2965 = vpop.f32.mrb[0].mxu0
        %v2966 = vpop.f32.mrb[0].mxu0
        %v2967 = vadd.f32 0.0, %v2966
        %v2968 = vpop.f32.mrb[0].mxu0
        %2969 = vmatprep.mubr.bf16.mxu0 0
        %2970 = vmatmul.mubr.bf16.gmra.mrb[0].mxu0 %v2857
        %v2971 = vpop.f32.mrb[0].mxu0
        %v2972 = vadd.f32 0.0, %v2971
        %v2973 = vpop.f32.mrb[0].mxu0
        %v2974 = vpop.f32.mrb[0].mxu0
        %v2975 = vadd.f32 0.0, %v2974
        %v2976 = vpop.f32.mrb[0].mxu0
        %2977 = vmatprep.mubr.bf16.mxu0 0
        %2978 = vmatmul.mubr.bf16.gmra.mrb[0].mxu0 %v2859
        %v2979 = vpop.f32.mrb[0].mxu0
        %v2980 = vadd.f32 0.0, %v2979
        %v2981 = vpop.f32.mrb[0].mxu0
        %v2982 = vpop.f32.mrb[0].mxu0
        %v2983 = vadd.f32 0.0, %v2982
        %v2984 = vpop.f32.mrb[0].mxu0
        %2985 = vdwg.mxu0
        %v3130 = vunpack.c.l.b16 %v2650
        %v3131 = vunpack.c.l.b16 %v2651
        %v3132 = vunpack.c.l.b16 %v2652
        %v3133 = vunpack.c.l.b16 %v2653
        %v3134 = vunpack.c.l.b16 %v2654
        %v3135 = vunpack.c.l.b16 %v2655
        %v3136 = vunpack.c.l.b16 %v2656
        %v3137 = vunpack.c.l.b16 %v2657
        %v3138 = vunpack.c.l.b16 %v2658
        %v3139 = vunpack.c.l.b16 %v2659
        %v3140 = vunpack.c.l.b16 %v2660
        %v3141 = vunpack.c.l.b16 %v2661
        %v3142 = vunpack.c.l.b16 %v2662
        %v3143 = vunpack.c.l.b16 %v2663
        %v3144 = vunpack.c.l.b16 %v2664
        %v3145 = vunpack.c.l.b16 %v2665
        %v3146 = vunpack.c.l.b16 %v2666
        %v3147 = vunpack.c.l.b16 %v2667
        %v3148 = vunpack.c.l.b16 %v2668
        %v3149 = vunpack.c.l.b16 %v2669
        %v3150 = vunpack.c.l.b16 %v2670
        %v3151 = vunpack.c.l.b16 %v2671
        %v3152 = vunpack.c.l.b16 %v2672
        %v3153 = vunpack.c.l.b16 %v2673
        %v3154 = vunpack.c.l.b16 %v2674
        %v3155 = vunpack.c.l.b16 %v2675
        %v3156 = vunpack.c.l.b16 %v2676
        %v3157 = vunpack.c.l.b16 %v2677
        %v3158 = vunpack.c.l.b16 %v2678
        %v3159 = vunpack.c.l.b16 %v2679
        %v3160 = vunpack.c.l.b16 %v2680
        %v3161 = vunpack.c.l.b16 %v2681
        %v3162 = vunpack.c.l.b16 %v2682
        %v3163 = vunpack.c.l.b16 %v2683
        %v3164 = vunpack.c.l.b16 %v2684
        %v3165 = vunpack.c.l.b16 %v2685
        %v3166 = vunpack.c.l.b16 %v2686
        %v3167 = vunpack.c.l.b16 %v2687
        %v3168 = vunpack.c.l.b16 %v2688
        %v3169 = vunpack.c.l.b16 %v2689
        %v3170 = vunpack.c.l.b16 %v2690
        %v3171 = vunpack.c.l.b16 %v2691
        %v3172 = vunpack.c.l.b16 %v2692
        %v3173 = vunpack.c.l.b16 %v2693
        %v3174 = vunpack.c.l.b16 %v2694
        %v3175 = vunpack.c.l.b16 %v2695
        %v3176 = vunpack.c.l.b16 %v2696
        %v3177 = vunpack.c.l.b16 %v2697
        %v3178 = vunpack.c.l.b16 %v2698
        %v3179 = vunpack.c.l.b16 %v2699
        %v3180 = vunpack.c.l.b16 %v2700
        %v3181 = vunpack.c.l.b16 %v2701
        %v3182 = vunpack.c.l.b16 %v2702
        %v3183 = vunpack.c.l.b16 %v2703
        %v3184 = vunpack.c.l.b16 %v2704
        %v3185 = vunpack.c.l.b16 %v2705
        %v3186 = vunpack.c.l.b16 %v2706
        %v3187 = vunpack.c.l.b16 %v2707
        %v3188 = vunpack.c.l.b16 %v2708
        %v3189 = vunpack.c.l.b16 %v2709
        %v3190 = vunpack.c.l.b16 %v2710
        %v3191 = vunpack.c.l.b16 %v2711
        %v3192 = vunpack.c.l.b16 %v2712
        %v3193 = vunpack.c.l.b16 %v2713
        %v3194 = vunpack.c.l.b16 %v2714
        %v3195 = vunpack.c.l.b16 %v2715
        %v3196 = vunpack.c.l.b16 %v2716
        %v3197 = vunpack.c.l.b16 %v2717
        %v3198 = vunpack.c.l.b16 %v2718
        %v3199 = vunpack.c.l.b16 %v2719
        %v3200 = vunpack.c.l.b16 %v2720
        %v3201 = vunpack.c.l.b16 %v2721
        %v3202 = vunpack.c.l.b16 %v2722
        %v3203 = vunpack.c.l.b16 %v2723
        %v3204 = vunpack.c.l.b16 %v2724
        %v3205 = vunpack.c.l.b16 %v2725
        %v3206 = vunpack.c.l.b16 %v2726
        %v3207 = vunpack.c.l.b16 %v2727
        %v3208 = vunpack.c.l.b16 %v2728
        %v3209 = vunpack.c.l.b16 %v2729
        %v3210 = vunpack.c.l.b16 %v2730
        %v3211 = vunpack.c.l.b16 %v2731
        %v3212 = vunpack.c.l.b16 %v2732
        %v3213 = vunpack.c.l.b16 %v2733
        %v3214 = vunpack.c.l.b16 %v2734
        %v3215 = vunpack.c.l.b16 %v2735
        %v3216 = vunpack.c.l.b16 %v2736
        %v3217 = vunpack.c.l.b16 %v2737
        %v3218 = vunpack.c.l.b16 %v2738
        %v3219 = vunpack.c.l.b16 %v2739
        %v3220 = vunpack.c.l.b16 %v2740
        %v3221 = vunpack.c.l.b16 %v2741
        %v3222 = vunpack.c.l.b16 %v2742
        %v3223 = vunpack.c.l.b16 %v2743
        %v3224 = vunpack.c.l.b16 %v2744
        %v3225 = vunpack.c.l.b16 %v2745
        %v3226 = vunpack.c.l.b16 %v2746
        %v3227 = vunpack.c.l.b16 %v2747
        %v3228 = vunpack.c.l.b16 %v2748
        %v3229 = vunpack.c.l.b16 %v2749
        %v3230 = vunpack.c.l.b16 %v2750
        %v3231 = vunpack.c.l.b16 %v2751
        %v3232 = vunpack.c.l.b16 %v2752
        %v3233 = vunpack.c.l.b16 %v2753
        %v3234 = vunpack.c.l.b16 %v2754
        %v3235 = vunpack.c.l.b16 %v2755
        %v3236 = vunpack.c.l.b16 %v2756
        %v3237 = vunpack.c.l.b16 %v2757
        %v3238 = vunpack.c.l.b16 %v2758
        %v3239 = vunpack.c.l.b16 %v2759
        %v3240 = vunpack.c.l.b16 %v2760
        %v3241 = vunpack.c.l.b16 %v2761
        %v3242 = vunpack.c.l.b16 %v2762
        %v3243 = vunpack.c.l.b16 %v2763
        %v3244 = vunpack.c.l.b16 %v2764
        %v3245 = vunpack.c.l.b16 %v2765
        %v3246 = vunpack.c.l.b16 %v2766
        %v3247 = vunpack.c.l.b16 %v2767
        %v3248 = vunpack.c.l.b16 %v2768
        %v3249 = vunpack.c.l.b16 %v2769
        %v3250 = vunpack.c.l.b16 %v2770
        %v3251 = vunpack.c.l.b16 %v2771
        %v3252 = vunpack.c.l.b16 %v2772
        %v3253 = vunpack.c.l.b16 %v2773
        %v3254 = vunpack.c.l.b16 %v2774
        %v3255 = vunpack.c.l.b16 %v2775
        %v3256 = vunpack.c.l.b16 %v2776
        %v3257 = vunpack.c.l.b16 %v2777
        %v3258 = vunpack.c.l.b16 %v2778
        %v3259 = vunpack.c.l.b16 %v2779
        %v3260 = vunpack.c.l.b16 %v2780
        %v3261 = vunpack.c.l.b16 %v2781
        %v3262 = vunpack.c.l.b16 %v2782
        %v3263 = vunpack.c.l.b16 %v2783
        %v3264 = vunpack.c.l.b16 %v2784
        %v3265 = vunpack.c.l.b16 %v2785
        %v3266 = vunpack.c.l.b16 %v2786
        %v3267 = vunpack.c.l.b16 %v2787
        %v3268 = vunpack.c.l.b16 %v2788
        %v3269 = vunpack.c.l.b16 %v2789
        %v3270 = vunpack.c.l.b16 %v2790
        %v3271 = vunpack.c.l.b16 %v2791
        %v3272 = vunpack.c.l.b16 %v2792
        %v3273 = vunpack.c.l.b16 %v2793
        %v3274 = vpack.c.b16 %v3131, %v3130
        %v3275 = vpack.c.b16 %v3133, %v3132
        %v3276 = vpack.c.b16 %v3135, %v3134
        %v3277 = vpack.c.b16 %v3137, %v3136
        %v3278 = vpack.c.b16 %v3139, %v3138
        %v3279 = vpack.c.b16 %v3141, %v3140
        %v3280 = vpack.c.b16 %v3143, %v3142
        %v3281 = vpack.c.b16 %v3145, %v3144
        %v3282 = vpack.c.b16 %v3147, %v3146
        %v3283 = vpack.c.b16 %v3149, %v3148
        %v3284 = vpack.c.b16 %v3151, %v3150
        %v3285 = vpack.c.b16 %v3153, %v3152
        %v3286 = vpack.c.b16 %v3155, %v3154
        %v3287 = vpack.c.b16 %v3157, %v3156
        %v3288 = vpack.c.b16 %v3159, %v3158
        %v3289 = vpack.c.b16 %v3161, %v3160
        %v3290 = vpack.c.b16 %v3163, %v3162
        %v3291 = vpack.c.b16 %v3165, %v3164
        %v3292 = vpack.c.b16 %v3167, %v3166
        %v3293 = vpack.c.b16 %v3169, %v3168
        %v3294 = vpack.c.b16 %v3171, %v3170
        %v3295 = vpack.c.b16 %v3173, %v3172
        %v3296 = vpack.c.b16 %v3175, %v3174
        %v3297 = vpack.c.b16 %v3177, %v3176
        %v3298 = vpack.c.b16 %v3179, %v3178
        %v3299 = vpack.c.b16 %v3181, %v3180
        %v3300 = vpack.c.b16 %v3183, %v3182
        %v3301 = vpack.c.b16 %v3185, %v3184
        %v3302 = vpack.c.b16 %v3187, %v3186
        %v3303 = vpack.c.b16 %v3189, %v3188
        %v3304 = vpack.c.b16 %v3191, %v3190
        %v3305 = vpack.c.b16 %v3193, %v3192
        %v3306 = vpack.c.b16 %v3195, %v3194
        %v3307 = vpack.c.b16 %v3197, %v3196
        %v3308 = vpack.c.b16 %v3199, %v3198
        %v3309 = vpack.c.b16 %v3201, %v3200
        %v3310 = vpack.c.b16 %v3203, %v3202
        %v3311 = vpack.c.b16 %v3205, %v3204
        %v3312 = vpack.c.b16 %v3207, %v3206
        %v3313 = vpack.c.b16 %v3209, %v3208
        %v3314 = vpack.c.b16 %v3211, %v3210
        %v3315 = vpack.c.b16 %v3213, %v3212
        %v3316 = vpack.c.b16 %v3215, %v3214
        %v3317 = vpack.c.b16 %v3217, %v3216
        %v3318 = vpack.c.b16 %v3219, %v3218
        %v3319 = vpack.c.b16 %v3221, %v3220
        %v3320 = vpack.c.b16 %v3223, %v3222
        %v3321 = vpack.c.b16 %v3225, %v3224
        %v3322 = vpack.c.b16 %v3227, %v3226
        %v3323 = vpack.c.b16 %v3229, %v3228
        %v3324 = vpack.c.b16 %v3231, %v3230
        %v3325 = vpack.c.b16 %v3233, %v3232
        %v3326 = vpack.c.b16 %v3235, %v3234
        %v3327 = vpack.c.b16 %v3237, %v3236
        %v3328 = vpack.c.b16 %v3239, %v3238
        %v3329 = vpack.c.b16 %v3241, %v3240
        %v3330 = vpack.c.b16 %v3243, %v3242
        %v3331 = vpack.c.b16 %v3245, %v3244
        %v3332 = vpack.c.b16 %v3247, %v3246
        %v3333 = vpack.c.b16 %v3249, %v3248
        %v3334 = vpack.c.b16 %v3251, %v3250
        %v3335 = vpack.c.b16 %v3253, %v3252
        %v3336 = vpack.c.b16 %v3255, %v3254
        %v3337 = vpack.c.b16 %v3257, %v3256
        %v3338 = vpack.c.b16 %v3259, %v3258
        %v3339 = vpack.c.b16 %v3261, %v3260
        %v3340 = vpack.c.b16 %v3263, %v3262
        %v3341 = vpack.c.b16 %v3265, %v3264
        %v3342 = vpack.c.b16 %v3267, %v3266
        %v3343 = vpack.c.b16 %v3269, %v3268
        %v3344 = vpack.c.b16 %v3271, %v3270
        %v3345 = vpack.c.b16 %v3273, %v3272
        %3418 = vmatprep.subr.bf16.mxu0 0
        %3419 = vmatpush1.bf16.msra.mxu0 %v3274
        %3420 = vmatprep.subr.bf16.mxu0 0
        %3421 = vmatpush1.bf16.msra.mxu0 %v3275
        %3422 = vmatprep.subr.bf16.mxu0 0
        %3423 = vmatpush1.bf16.msra.mxu0 %v3276
        %3424 = vmatprep.subr.bf16.mxu0 0
        %3425 = vmatpush1.bf16.msra.mxu0 %v3277
        %3426 = vmatprep.subr.bf16.mxu0 0
        %3427 = vmatpush1.bf16.msra.mxu0 %v3278
        %3428 = vmatprep.subr.bf16.mxu0 0
        %3429 = vmatpush1.bf16.msra.mxu0 %v3279
        %3430 = vmatprep.subr.bf16.mxu0 0
        %3431 = vmatpush1.bf16.msra.mxu0 %v3280
        %3432 = vmatprep.subr.bf16.mxu0 0
        %3433 = vmatpush1.bf16.msra.mxu0 %v3281
        %3434 = vmatprep.subr.bf16.mxu0 0
        %3435 = vmatpush1.bf16.msra.mxu0 %v3282
        %3436 = vmatprep.subr.bf16.mxu0 0
        %3437 = vmatpush1.bf16.msra.mxu0 %v3283
        %3438 = vmatprep.subr.bf16.mxu0 0
        %3439 = vmatpush1.bf16.msra.mxu0 %v3284
        %3440 = vmatprep.subr.bf16.mxu0 0
        %3441 = vmatpush1.bf16.msra.mxu0 %v3285
        %3442 = vmatprep.subr.bf16.mxu0 0
        %3443 = vmatpush1.bf16.msra.mxu0 %v3286
        %3444 = vmatprep.subr.bf16.mxu0 0
        %3445 = vmatpush1.bf16.msra.mxu0 %v3287
        %3446 = vmatprep.subr.bf16.mxu0 0
        %3447 = vmatpush1.bf16.msra.mxu0 %v3288
        %3448 = vmatprep.subr.bf16.mxu0 0
        %3449 = vmatpush1.bf16.msra.mxu0 %v3289
        %3450 = vmatprep.mubr.bf16.mxu0 %v2606
        %3451 = vmatmul.mubr.bf16.gmra.mrb[0].mxu0 %v2605
        %v3452 = vpop.f32.mrb[0].mxu0
        %v3453 = vadd.f32 %v2948, %v3452
        %v3454 = vpop.f32.mrb[0].mxu0
        %v3455 = vpop.f32.mrb[0].mxu0
        %v3456 = vadd.f32 %v2951, %v3455
        %v3457 = vpop.f32.mrb[0].mxu0
        %3458 = vmatprep.mubr.bf16.mxu0 %v2615
        %3459 = vmatmul.mubr.bf16.gmra.mrb[0].mxu0 %v2614
        %v3460 = vpop.f32.mrb[0].mxu0
        %v3461 = vadd.f32 %v2956, %v3460
        %v3462 = vpop.f32.mrb[0].mxu0
        %v3463 = vpop.f32.mrb[0].mxu0
        %v3464 = vadd.f32 %v2959, %v3463
        %v3465 = vpop.f32.mrb[0].mxu0
        %3466 = vmatprep.mubr.bf16.mxu0 %v2624
        %3467 = vmatmul.mubr.bf16.gmra.mrb[0].mxu0 %v2623
        %v3468 = vpop.f32.mrb[0].mxu0
        %v3469 = vadd.f32 %v2964, %v3468
        %v3470 = vpop.f32.mrb[0].mxu0
        %v3471 = vpop.f32.mrb[0].mxu0
        %v3472 = vadd.f32 %v2967, %v3471
        %v3473 = vpop.f32.mrb[0].mxu0
        %3474 = vmatprep.mubr.bf16.mxu0 %v2633
        %3475 = vmatmul.mubr.bf16.gmra.mrb[0].mxu0 %v2632
        %v3476 = vpop.f32.mrb[0].mxu0
        %v3477 = vadd.f32 %v2972, %v3476
        %v3478 = vpop.f32.mrb[0].mxu0
        %v3479 = vpop.f32.mrb[0].mxu0
        %v3480 = vadd.f32 %v2975, %v3479
        %v3481 = vpop.f32.mrb[0].mxu0
        %3482 = vmatprep.mubr.bf16.mxu0 %v2642
        %3483 = vmatmul.mubr.bf16.gmra.mrb[0].mxu0 %v2641
        %v3484 = vpop.f32.mrb[0].mxu0
        %v3485 = vadd.f32 %v2980, %v3484
        %v3486 = vpop.f32.mrb[0].mxu0
        %v3487 = vpop.f32.mrb[0].mxu0
        %v3488 = vadd.f32 %v2983, %v3487
        %v3489 = vpop.f32.mrb[0].mxu0
        %3490 = vdwg.mxu0
        %3491 = vmatprep.subr.bf16.mxu0 0
        %3492 = vmatpush1.bf16.msra.mxu0 %v3290
        %3493 = vmatprep.subr.bf16.mxu0 0
        %3494 = vmatpush1.bf16.msra.mxu0 %v3291
        %3495 = vmatprep.subr.bf16.mxu0 0
        %3496 = vmatpush1.bf16.msra.mxu0 %v3292
        %3497 = vmatprep.subr.bf16.mxu0 0
        %3498 = vmatpush1.bf16.msra.mxu0 %v3293
        %3499 = vmatprep.subr.bf16.mxu0 0
        %3500 = vmatpush1.bf16.msra.mxu0 %v3294
        %3501 = vmatprep.subr.bf16.mxu0 0
        %3502 = vmatpush1.bf16.msra.mxu0 %v3295
        %3503 = vmatprep.subr.bf16.mxu0 0
        %3504 = vmatpush1.bf16.msra.mxu0 %v3296
        %3505 = vmatprep.subr.bf16.mxu0 0
        %3506 = vmatpush1.bf16.msra.mxu0 %v3297
        %3507 = vmatprep.subr.bf16.mxu0 0
        %3508 = vmatpush1.bf16.msra.mxu0 %v3298
        %3509 = vmatprep.subr.bf16.mxu0 0
        %3510 = vmatpush1.bf16.msra.mxu0 %v3299
        %3511 = vmatprep.subr.bf16.mxu0 0
        %3512 = vmatpush1.bf16.msra.mxu0 %v3300
        %3513 = vmatprep.subr.bf16.mxu0 0
        %3514 = vmatpush1.bf16.msra.mxu0 %v3301
        %3515 = vmatprep.subr.bf16.mxu0 0
        %3516 = vmatpush1.bf16.msra.mxu0 %v3302
        %3517 = vmatprep.subr.bf16.mxu0 0
        %3518 = vmatpush1.bf16.msra.mxu0 %v3303
        %3519 = vmatprep.subr.bf16.mxu0 0
        %3520 = vmatpush1.bf16.msra.mxu0 %v3304
        %3521 = vmatprep.subr.bf16.mxu0 0
        %3522 = vmatpush1.bf16.msra.mxu0 %v3305
        %3523 = vmatprep.mubr.bf16.mxu0 %v2608
        %3524 = vmatmul.mubr.bf16.gmra.mrb[0].mxu0 %v2607
        %v3525 = vpop.f32.mrb[0].mxu0
        %v3526 = vadd.f32 %v3453, %v3525
        %v3527 = vpop.f32.mrb[0].mxu0
        %v3528 = vpop.f32.mrb[0].mxu0
        %v3529 = vadd.f32 %v3456, %v3528
        %v3530 = vpop.f32.mrb[0].mxu0
        %3531 = vmatprep.mubr.bf16.mxu0 %v2617
        %3532 = vmatmul.mubr.bf16.gmra.mrb[0].mxu0 %v2616
        %v3533 = vpop.f32.mrb[0].mxu0
        %v3534 = vadd.f32 %v3461, %v3533
        %v3535 = vpop.f32.mrb[0].mxu0
        %v3536 = vpop.f32.mrb[0].mxu0
        %v3537 = vadd.f32 %v3464, %v3536
        %v3538 = vpop.f32.mrb[0].mxu0
        %3539 = vmatprep.mubr.bf16.mxu0 %v2626
        %3540 = vmatmul.mubr.bf16.gmra.mrb[0].mxu0 %v2625
        %v3541 = vpop.f32.mrb[0].mxu0
        %v3542 = vadd.f32 %v3469, %v3541
        %v3543 = vpop.f32.mrb[0].mxu0
        %v3544 = vpop.f32.mrb[0].mxu0
        %v3545 = vadd.f32 %v3472, %v3544
        %v3546 = vpop.f32.mrb[0].mxu0
        %3547 = vmatprep.mubr.bf16.mxu0 %v2635
        %3548 = vmatmul.mubr.bf16.gmra.mrb[0].mxu0 %v2634
        %v3549 = vpop.f32.mrb[0].mxu0
        %v3550 = vadd.f32 %v3477, %v3549
        %v3551 = vpop.f32.mrb[0].mxu0
        %v3552 = vpop.f32.mrb[0].mxu0
        %v3553 = vadd.f32 %v3480, %v3552
        %v3554 = vpop.f32.mrb[0].mxu0
        %3555 = vmatprep.mubr.bf16.mxu0 %v2644
        %3556 = vmatmul.mubr.bf16.gmra.mrb[0].mxu0 %v2643
        %v3557 = vpop.f32.mrb[0].mxu0
        %v3558 = vadd.f32 %v3485, %v3557
        %v3559 = vpop.f32.mrb[0].mxu0
        %v3560 = vpop.f32.mrb[0].mxu0
        %v3561 = vadd.f32 %v3488, %v3560
        %v3562 = vpop.f32.mrb[0].mxu0
        %3563 = vdwg.mxu0
        %3564 = vmatprep.subr.bf16.mxu0 0
        %3565 = vmatpush1.bf16.msra.mxu0 %v3306
        %3566 = vmatprep.subr.bf16.mxu0 0
        %3567 = vmatpush1.bf16.msra.mxu0 %v3307
        %3568 = vmatprep.subr.bf16.mxu0 0
        %3569 = vmatpush1.bf16.msra.mxu0 %v3308
        %3570 = vmatprep.subr.bf16.mxu0 0
        %3571 = vmatpush1.bf16.msra.mxu0 %v3309
        %3572 = vmatprep.subr.bf16.mxu0 0
        %3573 = vmatpush1.bf16.msra.mxu0 %v3310
        %3574 = vmatprep.subr.bf16.mxu0 0
        %3575 = vmatpush1.bf16.msra.mxu0 %v3311
        %3576 = vmatprep.subr.bf16.mxu0 0
        %3577 = vmatpush1.bf16.msra.mxu0 %v3312
        %3578 = vmatprep.subr.bf16.mxu0 0
        %3579 = vmatpush1.bf16.msra.mxu0 %v3313
        %3580 = vmatprep.subr.bf16.mxu0 0
        %3581 = vmatpush1.bf16.msra.mxu0 %v3314
        %3582 = vmatprep.subr.bf16.mxu0 0
        %3583 = vmatpush1.bf16.msra.mxu0 %v3315
        %3584 = vmatprep.subr.bf16.mxu0 0
        %3585 = vmatpush1.bf16.msra.mxu0 %v3316
        %3586 = vmatprep.subr.bf16.mxu0 0
        %3587 = vmatpush1.bf16.msra.mxu0 %v3317
        %3588 = vmatprep.subr.bf16.mxu0 0
        %3589 = vmatpush1.bf16.msra.mxu0 %v3318
        %3590 = vmatprep.subr.bf16.mxu0 0
        %3591 = vmatpush1.bf16.msra.mxu0 %v3319
        %3592 = vmatprep.subr.bf16.mxu0 0
        %3593 = vmatpush1.bf16.msra.mxu0 %v3320
        %3594 = vmatprep.subr.bf16.mxu0 0
        %3595 = vmatpush1.bf16.msra.mxu0 %v3321
        %3596 = vmatprep.mubr.bf16.mxu0 %v2610
        %3597 = vmatmul.mubr.bf16.gmra.mrb[0].mxu0 %v2609
        %v3598 = vpop.f32.mrb[0].mxu0
        %v3599 = vadd.f32 %v3526, %v3598
        %v3600 = vpop.f32.mrb[0].mxu0
        %v3601 = vpop.f32.mrb[0].mxu0
        %v3602 = vadd.f32 %v3529, %v3601
        %v3603 = vpop.f32.mrb[0].mxu0
        %3604 = vmatprep.mubr.bf16.mxu0 %v2619
        %3605 = vmatmul.mubr.bf16.gmra.mrb[0].mxu0 %v2618
        %v3606 = vpop.f32.mrb[0].mxu0
        %v3607 = vadd.f32 %v3534, %v3606
        %v3608 = vpop.f32.mrb[0].mxu0
        %v3609 = vpop.f32.mrb[0].mxu0
        %v3610 = vadd.f32 %v3537, %v3609
        %v3611 = vpop.f32.mrb[0].mxu0
        %3612 = vmatprep.mubr.bf16.mxu0 %v2628
        %3613 = vmatmul.mubr.bf16.gmra.mrb[0].mxu0 %v2627
        %v3614 = vpop.f32.mrb[0].mxu0
        %v3615 = vadd.f32 %v3542, %v3614
        %v3616 = vpop.f32.mrb[0].mxu0
        %v3617 = vpop.f32.mrb[0].mxu0
        %v3618 = vadd.f32 %v3545, %v3617
        %v3619 = vpop.f32.mrb[0].mxu0
        %3620 = vmatprep.mubr.bf16.mxu0 %v2637
        %3621 = vmatmul.mubr.bf16.gmra.mrb[0].mxu0 %v2636
        %v3622 = vpop.f32.mrb[0].mxu0
        %v3623 = vadd.f32 %v3550, %v3622
        %v3624 = vpop.f32.mrb[0].mxu0
        %v3625 = vpop.f32.mrb[0].mxu0
        %v3626 = vadd.f32 %v3553, %v3625
        %v3627 = vpop.f32.mrb[0].mxu0
        %3628 = vmatprep.mubr.bf16.mxu0 %v2646
        %3629 = vmatmul.mubr.bf16.gmra.mrb[0].mxu0 %v2645
        %v3630 = vpop.f32.mrb[0].mxu0
        %v3631 = vadd.f32 %v3558, %v3630
        %v3632 = vpop.f32.mrb[0].mxu0
        %v3633 = vpop.f32.mrb[0].mxu0
        %v3634 = vadd.f32 %v3561, %v3633
        %v3635 = vpop.f32.mrb[0].mxu0
        %3636 = vdwg.mxu0
        %3637 = vmatprep.subr.bf16.mxu0 0
        %3638 = vmatpush1.bf16.msra.mxu0 %v3322
        %3639 = vmatprep.subr.bf16.mxu0 0
        %3640 = vmatpush1.bf16.msra.mxu0 %v3323
        %3641 = vmatprep.subr.bf16.mxu0 0
        %3642 = vmatpush1.bf16.msra.mxu0 %v3324
        %3643 = vmatprep.subr.bf16.mxu0 0
        %3644 = vmatpush1.bf16.msra.mxu0 %v3325
        %3645 = vmatprep.subr.bf16.mxu0 0
        %3646 = vmatpush1.bf16.msra.mxu0 %v3326
        %3647 = vmatprep.subr.bf16.mxu0 0
        %3648 = vmatpush1.bf16.msra.mxu0 %v3327
        %3649 = vmatprep.subr.bf16.mxu0 0
        %3650 = vmatpush1.bf16.msra.mxu0 %v3328
        %3651 = vmatprep.subr.bf16.mxu0 0
        %3652 = vmatpush1.bf16.msra.mxu0 %v3329
        %3653 = vmatprep.subr.bf16.mxu0 0
        %3654 = vmatpush1.bf16.msra.mxu0 %v3330
        %3655 = vmatprep.subr.bf16.mxu0 0
        %3656 = vmatpush1.bf16.msra.mxu0 %v3331
        %3657 = vmatprep.subr.bf16.mxu0 0
        %3658 = vmatpush1.bf16.msra.mxu0 %v3332
        %3659 = vmatprep.subr.bf16.mxu0 0
        %3660 = vmatpush1.bf16.msra.mxu0 %v3333
        %3661 = vmatprep.subr.bf16.mxu0 0
        %3662 = vmatpush1.bf16.msra.mxu0 %v3334
        %3663 = vmatprep.subr.bf16.mxu0 0
        %3664 = vmatpush1.bf16.msra.mxu0 %v3335
        %3665 = vmatprep.subr.bf16.mxu0 0
        %3666 = vmatpush1.bf16.msra.mxu0 %v3336
        %3667 = vmatprep.subr.bf16.mxu0 0
        %3668 = vmatpush1.bf16.msra.mxu0 %v3337
        %3669 = vmatprep.mubr.bf16.mxu0 %v2612
        %3670 = vmatmul.mubr.bf16.gmra.mrb[0].mxu0 %v2611
        %v3671 = vpop.f32.mrb[0].mxu0
        %v3672 = vadd.f32 %v3599, %v3671
        %v3673 = vpop.f32.mrb[0].mxu0
        %v3674 = vpop.f32.mrb[0].mxu0
        %v3675 = vadd.f32 %v3602, %v3674
        %v3676 = vpop.f32.mrb[0].mxu0
        %3677 = vmatprep.mubr.bf16.mxu0 %v2621
        %3678 = vmatmul.mubr.bf16.gmra.mrb[0].mxu0 %v2620
        %v3679 = vpop.f32.mrb[0].mxu0
        %v3680 = vadd.f32 %v3607, %v3679
        %v3681 = vpop.f32.mrb[0].mxu0
        %v3682 = vpop.f32.mrb[0].mxu0
        %v3683 = vadd.f32 %v3610, %v3682
        %v3684 = vpop.f32.mrb[0].mxu0
        %3685 = vmatprep.mubr.bf16.mxu0 %v2630
        %3686 = vmatmul.mubr.bf16.gmra.mrb[0].mxu0 %v2629
        %v3687 = vpop.f32.mrb[0].mxu0
        %v3688 = vadd.f32 %v3615, %v3687
        %v3689 = vpop.f32.mrb[0].mxu0
        %v3690 = vpop.f32.mrb[0].mxu0
        %v3691 = vadd.f32 %v3618, %v3690
        %v3692 = vpop.f32.mrb[0].mxu0
        %3693 = vmatprep.mubr.bf16.mxu0 %v2639
        %3694 = vmatmul.mubr.bf16.gmra.mrb[0].mxu0 %v2638
        %v3695 = vpop.f32.mrb[0].mxu0
        %v3696 = vadd.f32 %v3623, %v3695
        %v3697 = vpop.f32.mrb[0].mxu0
        %v3698 = vpop.f32.mrb[0].mxu0
        %v3699 = vadd.f32 %v3626, %v3698
        %v3700 = vpop.f32.mrb[0].mxu0
        %3701 = vmatprep.mubr.bf16.mxu0 %v2648
        %3702 = vmatmul.mubr.bf16.gmra.mrb[0].mxu0 %v2647
        %v3703 = vpop.f32.mrb[0].mxu0
        %v3704 = vadd.f32 %v3631, %v3703
        %v3705 = vpop.f32.mrb[0].mxu0
        %v3706 = vpop.f32.mrb[0].mxu0
        %v3707 = vadd.f32 %v3634, %v3706
        %v3708 = vpop.f32.mrb[0].mxu0
        %3709 = vdwg.mxu0
        %3710 = vmatprep.subr.bf16.mxu0 0
        %3711 = vmatpush1.bf16.msra.mxu0 %v3338
        %3712 = vmatprep.subr.bf16.mxu0 0
        %3713 = vmatpush1.bf16.msra.mxu0 %v3339
        %3714 = vmatprep.subr.bf16.mxu0 0
        %3715 = vmatpush1.bf16.msra.mxu0 %v3340
        %3716 = vmatprep.subr.bf16.mxu0 0
        %3717 = vmatpush1.bf16.msra.mxu0 %v3341
        %3718 = vmatprep.subr.bf16.mxu0 0
        %3719 = vmatpush1.bf16.msra.mxu0 %v3342
        %3720 = vmatprep.subr.bf16.mxu0 0
        %3721 = vmatpush1.bf16.msra.mxu0 %v3343
        %3722 = vmatprep.subr.bf16.mxu0 0
        %3723 = vmatpush1.bf16.msra.mxu0 %v3344
        %3724 = vmatprep.subr.bf16.mxu0 0
        %3725 = vmatpush1.bf16.msra.mxu0 %v3345
        %3726 = vmatprep.subr.bf16.mxu0 0
        %3727 = vmatpush1.bf16.msra.mxu0 0
        %3728 = vmatprep.subr.bf16.mxu0 0
        %3729 = vmatpush1.bf16.msra.mxu0 0
        %3730 = vmatprep.subr.bf16.mxu0 0
        %3731 = vmatpush1.bf16.msra.mxu0 0
        %3732 = vmatprep.subr.bf16.mxu0 0
        %3733 = vmatpush1.bf16.msra.mxu0 0
        %3734 = vmatprep.subr.bf16.mxu0 0
        %3735 = vmatpush1.bf16.msra.mxu0 0
        %3736 = vmatprep.subr.bf16.mxu0 0
        %3737 = vmatpush1.bf16.msra.mxu0 0
        %3738 = vmatprep.subr.bf16.mxu0 0
        %3739 = vmatpush1.bf16.msra.mxu0 0
        %3740 = vmatprep.subr.bf16.mxu0 0
        %3741 = vmatpush1.bf16.msra.mxu0 0
        %3742 = vmatprep.mubr.bf16.mxu0 0
        %3743 = vmatmul.mubr.bf16.gmra.mrb[0].mxu0 %v2613
        %v3744 = vpop.f32.mrb[0].mxu0
        %v3745 = vadd.f32 %v3672, %v3744
        %v3746 = vpop.f32.mrb[0].mxu0
        %v3747 = vpop.f32.mrb[0].mxu0
        %v3748 = vadd.f32 %v3675, %v3747
        %v3749 = vpop.f32.mrb[0].mxu0
        %3750 = vmatprep.mubr.bf16.mxu0 0
        %3751 = vmatmul.mubr.bf16.gmra.mrb[0].mxu0 %v2622
        %v3752 = vpop.f32.mrb[0].mxu0
        %v3753 = vadd.f32 %v3680, %v3752
        %v3754 = vpop.f32.mrb[0].mxu0
        %v3755 = vpop.f32.mrb[0].mxu0
        %v3756 = vadd.f32 %v3683, %v3755
        %v3757 = vpop.f32.mrb[0].mxu0
        %3758 = vmatprep.mubr.bf16.mxu0 0
        %3759 = vmatmul.mubr.bf16.gmra.mrb[0].mxu0 %v2631
        %v3760 = vpop.f32.mrb[0].mxu0
        %v3761 = vadd.f32 %v3688, %v3760
        %v3762 = vpop.f32.mrb[0].mxu0
        %v3763 = vpop.f32.mrb[0].mxu0
        %v3764 = vadd.f32 %v3691, %v3763
        %v3765 = vpop.f32.mrb[0].mxu0
        %3766 = vmatprep.mubr.bf16.mxu0 0
        %3767 = vmatmul.mubr.bf16.gmra.mrb[0].mxu0 %v2640
        %v3768 = vpop.f32.mrb[0].mxu0
        %v3769 = vadd.f32 %v3696, %v3768
        %v3770 = vpop.f32.mrb[0].mxu0
        %v3771 = vpop.f32.mrb[0].mxu0
        %v3772 = vadd.f32 %v3699, %v3771
        %v3773 = vpop.f32.mrb[0].mxu0
        %3774 = vmatprep.mubr.bf16.mxu0 0
        %3775 = vmatmul.mubr.bf16.gmra.mrb[0].mxu0 %v2649
        %v3776 = vpop.f32.mrb[0].mxu0
        %v3777 = vadd.f32 %v3704, %v3776
        %v3778 = vpop.f32.mrb[0].mxu0
        %v3779 = vpop.f32.mrb[0].mxu0
        %v3780 = vadd.f32 %v3707, %v3779
        %v3781 = vpop.f32.mrb[0].mxu0
        %3782 = vdwg.mxu0
        %v3783 = vmax.f32 %v3745, 0.0
        %v3784 = vmax.f32 %v3748, 0.0
        %v3785 = vmax.f32 %v3753, 0.0
        %v3786 = vmax.f32 %v3756, 0.0
        %v3787 = vmax.f32 %v3761, 0.0
        %v3788 = vmax.f32 %v3764, 0.0
        %v3789 = vmax.f32 %v3769, 0.0
        %v3790 = vmax.f32 %v3772, 0.0
        %v3791 = vmax.f32 %v3777, 0.0
        %v3792 = vmax.f32 %v3780, 0.0
        %3793 = vst [vmem:[%s259] sm:$0xff] %v3783
        %3794 = vst [vmem:[%s259 + $0x8] sm:$0xff] %v3784
        %3795 = vst [vmem:[%s259 + $0x10] sm:$0xff] %v3785
        %3796 = vst [vmem:[%s259 + $0x18] sm:$0xff] %v3786
        %3797 = vst [vmem:[%s259 + $0x20] sm:$0xff] %v3787
        %3798 = vst [vmem:[%s259 + $0x28] sm:$0xff] %v3788
        %3799 = vst [vmem:[%s259 + $0x30] sm:$0xff] %v3789
        %3800 = vst [vmem:[%s259 + $0x38] sm:$0xff] %v3790
        %3801 = vst [vmem:[%s259 + $0x40] sm:$0xff] %v3791
        %3802 = vst [vmem:[%s259 + $0x48] sm:$0xff] %v3792
        %s3803 = sand.u32 %s120, 1
        %s3804 = scalar_lea.sflag [#allocation6], %s3803
        %s3805 = sand.u32 %s120, 1
        %s3806 = smul.addr %s3805, 80
        %s3807 = scalar_lea.vmem [#allocation12], %s3806
        // Predicated region
        $region53: #{tpu_custom_call.1} parent=35 // pred_check
          %p3808 = pneg %p130
        $region54: #{tpu_custom_call.1} parent=35 // pred_check_branch
          %3810 = sbr.rel (%p3808) target = $region56
        $region55: #{tpu_custom_call.1} parent=35 // pred_region
          %s3812 = ssub.s32 1280, 1280
          %3813 = vsyncadd %s3804, %s3812
          %s3814 = smul.addr %s23, 10
          %s3815 = smul.addr %s3814, 128
          %s3816 = scalar_lea.hbm %s4, %s3815
          %s3817 = sshll.u32 %s3807, 4
          %s3818 = int_to_ptr.vmem [resolvable:$true] %s3817
          %3823 = dma.vmem_to_hbm [thread:$0]  %s3818, 1280, %s3816, %s3804, 128, 128, 8
        $region56: #{tpu_custom_call.1} parent=35 // pred_fallthru
          _
      $region36: #{tpu_custom_call.1} parent=5 // pred_fallthru
        _
      %p3824 = scmp.le.s32.totalorder 2, %s18
      // Predicated region
      $region57: #{tpu_custom_call.1} parent=5 // pred_check
        %p3825 = pneg %p3824
      $region58: #{tpu_custom_call.1} parent=5 // pred_check_branch
        %3827 = sbr.rel (%p3825) target = $region60
      $region59: #{tpu_custom_call.1} parent=5 // pred_region
        %s3828 = ssub.s32 %s18, 2
        // Predicated region
        $region61: #{tpu_custom_call.1} parent=59 // pred_check
          %p3829 = pneg %p136
        $region62: #{tpu_custom_call.1} parent=59 // pred_check_branch
          %3831 = sbr.rel (%p3829) target = $region64
        $region63: #{tpu_custom_call.1} parent=59 // pred_region
          %s3832 = sand.u32 %s121, 1
          %s3833 = scalar_lea.sflag [#allocation6], %s3832
          %s3834 = sand.u32 %s121, 1
          %s3835 = smul.addr %s3834, 80
          %s3836 = scalar_lea.vmem [#allocation12], %s3835
          %3837 = dma.done %s3833, 1280
        $region64: #{tpu_custom_call.1} parent=59 // pred_fallthru
          _
      $region60: #{tpu_custom_call.1} parent=5 // pred_fallthru
        _
    $region6: #{tpu_custom_call.1} parent=1 // loop_footer
      %s22 = sadd.s32 1, %s18
    $region7: #{tpu_custom_call.1} parent=1 // loop_footer_branch
      %17 = sbr.rel target = $region3
    $region8: #{tpu_custom_call.1} parent=1 // loop_exit
      _
    %3838 = vsyncpa [#allocation5], 1
    %s3839 = scalar_lea.sflag [#allocation5], 1
    %3840 = vsyncpa %s3839, 1
    %3841 = vsyncpa [#allocation8], 1
    %3842 = vsyncpa [#allocation11], 1
    %3843 = vsyncpa [#allocation6], 1
    %s3844 = scalar_lea.sflag [#allocation6], 1
    %3845 = vsyncpa %s3844, 1

</llo_original>
